<compile_context>
chip_gen: v6e
topology: v6e:2x2x1
jax: 0.10.0
libtpu: 0.0.40
codegen_flags: <defaults>
</compile_context>

<pallas_src>
import functools

import jax
import jax.numpy as jnp
from jax.experimental import pallas as pl
from jax.experimental.pallas import tpu as pltpu


def _encoder_block_kernel(
    x_ref,        # (S, H)  bf16 — full embedded sequence for this batch row
    bias_ref,     # (1, S)  f32  — additive key-padding bias ((mask-1)*1e9)
    ln1s_ref, ln1b_ref,                  # (1, H) f32
    wq_ref, wk_ref, wv_ref, wo_ref,      # (H, H) bf16
    ln2s_ref, ln2b_ref,                  # (1, H) f32
    w1_ref, b1_ref,                      # (H, F) bf16, (1, F) f32
    w2_ref, b2_ref,                      # (F, H) bf16, (1, H) f32
    out_ref,      # (TQ, H) out_dtype
    xn_scr,       # (S, H) bf16 scratch — LN1(x), cached across query tiles
    k_scr,        # (S, H) bf16 scratch — K projection cache
    v_scr,        # (S, H) bf16 scratch — V projection cache
    *,
    hidden: int,
    q_tile: int,
):
    f32 = jnp.float32
    bf16 = jnp.bfloat16
    qi = pl.program_id(1)

    def layernorm(v, s_ref, b_ref):       # f32 throughout
        mu = jnp.mean(v, axis=-1, keepdims=True)
        var = jnp.mean((v - mu) * (v - mu), axis=-1, keepdims=True)
        return (v - mu) * jax.lax.rsqrt(var + 1e-5) * s_ref[...] + b_ref[...]

    # --- Once per batch row: LN1 over full sequence + K/V projections --------
    @pl.when(qi == 0)
    def _():
        xn = layernorm(x_ref[...].astype(f32), ln1s_ref, ln1b_ref).astype(bf16)
        xn_scr[...] = xn
        k_scr[...] = jnp.dot(xn, wk_ref[...],
                             preferred_element_type=f32).astype(bf16)
        v_scr[...] = jnp.dot(xn, wv_ref[...],
                             preferred_element_type=f32).astype(bf16)

    # --- Per query tile -------------------------------------------------------
    if q_tile == x_ref.shape[0]:          # single tile → no dynamic slice
        xq = x_ref[...].astype(f32)       # (TQ, H) residual stream (f32)
        xqn = xn_scr[...]                 # (TQ, H) bf16, cached LN1 rows
    else:
        row0 = pl.multiple_of(qi * q_tile, q_tile)
        xq = x_ref[pl.ds(row0, q_tile), :].astype(f32)
        xqn = xn_scr[pl.ds(row0, q_tile), :]

    # bf16 operands, f32 accumulation on the MXU; softmax scale folded into q.
    q = jnp.dot(xqn, wq_ref[...], preferred_element_type=f32)
    q = (q * (1.0 / float(hidden) ** 0.5)).astype(bf16)

    # Contract last dims directly (no k.T transpose).
    scores = jnp.einsum("qh,kh->qk", q, k_scr[...],
                        preferred_element_type=f32)          # (TQ, S)
    scores = scores + bias_ref[...]                          # f32 mask bias

    m = jnp.max(scores, axis=-1, keepdims=True)
    p = jnp.exp(scores - m)                                  # un-normalized
    l = jnp.sum(p, axis=-1, keepdims=True)                   # (TQ, 1)
    # NOTE: a fully-padded row still yields l >= 1 (max-subtraction), no NaN.

    attn = jnp.dot(p.astype(bf16), v_scr[...], preferred_element_type=f32)
    attn = attn * pl.reciprocal(l, approx=True)              # deferred norm
    attn_out = jnp.dot(attn.astype(bf16), wo_ref[...],
                       preferred_element_type=f32)
    h = xq + attn_out                                        # residual (f32)

    # --- LayerNorm 2 + GELU MLP ----------------------------------------------
    hn = layernorm(h, ln2s_ref, ln2b_ref).astype(bf16)
    f = jnp.dot(hn, w1_ref[...], preferred_element_type=f32) + b1_ref[...]
    f = jax.nn.gelu(f, approximate=True)
    f = jnp.dot(f.astype(bf16), w2_ref[...], preferred_element_type=f32) + b2_ref[...]

    out_ref[...] = (h + f).astype(out_ref.dtype)


def _mxu_rows():
    """Query-tile cap per generation: 128 fills v5e's 128x128 MXU, 256 fills
    v6e/v7x's 256x256 MXU."""
    try:
        name = str(pltpu.get_tpu_info().chip_version).lower()
        return 128 if "v5" in name or "_5" in name else 256
    except Exception:
        return 256


def nav_wrapper_encode(tokens_enc, enc_mask, params, *, q_tile=None,
                       weight_buffers=1, out_dtype=jnp.bfloat16):
    """Pallas implementation of NavWrapper.forward == model.encode(...)."""
    emb = params["emb"]                     # (V, H) bf16
    B, S = tokens_enc.shape
    H = emb.shape[1]
    F = params["w1"].shape[1]

    if q_tile is None:
        q_tile = min(S, _mxu_rows())        # collapse qi axis at small S
    TQ = q_tile
    assert S % TQ == 0 and TQ % 16 == 0, "bf16 blocks want (16,128) alignment"
    assert H % 128 == 0 and F % 128 == 0
    n_q = S // TQ

    # Glue: embedding gather (kept bf16) + precomputed additive padding bias.
    x = jnp.take(emb, tokens_enc, axis=0)                               # (B,S,H) bf16
    bias = ((enc_mask.astype(jnp.float32) - 1.0) * 1e9)[:, None, :]     # (B,1,S) f32

    # Constant-index weights: single-buffer if supported (halves weight VMEM).
    wkwargs = {}
    if weight_buffers is not None:
        wkwargs["pipeline_mode"] = pl.Buffered(weight_buffers)

    def wspec(shape):
        return pl.BlockSpec(shape, lambda b, qi: (0,) * len(shape), **wkwargs)

    sq = pl.Squeezed()
    kernel = functools.partial(_encoder_block_kernel, hidden=H, q_tile=TQ)

    grid_spec = pltpu.PrefetchScalarGridSpec(
        num_scalar_prefetch=0,
        grid=(B, n_q),
        in_specs=[
            pl.BlockSpec((sq, S, H), lambda b, qi: (b, 0, 0)),   # full seq (x, once)
            pl.BlockSpec((sq, 1, S), lambda b, qi: (b, 0, 0)),   # mask bias
            wspec((1, H)), wspec((1, H)),                          # ln1 scale/bias
            wspec((H, H)), wspec((H, H)), wspec((H, H)), wspec((H, H)),  # wq wk wv wo
            wspec((1, H)), wspec((1, H)),                          # ln2 scale/bias
            wspec((H, F)), wspec((1, F)),                          # w1, b1
            wspec((F, H)), wspec((1, H)),                          # w2, b2
        ],
        out_specs=pl.BlockSpec((sq, TQ, H), lambda b, qi: (b, qi, 0)),
        scratch_shapes=[
            pltpu.VMEM((S, H), jnp.bfloat16),   # LN1(x) cache
            pltpu.VMEM((S, H), jnp.bfloat16),   # K cache
            pltpu.VMEM((S, H), jnp.bfloat16),   # V cache
        ],
    )

    return pl.pallas_call(
        kernel,
        out_shape=jax.ShapeDtypeStruct((B, S, H), out_dtype),
        grid_spec=grid_spec,
        compiler_params=pltpu.CompilerParams(
            # batch parallel (both v7x TensorCores get work even at B=2);
            # qi must be "arbitrary" so the per-batch K/V scratch cache is legal.
            dimension_semantics=("parallel", "arbitrary"),
            vmem_limit_bytes=32 * 1024 * 1024,
        ),
    )(
        x, bias,
        params["ln1_s"], params["ln1_b"],
        params["wq"], params["wk"], params["wv"], params["wo"],
        params["ln2_s"], params["ln2_b"],
        params["w1"], params["b1"], params["w2"], params["b2"],
    )


def _reference_encode(tokens_enc, enc_mask, params):
    """Pure-JAX reference mirroring the kernel's mixed-precision recipe."""
    f32, bf16 = jnp.float32, jnp.bfloat16
    H = params["emb"].shape[1]
    x = jnp.take(params["emb"], tokens_enc, axis=0).astype(f32)          # (B,S,H)
    bias = ((enc_mask.astype(f32) - 1.0) * 1e9)[:, None, :]              # (B,1,S)

    def ln(v, s, b):
        mu = jnp.mean(v, axis=-1, keepdims=True)
        var = jnp.mean((v - mu) ** 2, axis=-1, keepdims=True)
        return (v - mu) * jax.lax.rsqrt(var + 1e-5) * s + b

    def mm(a_bf16, w):  # bf16 operands, f32 accumulation (matches kernel)
        return jnp.einsum("...ij,jk->...ik", a_bf16, w.astype(bf16),
                          preferred_element_type=f32)

    xn = ln(x, params["ln1_s"], params["ln1_b"]).astype(bf16)
    q = (mm(xn, params["wq"]) * (1.0 / float(H) ** 0.5)).astype(bf16)
    k = mm(xn, params["wk"]).astype(bf16)
    v = mm(xn, params["wv"]).astype(bf16)
    scores = jnp.einsum("bqh,bkh->bqk", q, k, preferred_element_type=f32) + bias
    m = jnp.max(scores, axis=-1, keepdims=True)
    p = jnp.exp(scores - m)
    l = jnp.sum(p, axis=-1, keepdims=True)
    attn = jnp.einsum("bqk,bkh->bqh", p.astype(bf16), v,
                      preferred_element_type=f32) / l          # deferred norm
    h = x + mm(attn.astype(bf16), params["wo"])
    hn = ln(h, params["ln2_s"], params["ln2_b"]).astype(bf16)
    f = jax.nn.gelu(mm(hn, params["w1"]) + params["b1"], approximate=True)
    f = mm(f.astype(bf16), params["w2"]) + params["b2"]
    return h + f


def _make_params(key, vocab, hidden, ffn):
    ks = jax.random.split(key, 8)
    bf = lambda k, shape, scale: (
        scale * jax.random.normal(k, shape, jnp.float32)).astype(jnp.bfloat16)
    return {
        "emb": bf(ks[0], (vocab, hidden), 0.1),
        "ln1_s": jnp.ones((1, hidden), jnp.float32),
        "ln1_b": jnp.zeros((1, hidden), jnp.float32),
        "wq": bf(ks[1], (hidden, hidden), 0.1),
        "wk": bf(ks[2], (hidden, hidden), 0.1),
        "wv": bf(ks[3], (hidden, hidden), 0.1),
        "wo": bf(ks[4], (hidden, hidden), 0.1),
        "ln2_s": jnp.ones((1, hidden), jnp.float32),
        "ln2_b": jnp.zeros((1, hidden), jnp.float32),
        "w1": bf(ks[5], (hidden, ffn), 0.1),
        "b1": jnp.zeros((1, ffn), jnp.float32),
        "w2": bf(ks[6], (ffn, hidden), 0.1),
        "b2": jnp.zeros((1, hidden), jnp.float32),
    }


if __name__ == "__main__":
    # Small but lane-dense shapes: H and F multiples of 128, S a multiple of 16.
    B, S, H, V, F = 2, 32, 128, 64, 256

    key = jax.random.PRNGKey(0)
    k_tok, k_par = jax.random.split(key)

    tokens_enc = jax.random.randint(k_tok, (B, S), 0, V, dtype=jnp.int32)
    # Simple padding mask: last 5 positions of batch element 1 are padding.
    enc_mask = jnp.ones((B, S), jnp.float32).at[1, S - 5:].set(0.0)

    params = _make_params(k_par, V, H, F)

    def run(weight_buffers):
        out = nav_wrapper_encode(tokens_enc, enc_mask, params,
                                 weight_buffers=weight_buffers)
        return jax.block_until_ready(out)

    try:
        out = run(1)
    except Exception:
        # pipeline_mode=pl.Buffered(1) not supported on this jax/libtpu build;
        # fall back to default double-buffered weight BlockSpecs.
        out = run(None)

    ref = _reference_encode(tokens_enc, enc_mask, params)
    assert out.shape == (B, S, H)
    out_f32 = out.astype(jnp.float32)
    assert bool(jnp.all(jnp.isfinite(out_f32)))

    # Every matmul is bf16-fed, exp/tanh/rsqrt go through the EUP, the softmax
    # reciprocal is the approx EUP op, and the output is cast to bf16 — so the
    # comparison bound must be bf16-appropriate, not f32-tight.
    err = float(jnp.max(jnp.abs(out_f32 - ref)))
    scale = max(1.0, float(jnp.max(jnp.abs(ref))))
    tol = max(5e-2, 3e-2 * scale)
    assert err <= tol, f"mismatch vs. JAX reference: {err} (tol {tol})"

    print("KERNEL_OK")
</pallas_src>

<mosaic_0001>
module attributes {stable_mosaic.version = 11 : i64} {
  func.func @_encoder_block_kernel(%arg0: i32, %arg1: i32, %arg2: memref<1x32x128xbf16, #tpu.memory_space<vmem>>, %arg3: memref<1x1x32xf32, #tpu.memory_space<vmem>>, %arg4: memref<1x128xf32, #tpu.memory_space<vmem>>, %arg5: memref<1x128xf32, #tpu.memory_space<vmem>>, %arg6: memref<128x128xbf16, #tpu.memory_space<vmem>>, %arg7: memref<128x128xbf16, #tpu.memory_space<vmem>>, %arg8: memref<128x128xbf16, #tpu.memory_space<vmem>>, %arg9: memref<128x128xbf16, #tpu.memory_space<vmem>>, %arg10: memref<1x128xf32, #tpu.memory_space<vmem>>, %arg11: memref<1x128xf32, #tpu.memory_space<vmem>>, %arg12: memref<128x256xbf16, #tpu.memory_space<vmem>>, %arg13: memref<1x256xf32, #tpu.memory_space<vmem>>, %arg14: memref<256x128xbf16, #tpu.memory_space<vmem>>, %arg15: memref<1x128xf32, #tpu.memory_space<vmem>>, %arg16: memref<1x32x128xbf16, #tpu.memory_space<vmem>>, %arg17: memref<32x128xbf16, #tpu.memory_space<vmem>>, %arg18: memref<32x128xbf16, #tpu.memory_space<vmem>>, %arg19: memref<32x128xbf16, #tpu.memory_space<vmem>>) attributes {dimension_semantics = [#tpu.dimension_semantics<parallel>, #tpu.dimension_semantics<arbitrary>], iteration_bounds = array<i64: 2, 1>, scalar_prefetch = 0 : i64, scratch_operands = 3 : i64, tpu.core_type = #tpu.core_type<tc>, window_params = [{transform_indices = @transform_0, window_bounds = array<i64: 1, 32, 128>}, {transform_indices = @transform_1, window_bounds = array<i64: 1, 1, 32>}, {pipeline_mode = #tpu.pipeline_mode<synchronous>, transform_indices = @transform_2, window_bounds = array<i64: 1, 128>}, {pipeline_mode = #tpu.pipeline_mode<synchronous>, transform_indices = @transform_3, window_bounds = array<i64: 1, 128>}, {pipeline_mode = #tpu.pipeline_mode<synchronous>, transform_indices = @transform_4, window_bounds = array<i64: 128, 128>}, {pipeline_mode = #tpu.pipeline_mode<synchronous>, transform_indices = @transform_5, window_bounds = array<i64: 128, 128>}, {pipeline_mode = #tpu.pipeline_mode<synchronous>, transform_indices = @transform_6, window_bounds = array<i64: 128, 128>}, {pipeline_mode = #tpu.pipeline_mode<synchronous>, transform_indices = @transform_7, window_bounds = array<i64: 128, 128>}, {pipeline_mode = #tpu.pipeline_mode<synchronous>, transform_indices = @transform_8, window_bounds = array<i64: 1, 128>}, {pipeline_mode = #tpu.pipeline_mode<synchronous>, transform_indices = @transform_9, window_bounds = array<i64: 1, 128>}, {pipeline_mode = #tpu.pipeline_mode<synchronous>, transform_indices = @transform_10, window_bounds = array<i64: 128, 256>}, {pipeline_mode = #tpu.pipeline_mode<synchronous>, transform_indices = @transform_11, window_bounds = array<i64: 1, 256>}, {pipeline_mode = #tpu.pipeline_mode<synchronous>, transform_indices = @transform_12, window_bounds = array<i64: 256, 128>}, {pipeline_mode = #tpu.pipeline_mode<synchronous>, transform_indices = @transform_13, window_bounds = array<i64: 1, 128>}, {transform_indices = @transform_14, window_bounds = array<i64: 1, 32, 128>}]} {
    %c0_i32 = arith.constant 0 : i32
    %0 = arith.cmpi eq, %arg1, %c0_i32 : i32
    %1 = arith.extui %0 : i1 to i32
    %c0_i32_0 = arith.constant 0 : i32
    %2 = arith.cmpi ne, %1, %c0_i32_0 : i32
    scf.if %2 {
      %c0_48 = arith.constant 0 : index
      %c0_49 = arith.constant 0 : index
      %c0_50 = arith.constant 0 : index
      %91 = vector.load %arg2[%c0_48, %c0_49, %c0_50] : memref<1x32x128xbf16, #tpu.memory_space<vmem>>, vector<1x32x128xbf16>
      %92 = vector.shape_cast %91 : vector<1x32x128xbf16> to vector<32x128xbf16>
      %93 = arith.extf %92 : vector<32x128xbf16> to vector<32x128xf32>
      %cst_51 = arith.constant dense<0.000000e+00> : vector<32xf32>
      %94 = vector.multi_reduction <add>, %93, %cst_51 [1] : vector<32x128xf32> to vector<32xf32>
      %95 = vector.shape_cast %94 : vector<32xf32> to vector<32x1xf32>
      %cst_52 = arith.constant 1.280000e+02 : f32
      %96 = vector.broadcast %cst_52 : f32 to vector<32x1xf32>
      %97 = arith.divf %95, %96 : vector<32x1xf32>
      %98 = vector.broadcast %97 : vector<32x1xf32> to vector<32x128xf32>
      %99 = arith.subf %93, %98 : vector<32x128xf32>
      %100 = vector.broadcast %97 : vector<32x1xf32> to vector<32x128xf32>
      %101 = arith.subf %93, %100 : vector<32x128xf32>
      %102 = arith.mulf %99, %101 : vector<32x128xf32>
      %cst_53 = arith.constant dense<0.000000e+00> : vector<32xf32>
      %103 = vector.multi_reduction <add>, %102, %cst_53 [1] : vector<32x128xf32> to vector<32xf32>
      %104 = vector.shape_cast %103 : vector<32xf32> to vector<32x1xf32>
      %cst_54 = arith.constant 1.280000e+02 : f32
      %105 = vector.broadcast %cst_54 : f32 to vector<32x1xf32>
      %106 = arith.divf %104, %105 : vector<32x1xf32>
      %107 = vector.broadcast %97 : vector<32x1xf32> to vector<32x128xf32>
      %108 = arith.subf %93, %107 : vector<32x128xf32>
      %cst_55 = arith.constant 9.99999974E-6 : f32
      %109 = vector.broadcast %cst_55 : f32 to vector<32x1xf32>
      %110 = arith.addf %106, %109 : vector<32x1xf32>
      %111 = math.rsqrt %110 : vector<32x1xf32>
      %112 = vector.broadcast %111 : vector<32x1xf32> to vector<32x128xf32>
      %113 = arith.mulf %108, %112 : vector<32x128xf32>
      %c0_56 = arith.constant 0 : index
      %c0_57 = arith.constant 0 : index
      %114 = vector.load %arg4[%c0_56, %c0_57] : memref<1x128xf32, #tpu.memory_space<vmem>>, vector<1x128xf32>
      %115 = vector.broadcast %114 : vector<1x128xf32> to vector<32x128xf32>
      %116 = arith.mulf %113, %115 : vector<32x128xf32>
      %c0_58 = arith.constant 0 : index
      %c0_59 = arith.constant 0 : index
      %117 = vector.load %arg5[%c0_58, %c0_59] : memref<1x128xf32, #tpu.memory_space<vmem>>, vector<1x128xf32>
      %118 = vector.broadcast %117 : vector<1x128xf32> to vector<32x128xf32>
      %119 = arith.addf %116, %118 : vector<32x128xf32>
      %120 = arith.truncf %119 : vector<32x128xf32> to vector<32x128xbf16>
      %c0_60 = arith.constant 0 : index
      %c0_61 = arith.constant 0 : index
      %121 = vector.load %arg17[%c0_60, %c0_61] : memref<32x128xbf16, #tpu.memory_space<vmem>>, vector<32x128xbf16>
      tpu.vector_store %arg17[%c0_60, %c0_61], %120 {strides = array<i32>} : memref<32x128xbf16, #tpu.memory_space<vmem>>, vector<32x128xbf16>,
      %c0_62 = arith.constant 0 : index
      %c0_63 = arith.constant 0 : index
      %122 = vector.load %arg7[%c0_62, %c0_63] : memref<128x128xbf16, #tpu.memory_space<vmem>>, vector<128x128xbf16>
      %cst_64 = arith.constant dense<0.000000e+00> : vector<32x128xf32>
      %123 = tpu.matmul %120, %122, %cst_64 {dimension_numbers = #tpu.dot_dimension_numbers<[1], [0], [0], [1], [0, 0, 1, 1], [], []>} : vector<32x128xbf16>, vector<128x128xbf16>, vector<32x128xf32> -> vector<32x128xf32>
      %124 = arith.truncf %123 : vector<32x128xf32> to vector<32x128xbf16>
      %c0_65 = arith.constant 0 : index
      %c0_66 = arith.constant 0 : index
      %125 = vector.load %arg18[%c0_65, %c0_66] : memref<32x128xbf16, #tpu.memory_space<vmem>>, vector<32x128xbf16>
      tpu.vector_store %arg18[%c0_65, %c0_66], %124 {strides = array<i32>} : memref<32x128xbf16, #tpu.memory_space<vmem>>, vector<32x128xbf16>,
      %c0_67 = arith.constant 0 : index
      %c0_68 = arith.constant 0 : index
      %126 = vector.load %arg8[%c0_67, %c0_68] : memref<128x128xbf16, #tpu.memory_space<vmem>>, vector<128x128xbf16>
      %cst_69 = arith.constant dense<0.000000e+00> : vector<32x128xf32>
      %127 = tpu.matmul %120, %126, %cst_69 {dimension_numbers = #tpu.dot_dimension_numbers<[1], [0], [0], [1], [0, 0, 1, 1], [], []>} : vector<32x128xbf16>, vector<128x128xbf16>, vector<32x128xf32> -> vector<32x128xf32>
      %128 = arith.truncf %127 : vector<32x128xf32> to vector<32x128xbf16>
      %c0_70 = arith.constant 0 : index
      %c0_71 = arith.constant 0 : index
      %129 = vector.load %arg19[%c0_70, %c0_71] : memref<32x128xbf16, #tpu.memory_space<vmem>>, vector<32x128xbf16>
      tpu.vector_store %arg19[%c0_70, %c0_71], %128 {strides = array<i32>} : memref<32x128xbf16, #tpu.memory_space<vmem>>, vector<32x128xbf16>,
    } else {
    }
    %c0 = arith.constant 0 : index
    %c0_1 = arith.constant 0 : index
    %c0_2 = arith.constant 0 : index
    %3 = vector.load %arg2[%c0, %c0_1, %c0_2] : memref<1x32x128xbf16, #tpu.memory_space<vmem>>, vector<1x32x128xbf16>
    %4 = vector.shape_cast %3 : vector<1x32x128xbf16> to vector<32x128xbf16>
    %5 = arith.extf %4 : vector<32x128xbf16> to vector<32x128xf32>
    %c0_3 = arith.constant 0 : index
    %c0_4 = arith.constant 0 : index
    %6 = vector.load %arg17[%c0_3, %c0_4] : memref<32x128xbf16, #tpu.memory_space<vmem>>, vector<32x128xbf16>
    %c0_5 = arith.constant 0 : index
    %c0_6 = arith.constant 0 : index
    %7 = vector.load %arg6[%c0_5, %c0_6] : memref<128x128xbf16, #tpu.memory_space<vmem>>, vector<128x128xbf16>
    %cst = arith.constant dense<0.000000e+00> : vector<32x128xf32>
    %8 = tpu.matmul %6, %7, %cst {dimension_numbers = #tpu.dot_dimension_numbers<[1], [0], [0], [1], [0, 0, 1, 1], [], []>} : vector<32x128xbf16>, vector<128x128xbf16>, vector<32x128xf32> -> vector<32x128xf32>
    %cst_7 = arith.constant 0.0883883461 : f32
    %9 = vector.broadcast %cst_7 : f32 to vector<32x128xf32>
    %10 = arith.mulf %8, %9 : vector<32x128xf32>
    %11 = arith.truncf %10 : vector<32x128xf32> to vector<32x128xbf16>
    %c0_8 = arith.constant 0 : index
    %c0_9 = arith.constant 0 : index
    %12 = vector.load %arg18[%c0_8, %c0_9] : memref<32x128xbf16, #tpu.memory_space<vmem>>, vector<32x128xbf16>
    "tpu.trace_start"() <{level = 10 : i32, message = "qh,kh->qk"}> : () -> ()
    %cst_10 = arith.constant dense<0.000000e+00> : vector<32x32xf32>
    %13 = tpu.matmul %11, %12, %cst_10 {dimension_numbers = #tpu.dot_dimension_numbers<[1], [1], [0], [0], [0, 0, 1, 0], [], []>} : vector<32x128xbf16>, vector<32x128xbf16>, vector<32x32xf32> -> vector<32x32xf32>
    "tpu.trace_stop"() : () -> ()
    %c0_11 = arith.constant 0 : index
    %c0_12 = arith.constant 0 : index
    %c0_13 = arith.constant 0 : index
    %14 = vector.load %arg3[%c0_11, %c0_12, %c0_13] : memref<1x1x32xf32, #tpu.memory_space<vmem>>, vector<1x1x32xf32>
    %15 = vector.shape_cast %14 : vector<1x1x32xf32> to vector<1x32xf32>
    %16 = vector.broadcast %15 : vector<1x32xf32> to vector<32x32xf32>
    %17 = arith.addf %13, %16 : vector<32x32xf32>
    %cst_14 = arith.constant dense<0xFF800000> : vector<32xf32>
    %18 = vector.multi_reduction <maximumf>, %17, %cst_14 [1] : vector<32x32xf32> to vector<32xf32>
    %19 = vector.shape_cast %18 : vector<32xf32> to vector<32x1xf32>
    %20 = vector.broadcast %19 : vector<32x1xf32> to vector<32x32xf32>
    %21 = arith.subf %17, %20 : vector<32x32xf32>
    %22 = math.exp %21 : vector<32x32xf32>
    %cst_15 = arith.constant dense<0.000000e+00> : vector<32xf32>
    %23 = vector.multi_reduction <add>, %22, %cst_15 [1] : vector<32x32xf32> to vector<32xf32>
    %24 = vector.shape_cast %23 : vector<32xf32> to vector<32x1xf32>
    %25 = arith.truncf %22 : vector<32x32xf32> to vector<32x32xbf16>
    %c0_16 = arith.constant 0 : index
    %c0_17 = arith.constant 0 : index
    %26 = vector.load %arg19[%c0_16, %c0_17] : memref<32x128xbf16, #tpu.memory_space<vmem>>, vector<32x128xbf16>
    %cst_18 = arith.constant dense<0.000000e+00> : vector<32x128xf32>
    %27 = tpu.matmul %25, %26, %cst_18 {dimension_numbers = #tpu.dot_dimension_numbers<[1], [0], [0], [1], [0, 0, 1, 1], [], []>} : vector<32x32xbf16>, vector<32x128xbf16>, vector<32x128xf32> -> vector<32x128xf32>
    %28 = tpu.reciprocal %24 {approx = true} : vector<32x1xf32> -> vector<32x1xf32>
    %29 = vector.broadcast %28 : vector<32x1xf32> to vector<32x128xf32>
    %30 = arith.mulf %27, %29 : vector<32x128xf32>
    %31 = arith.truncf %30 : vector<32x128xf32> to vector<32x128xbf16>
    %c0_19 = arith.constant 0 : index
    %c0_20 = arith.constant 0 : index
    %32 = vector.load %arg9[%c0_19, %c0_20] : memref<128x128xbf16, #tpu.memory_space<vmem>>, vector<128x128xbf16>
    %cst_21 = arith.constant dense<0.000000e+00> : vector<32x128xf32>
    %33 = tpu.matmul %31, %32, %cst_21 {dimension_numbers = #tpu.dot_dimension_numbers<[1], [0], [0], [1], [0, 0, 1, 1], [], []>} : vector<32x128xbf16>, vector<128x128xbf16>, vector<32x128xf32> -> vector<32x128xf32>
    %34 = arith.addf %5, %33 : vector<32x128xf32>
    %cst_22 = arith.constant dense<0.000000e+00> : vector<32xf32>
    %35 = vector.multi_reduction <add>, %34, %cst_22 [1] : vector<32x128xf32> to vector<32xf32>
    %36 = vector.shape_cast %35 : vector<32xf32> to vector<32x1xf32>
    %cst_23 = arith.constant 1.280000e+02 : f32
    %37 = vector.broadcast %cst_23 : f32 to vector<32x1xf32>
    %38 = arith.divf %36, %37 : vector<32x1xf32>
    %39 = vector.broadcast %38 : vector<32x1xf32> to vector<32x128xf32>
    %40 = arith.subf %34, %39 : vector<32x128xf32>
    %41 = vector.broadcast %38 : vector<32x1xf32> to vector<32x128xf32>
    %42 = arith.subf %34, %41 : vector<32x128xf32>
    %43 = arith.mulf %40, %42 : vector<32x128xf32>
    %cst_24 = arith.constant dense<0.000000e+00> : vector<32xf32>
    %44 = vector.multi_reduction <add>, %43, %cst_24 [1] : vector<32x128xf32> to vector<32xf32>
    %45 = vector.shape_cast %44 : vector<32xf32> to vector<32x1xf32>
    %cst_25 = arith.constant 1.280000e+02 : f32
    %46 = vector.broadcast %cst_25 : f32 to vector<32x1xf32>
    %47 = arith.divf %45, %46 : vector<32x1xf32>
    %48 = vector.broadcast %38 : vector<32x1xf32> to vector<32x128xf32>
    %49 = arith.subf %34, %48 : vector<32x128xf32>
    %cst_26 = arith.constant 9.99999974E-6 : f32
    %50 = vector.broadcast %cst_26 : f32 to vector<32x1xf32>
    %51 = arith.addf %47, %50 : vector<32x1xf32>
    %52 = math.rsqrt %51 : vector<32x1xf32>
    %53 = vector.broadcast %52 : vector<32x1xf32> to vector<32x128xf32>
    %54 = arith.mulf %49, %53 : vector<32x128xf32>
    %c0_27 = arith.constant 0 : index
    %c0_28 = arith.constant 0 : index
    %55 = vector.load %arg10[%c0_27, %c0_28] : memref<1x128xf32, #tpu.memory_space<vmem>>, vector<1x128xf32>
    %56 = vector.broadcast %55 : vector<1x128xf32> to vector<32x128xf32>
    %57 = arith.mulf %54, %56 : vector<32x128xf32>
    %c0_29 = arith.constant 0 : index
    %c0_30 = arith.constant 0 : index
    %58 = vector.load %arg11[%c0_29, %c0_30] : memref<1x128xf32, #tpu.memory_space<vmem>>, vector<1x128xf32>
    %59 = vector.broadcast %58 : vector<1x128xf32> to vector<32x128xf32>
    %60 = arith.addf %57, %59 : vector<32x128xf32>
    %61 = arith.truncf %60 : vector<32x128xf32> to vector<32x128xbf16>
    %c0_31 = arith.constant 0 : index
    %c0_32 = arith.constant 0 : index
    %62 = vector.load %arg12[%c0_31, %c0_32] : memref<128x256xbf16, #tpu.memory_space<vmem>>, vector<128x256xbf16>
    %cst_33 = arith.constant dense<0.000000e+00> : vector<32x256xf32>
    %63 = tpu.matmul %61, %62, %cst_33 {dimension_numbers = #tpu.dot_dimension_numbers<[1], [0], [0], [1], [0, 0, 1, 1], [], []>} : vector<32x128xbf16>, vector<128x256xbf16>, vector<32x256xf32> -> vector<32x256xf32>
    %c0_34 = arith.constant 0 : index
    %c0_35 = arith.constant 0 : index
    %64 = vector.load %arg13[%c0_34, %c0_35] : memref<1x256xf32, #tpu.memory_space<vmem>>, vector<1x256xf32>
    %65 = vector.broadcast %64 : vector<1x256xf32> to vector<32x256xf32>
    %66 = arith.addf %63, %65 : vector<32x256xf32>
    %67 = arith.mulf %66, %66 : vector<32x256xf32>
    %68 = arith.mulf %66, %67 : vector<32x256xf32>
    %cst_36 = arith.constant 4.471500e-02 : f32
    %69 = vector.broadcast %cst_36 : f32 to vector<32x256xf32>
    %70 = arith.mulf %69, %68 : vector<32x256xf32>
    %71 = arith.addf %66, %70 : vector<32x256xf32>
    %cst_37 = arith.constant 0.797884583 : f32
    %72 = vector.broadcast %cst_37 : f32 to vector<32x256xf32>
    %73 = arith.mulf %72, %71 : vector<32x256xf32>
    %74 = math.tanh %73 : vector<32x256xf32>
    %cst_38 = arith.constant 1.000000e+00 : f32
    %75 = vector.broadcast %cst_38 : f32 to vector<32x256xf32>
    %76 = arith.addf %75, %74 : vector<32x256xf32>
    %cst_39 = arith.constant 5.000000e-01 : f32
    %77 = vector.broadcast %cst_39 : f32 to vector<32x256xf32>
    %78 = arith.mulf %77, %76 : vector<32x256xf32>
    %79 = arith.mulf %66, %78 : vector<32x256xf32>
    %80 = arith.truncf %79 : vector<32x256xf32> to vector<32x256xbf16>
    %c0_40 = arith.constant 0 : index
    %c0_41 = arith.constant 0 : index
    %81 = vector.load %arg14[%c0_40, %c0_41] : memref<256x128xbf16, #tpu.memory_space<vmem>>, vector<256x128xbf16>
    %cst_42 = arith.constant dense<0.000000e+00> : vector<32x128xf32>
    %82 = tpu.matmul %80, %81, %cst_42 {dimension_numbers = #tpu.dot_dimension_numbers<[1], [0], [0], [1], [0, 0, 1, 1], [], []>} : vector<32x256xbf16>, vector<256x128xbf16>, vector<32x128xf32> -> vector<32x128xf32>
    %c0_43 = arith.constant 0 : index
    %c0_44 = arith.constant 0 : index
    %83 = vector.load %arg15[%c0_43, %c0_44] : memref<1x128xf32, #tpu.memory_space<vmem>>, vector<1x128xf32>
    %84 = vector.broadcast %83 : vector<1x128xf32> to vector<32x128xf32>
    %85 = arith.addf %82, %84 : vector<32x128xf32>
    %86 = arith.addf %34, %85 : vector<32x128xf32>
    %87 = arith.truncf %86 : vector<32x128xf32> to vector<32x128xbf16>
    %c0_45 = arith.constant 0 : index
    %c0_46 = arith.constant 0 : index
    %c0_47 = arith.constant 0 : index
    %88 = vector.load %arg16[%c0_45, %c0_46, %c0_47] : memref<1x32x128xbf16, #tpu.memory_space<vmem>>, vector<1x32x128xbf16>
    %89 = vector.shape_cast %88 : vector<1x32x128xbf16> to vector<32x128xbf16>
    %90 = vector.shape_cast %87 : vector<32x128xbf16> to vector<1x32x128xbf16>
    tpu.vector_store %arg16[%c0_45, %c0_46, %c0_47], %90 {strides = array<i32>} : memref<1x32x128xbf16, #tpu.memory_space<vmem>>, vector<1x32x128xbf16>,
    return
  }
  func.func @transform_0(%arg0: i32, %arg1: i32) -> (i32, i32, i32) {
    %c0_i32 = arith.constant 0 : i32
    %c0_i32_0 = arith.constant 0 : i32
    %c0_i32_1 = arith.constant 0 : i32
    return %arg0, %c0_i32, %c0_i32_0 : i32, i32, i32
  }
  func.func @transform_1(%arg0: i32, %arg1: i32) -> (i32, i32, i32) {
    %c0_i32 = arith.constant 0 : i32
    %c0_i32_0 = arith.constant 0 : i32
    %c0_i32_1 = arith.constant 0 : i32
    return %arg0, %c0_i32, %c0_i32_0 : i32, i32, i32
  }
  func.func @transform_2(%arg0: i32, %arg1: i32) -> (i32, i32) {
    %c0_i32 = arith.constant 0 : i32
    %c0_i32_0 = arith.constant 0 : i32
    %c0_i32_1 = arith.constant 0 : i32
    return %c0_i32, %c0_i32_0 : i32, i32
  }
  func.func @transform_3(%arg0: i32, %arg1: i32) -> (i32, i32) {
    %c0_i32 = arith.constant 0 : i32
    %c0_i32_0 = arith.constant 0 : i32
    %c0_i32_1 = arith.constant 0 : i32
    return %c0_i32, %c0_i32_0 : i32, i32
  }
  func.func @transform_4(%arg0: i32, %arg1: i32) -> (i32, i32) {
    %c0_i32 = arith.constant 0 : i32
    %c0_i32_0 = arith.constant 0 : i32
    %c0_i32_1 = arith.constant 0 : i32
    return %c0_i32, %c0_i32_0 : i32, i32
  }
  func.func @transform_5(%arg0: i32, %arg1: i32) -> (i32, i32) {
    %c0_i32 = arith.constant 0 : i32
    %c0_i32_0 = arith.constant 0 : i32
    %c0_i32_1 = arith.constant 0 : i32
    return %c0_i32, %c0_i32_0 : i32, i32
  }
  func.func @transform_6(%arg0: i32, %arg1: i32) -> (i32, i32) {
    %c0_i32 = arith.constant 0 : i32
    %c0_i32_0 = arith.constant 0 : i32
    %c0_i32_1 = arith.constant 0 : i32
    return %c0_i32, %c0_i32_0 : i32, i32
  }
  func.func @transform_7(%arg0: i32, %arg1: i32) -> (i32, i32) {
    %c0_i32 = arith.constant 0 : i32
    %c0_i32_0 = arith.constant 0 : i32
    %c0_i32_1 = arith.constant 0 : i32
    return %c0_i32, %c0_i32_0 : i32, i32
  }
  func.func @transform_8(%arg0: i32, %arg1: i32) -> (i32, i32) {
    %c0_i32 = arith.constant 0 : i32
    %c0_i32_0 = arith.constant 0 : i32
    %c0_i32_1 = arith.constant 0 : i32
    return %c0_i32, %c0_i32_0 : i32, i32
  }
  func.func @transform_9(%arg0: i32, %arg1: i32) -> (i32, i32) {
    %c0_i32 = arith.constant 0 : i32
    %c0_i32_0 = arith.constant 0 : i32
    %c0_i32_1 = arith.constant 0 : i32
    return %c0_i32, %c0_i32_0 : i32, i32
  }
  func.func @transform_10(%arg0: i32, %arg1: i32) -> (i32, i32) {
    %c0_i32 = arith.constant 0 : i32
    %c0_i32_0 = arith.constant 0 : i32
    %c0_i32_1 = arith.constant 0 : i32
    return %c0_i32, %c0_i32_0 : i32, i32
  }
  func.func @transform_11(%arg0: i32, %arg1: i32) -> (i32, i32) {
    %c0_i32 = arith.constant 0 : i32
    %c0_i32_0 = arith.constant 0 : i32
    %c0_i32_1 = arith.constant 0 : i32
    return %c0_i32, %c0_i32_0 : i32, i32
  }
  func.func @transform_12(%arg0: i32, %arg1: i32) -> (i32, i32) {
    %c0_i32 = arith.constant 0 : i32
    %c0_i32_0 = arith.constant 0 : i32
    %c0_i32_1 = arith.constant 0 : i32
    return %c0_i32, %c0_i32_0 : i32, i32
  }
  func.func @transform_13(%arg0: i32, %arg1: i32) -> (i32, i32) {
    %c0_i32 = arith.constant 0 : i32
    %c0_i32_0 = arith.constant 0 : i32
    %c0_i32_1 = arith.constant 0 : i32
    return %c0_i32, %c0_i32_0 : i32, i32
  }
  func.func @transform_14(%arg0: i32, %arg1: i32) -> (i32, i32, i32) {
    %c0_i32 = arith.constant 0 : i32
    %c0_i32_0 = arith.constant 0 : i32
    return %arg0, %arg1, %c0_i32 : i32, i32, i32
  }
}

module attributes {stable_mosaic.version = 11 : i64} {
  func.func @_encoder_block_kernel(%arg0: i32, %arg1: i32, %arg2: memref<1x32x128xbf16, #tpu.memory_space<vmem>>, %arg3: memref<1x1x32xf32, #tpu.memory_space<vmem>>, %arg4: memref<1x128xf32, #tpu.memory_space<vmem>>, %arg5: memref<1x128xf32, #tpu.memory_space<vmem>>, %arg6: memref<128x128xbf16, #tpu.memory_space<vmem>>, %arg7: memref<128x128xbf16, #tpu.memory_space<vmem>>, %arg8: memref<128x128xbf16, #tpu.memory_space<vmem>>, %arg9: memref<128x128xbf16, #tpu.memory_space<vmem>>, %arg10: memref<1x128xf32, #tpu.memory_space<vmem>>, %arg11: memref<1x128xf32, #tpu.memory_space<vmem>>, %arg12: memref<128x256xbf16, #tpu.memory_space<vmem>>, %arg13: memref<1x256xf32, #tpu.memory_space<vmem>>, %arg14: memref<256x128xbf16, #tpu.memory_space<vmem>>, %arg15: memref<1x128xf32, #tpu.memory_space<vmem>>, %arg16: memref<1x32x128xbf16, #tpu.memory_space<vmem>>, %arg17: memref<32x128xbf16, #tpu.memory_space<vmem>>, %arg18: memref<32x128xbf16, #tpu.memory_space<vmem>>, %arg19: memref<32x128xbf16, #tpu.memory_space<vmem>>) attributes {dimension_semantics = [#tpu.dimension_semantics<parallel>, #tpu.dimension_semantics<arbitrary>], iteration_bounds = array<i64: 2, 1>, scalar_prefetch = 0 : i64, scratch_operands = 3 : i64, tpu.core_type = #tpu.core_type<tc>, window_params = [{transform_indices = @transform_0, window_bounds = array<i64: 1, 32, 128>}, {transform_indices = @transform_1, window_bounds = array<i64: 1, 1, 32>}, {pipeline_mode = #tpu.pipeline_mode<synchronous>, transform_indices = @transform_2, window_bounds = array<i64: 1, 128>}, {pipeline_mode = #tpu.pipeline_mode<synchronous>, transform_indices = @transform_3, window_bounds = array<i64: 1, 128>}, {pipeline_mode = #tpu.pipeline_mode<synchronous>, transform_indices = @transform_4, window_bounds = array<i64: 128, 128>}, {pipeline_mode = #tpu.pipeline_mode<synchronous>, transform_indices = @transform_5, window_bounds = array<i64: 128, 128>}, {pipeline_mode = #tpu.pipeline_mode<synchronous>, transform_indices = @transform_6, window_bounds = array<i64: 128, 128>}, {pipeline_mode = #tpu.pipeline_mode<synchronous>, transform_indices = @transform_7, window_bounds = array<i64: 128, 128>}, {pipeline_mode = #tpu.pipeline_mode<synchronous>, transform_indices = @transform_8, window_bounds = array<i64: 1, 128>}, {pipeline_mode = #tpu.pipeline_mode<synchronous>, transform_indices = @transform_9, window_bounds = array<i64: 1, 128>}, {pipeline_mode = #tpu.pipeline_mode<synchronous>, transform_indices = @transform_10, window_bounds = array<i64: 128, 256>}, {pipeline_mode = #tpu.pipeline_mode<synchronous>, transform_indices = @transform_11, window_bounds = array<i64: 1, 256>}, {pipeline_mode = #tpu.pipeline_mode<synchronous>, transform_indices = @transform_12, window_bounds = array<i64: 256, 128>}, {pipeline_mode = #tpu.pipeline_mode<synchronous>, transform_indices = @transform_13, window_bounds = array<i64: 1, 128>}, {transform_indices = @transform_14, window_bounds = array<i64: 1, 32, 128>}]} {
    %c0_i32 = arith.constant 0 : i32
    %0 = arith.cmpi eq, %arg1, %c0_i32 : i32
    %1 = arith.extui %0 : i1 to i32
    %c0_i32_0 = arith.constant 0 : i32
    %2 = arith.cmpi ne, %1, %c0_i32_0 : i32
    scf.if %2 {
      %c0_48 = arith.constant 0 : index
      %c0_49 = arith.constant 0 : index
      %c0_50 = arith.constant 0 : index
      %91 = vector.load %arg2[%c0_48, %c0_49, %c0_50] : memref<1x32x128xbf16, #tpu.memory_space<vmem>>, vector<1x32x128xbf16>
      %92 = vector.shape_cast %91 : vector<1x32x128xbf16> to vector<32x128xbf16>
      %93 = arith.extf %92 : vector<32x128xbf16> to vector<32x128xf32>
      %cst_51 = arith.constant dense<0.000000e+00> : vector<32xf32>
      %94 = vector.multi_reduction <add>, %93, %cst_51 [1] : vector<32x128xf32> to vector<32xf32>
      %95 = vector.shape_cast %94 : vector<32xf32> to vector<32x1xf32>
      %cst_52 = arith.constant 1.280000e+02 : f32
      %96 = vector.broadcast %cst_52 : f32 to vector<32x1xf32>
      %97 = arith.divf %95, %96 : vector<32x1xf32>
      %98 = vector.broadcast %97 : vector<32x1xf32> to vector<32x128xf32>
      %99 = arith.subf %93, %98 : vector<32x128xf32>
      %100 = vector.broadcast %97 : vector<32x1xf32> to vector<32x128xf32>
      %101 = arith.subf %93, %100 : vector<32x128xf32>
      %102 = arith.mulf %99, %101 : vector<32x128xf32>
      %cst_53 = arith.constant dense<0.000000e+00> : vector<32xf32>
      %103 = vector.multi_reduction <add>, %102, %cst_53 [1] : vector<32x128xf32> to vector<32xf32>
      %104 = vector.shape_cast %103 : vector<32xf32> to vector<32x1xf32>
      %cst_54 = arith.constant 1.280000e+02 : f32
      %105 = vector.broadcast %cst_54 : f32 to vector<32x1xf32>
      %106 = arith.divf %104, %105 : vector<32x1xf32>
      %107 = vector.broadcast %97 : vector<32x1xf32> to vector<32x128xf32>
      %108 = arith.subf %93, %107 : vector<32x128xf32>
      %cst_55 = arith.constant 9.99999974E-6 : f32
      %109 = vector.broadcast %cst_55 : f32 to vector<32x1xf32>
      %110 = arith.addf %106, %109 : vector<32x1xf32>
      %111 = math.rsqrt %110 : vector<32x1xf32>
      %112 = vector.broadcast %111 : vector<32x1xf32> to vector<32x128xf32>
      %113 = arith.mulf %108, %112 : vector<32x128xf32>
      %c0_56 = arith.constant 0 : index
      %c0_57 = arith.constant 0 : index
      %114 = vector.load %arg4[%c0_56, %c0_57] : memref<1x128xf32, #tpu.memory_space<vmem>>, vector<1x128xf32>
      %115 = vector.broadcast %114 : vector<1x128xf32> to vector<32x128xf32>
      %116 = arith.mulf %113, %115 : vector<32x128xf32>
      %c0_58 = arith.constant 0 : index
      %c0_59 = arith.constant 0 : index
      %117 = vector.load %arg5[%c0_58, %c0_59] : memref<1x128xf32, #tpu.memory_space<vmem>>, vector<1x128xf32>
      %118 = vector.broadcast %117 : vector<1x128xf32> to vector<32x128xf32>
      %119 = arith.addf %116, %118 : vector<32x128xf32>
      %120 = arith.truncf %119 : vector<32x128xf32> to vector<32x128xbf16>
      %c0_60 = arith.constant 0 : index
      %c0_61 = arith.constant 0 : index
      %121 = vector.load %arg17[%c0_60, %c0_61] : memref<32x128xbf16, #tpu.memory_space<vmem>>, vector<32x128xbf16>
      tpu.vector_store %arg17[%c0_60, %c0_61], %120 {strides = array<i32>} : memref<32x128xbf16, #tpu.memory_space<vmem>>, vector<32x128xbf16>,
      %c0_62 = arith.constant 0 : index
      %c0_63 = arith.constant 0 : index
      %122 = vector.load %arg7[%c0_62, %c0_63] : memref<128x128xbf16, #tpu.memory_space<vmem>>, vector<128x128xbf16>
      %cst_64 = arith.constant dense<0.000000e+00> : vector<32x128xf32>
      %123 = tpu.matmul %120, %122, %cst_64 {dimension_numbers = #tpu.dot_dimension_numbers<[1], [0], [0], [1], [0, 0, 1, 1], [], []>} : vector<32x128xbf16>, vector<128x128xbf16>, vector<32x128xf32> -> vector<32x128xf32>
      %124 = arith.truncf %123 : vector<32x128xf32> to vector<32x128xbf16>
      %c0_65 = arith.constant 0 : index
      %c0_66 = arith.constant 0 : index
      %125 = vector.load %arg18[%c0_65, %c0_66] : memref<32x128xbf16, #tpu.memory_space<vmem>>, vector<32x128xbf16>
      tpu.vector_store %arg18[%c0_65, %c0_66], %124 {strides = array<i32>} : memref<32x128xbf16, #tpu.memory_space<vmem>>, vector<32x128xbf16>,
      %c0_67 = arith.constant 0 : index
      %c0_68 = arith.constant 0 : index
      %126 = vector.load %arg8[%c0_67, %c0_68] : memref<128x128xbf16, #tpu.memory_space<vmem>>, vector<128x128xbf16>
      %cst_69 = arith.constant dense<0.000000e+00> : vector<32x128xf32>
      %127 = tpu.matmul %120, %126, %cst_69 {dimension_numbers = #tpu.dot_dimension_numbers<[1], [0], [0], [1], [0, 0, 1, 1], [], []>} : vector<32x128xbf16>, vector<128x128xbf16>, vector<32x128xf32> -> vector<32x128xf32>
      %128 = arith.truncf %127 : vector<32x128xf32> to vector<32x128xbf16>
      %c0_70 = arith.constant 0 : index
      %c0_71 = arith.constant 0 : index
      %129 = vector.load %arg19[%c0_70, %c0_71] : memref<32x128xbf16, #tpu.memory_space<vmem>>, vector<32x128xbf16>
      tpu.vector_store %arg19[%c0_70, %c0_71], %128 {strides = array<i32>} : memref<32x128xbf16, #tpu.memory_space<vmem>>, vector<32x128xbf16>,
    } else {
    }
    %c0 = arith.constant 0 : index
    %c0_1 = arith.constant 0 : index
    %c0_2 = arith.constant 0 : index
    %3 = vector.load %arg2[%c0, %c0_1, %c0_2] : memref<1x32x128xbf16, #tpu.memory_space<vmem>>, vector<1x32x128xbf16>
    %4 = vector.shape_cast %3 : vector<1x32x128xbf16> to vector<32x128xbf16>
    %5 = arith.extf %4 : vector<32x128xbf16> to vector<32x128xf32>
    %c0_3 = arith.constant 0 : index
    %c0_4 = arith.constant 0 : index
    %6 = vector.load %arg17[%c0_3, %c0_4] : memref<32x128xbf16, #tpu.memory_space<vmem>>, vector<32x128xbf16>
    %c0_5 = arith.constant 0 : index
    %c0_6 = arith.constant 0 : index
    %7 = vector.load %arg6[%c0_5, %c0_6] : memref<128x128xbf16, #tpu.memory_space<vmem>>, vector<128x128xbf16>
    %cst = arith.constant dense<0.000000e+00> : vector<32x128xf32>
    %8 = tpu.matmul %6, %7, %cst {dimension_numbers = #tpu.dot_dimension_numbers<[1], [0], [0], [1], [0, 0, 1, 1], [], []>} : vector<32x128xbf16>, vector<128x128xbf16>, vector<32x128xf32> -> vector<32x128xf32>
    %cst_7 = arith.constant 0.0883883461 : f32
    %9 = vector.broadcast %cst_7 : f32 to vector<32x128xf32>
    %10 = arith.mulf %8, %9 : vector<32x128xf32>
    %11 = arith.truncf %10 : vector<32x128xf32> to vector<32x128xbf16>
    %c0_8 = arith.constant 0 : index
    %c0_9 = arith.constant 0 : index
    %12 = vector.load %arg18[%c0_8, %c0_9] : memref<32x128xbf16, #tpu.memory_space<vmem>>, vector<32x128xbf16>
    "tpu.trace_start"() <{level = 10 : i32, message = "qh,kh->qk"}> : () -> ()
    %cst_10 = arith.constant dense<0.000000e+00> : vector<32x32xf32>
    %13 = tpu.matmul %11, %12, %cst_10 {dimension_numbers = #tpu.dot_dimension_numbers<[1], [1], [0], [0], [0, 0, 1, 0], [], []>} : vector<32x128xbf16>, vector<32x128xbf16>, vector<32x32xf32> -> vector<32x32xf32>
    "tpu.trace_stop"() : () -> ()
    %c0_11 = arith.constant 0 : index
    %c0_12 = arith.constant 0 : index
    %c0_13 = arith.constant 0 : index
    %14 = vector.load %arg3[%c0_11, %c0_12, %c0_13] : memref<1x1x32xf32, #tpu.memory_space<vmem>>, vector<1x1x32xf32>
    %15 = vector.shape_cast %14 : vector<1x1x32xf32> to vector<1x32xf32>
    %16 = vector.broadcast %15 : vector<1x32xf32> to vector<32x32xf32>
    %17 = arith.addf %13, %16 : vector<32x32xf32>
    %cst_14 = arith.constant dense<0xFF800000> : vector<32xf32>
    %18 = vector.multi_reduction <maximumf>, %17, %cst_14 [1] : vector<32x32xf32> to vector<32xf32>
    %19 = vector.shape_cast %18 : vector<32xf32> to vector<32x1xf32>
    %20 = vector.broadcast %19 : vector<32x1xf32> to vector<32x32xf32>
    %21 = arith.subf %17, %20 : vector<32x32xf32>
    %22 = math.exp %21 : vector<32x32xf32>
    %cst_15 = arith.constant dense<0.000000e+00> : vector<32xf32>
    %23 = vector.multi_reduction <add>, %22, %cst_15 [1] : vector<32x32xf32> to vector<32xf32>
    %24 = vector.shape_cast %23 : vector<32xf32> to vector<32x1xf32>
    %25 = arith.truncf %22 : vector<32x32xf32> to vector<32x32xbf16>
    %c0_16 = arith.constant 0 : index
    %c0_17 = arith.constant 0 : index
    %26 = vector.load %arg19[%c0_16, %c0_17] : memref<32x128xbf16, #tpu.memory_space<vmem>>, vector<32x128xbf16>
    %cst_18 = arith.constant dense<0.000000e+00> : vector<32x128xf32>
    %27 = tpu.matmul %25, %26, %cst_18 {dimension_numbers = #tpu.dot_dimension_numbers<[1], [0], [0], [1], [0, 0, 1, 1], [], []>} : vector<32x32xbf16>, vector<32x128xbf16>, vector<32x128xf32> -> vector<32x128xf32>
    %28 = tpu.reciprocal %24 {approx = true} : vector<32x1xf32> -> vector<32x1xf32>
    %29 = vector.broadcast %28 : vector<32x1xf32> to vector<32x128xf32>
    %30 = arith.mulf %27, %29 : vector<32x128xf32>
    %31 = arith.truncf %30 : vector<32x128xf32> to vector<32x128xbf16>
    %c0_19 = arith.constant 0 : index
    %c0_20 = arith.constant 0 : index
    %32 = vector.load %arg9[%c0_19, %c0_20] : memref<128x128xbf16, #tpu.memory_space<vmem>>, vector<128x128xbf16>
    %cst_21 = arith.constant dense<0.000000e+00> : vector<32x128xf32>
    %33 = tpu.matmul %31, %32, %cst_21 {dimension_numbers = #tpu.dot_dimension_numbers<[1], [0], [0], [1], [0, 0, 1, 1], [], []>} : vector<32x128xbf16>, vector<128x128xbf16>, vector<32x128xf32> -> vector<32x128xf32>
    %34 = arith.addf %5, %33 : vector<32x128xf32>
    %cst_22 = arith.constant dense<0.000000e+00> : vector<32xf32>
    %35 = vector.multi_reduction <add>, %34, %cst_22 [1] : vector<32x128xf32> to vector<32xf32>
    %36 = vector.shape_cast %35 : vector<32xf32> to vector<32x1xf32>
    %cst_23 = arith.constant 1.280000e+02 : f32
    %37 = vector.broadcast %cst_23 : f32 to vector<32x1xf32>
    %38 = arith.divf %36, %37 : vector<32x1xf32>
    %39 = vector.broadcast %38 : vector<32x1xf32> to vector<32x128xf32>
    %40 = arith.subf %34, %39 : vector<32x128xf32>
    %41 = vector.broadcast %38 : vector<32x1xf32> to vector<32x128xf32>
    %42 = arith.subf %34, %41 : vector<32x128xf32>
    %43 = arith.mulf %40, %42 : vector<32x128xf32>
    %cst_24 = arith.constant dense<0.000000e+00> : vector<32xf32>
    %44 = vector.multi_reduction <add>, %43, %cst_24 [1] : vector<32x128xf32> to vector<32xf32>
    %45 = vector.shape_cast %44 : vector<32xf32> to vector<32x1xf32>
    %cst_25 = arith.constant 1.280000e+02 : f32
    %46 = vector.broadcast %cst_25 : f32 to vector<32x1xf32>
    %47 = arith.divf %45, %46 : vector<32x1xf32>
    %48 = vector.broadcast %38 : vector<32x1xf32> to vector<32x128xf32>
    %49 = arith.subf %34, %48 : vector<32x128xf32>
    %cst_26 = arith.constant 9.99999974E-6 : f32
    %50 = vector.broadcast %cst_26 : f32 to vector<32x1xf32>
    %51 = arith.addf %47, %50 : vector<32x1xf32>
    %52 = math.rsqrt %51 : vector<32x1xf32>
    %53 = vector.broadcast %52 : vector<32x1xf32> to vector<32x128xf32>
    %54 = arith.mulf %49, %53 : vector<32x128xf32>
    %c0_27 = arith.constant 0 : index
    %c0_28 = arith.constant 0 : index
    %55 = vector.load %arg10[%c0_27, %c0_28] : memref<1x128xf32, #tpu.memory_space<vmem>>, vector<1x128xf32>
    %56 = vector.broadcast %55 : vector<1x128xf32> to vector<32x128xf32>
    %57 = arith.mulf %54, %56 : vector<32x128xf32>
    %c0_29 = arith.constant 0 : index
    %c0_30 = arith.constant 0 : index
    %58 = vector.load %arg11[%c0_29, %c0_30] : memref<1x128xf32, #tpu.memory_space<vmem>>, vector<1x128xf32>
    %59 = vector.broadcast %58 : vector<1x128xf32> to vector<32x128xf32>
    %60 = arith.addf %57, %59 : vector<32x128xf32>
    %61 = arith.truncf %60 : vector<32x128xf32> to vector<32x128xbf16>
    %c0_31 = arith.constant 0 : index
    %c0_32 = arith.constant 0 : index
    %62 = vector.load %arg12[%c0_31, %c0_32] : memref<128x256xbf16, #tpu.memory_space<vmem>>, vector<128x256xbf16>
    %cst_33 = arith.constant dense<0.000000e+00> : vector<32x256xf32>
    %63 = tpu.matmul %61, %62, %cst_33 {dimension_numbers = #tpu.dot_dimension_numbers<[1], [0], [0], [1], [0, 0, 1, 1], [], []>} : vector<32x128xbf16>, vector<128x256xbf16>, vector<32x256xf32> -> vector<32x256xf32>
    %c0_34 = arith.constant 0 : index
    %c0_35 = arith.constant 0 : index
    %64 = vector.load %arg13[%c0_34, %c0_35] : memref<1x256xf32, #tpu.memory_space<vmem>>, vector<1x256xf32>
    %65 = vector.broadcast %64 : vector<1x256xf32> to vector<32x256xf32>
    %66 = arith.addf %63, %65 : vector<32x256xf32>
    %67 = arith.mulf %66, %66 : vector<32x256xf32>
    %68 = arith.mulf %66, %67 : vector<32x256xf32>
    %cst_36 = arith.constant 4.471500e-02 : f32
    %69 = vector.broadcast %cst_36 : f32 to vector<32x256xf32>
    %70 = arith.mulf %69, %68 : vector<32x256xf32>
    %71 = arith.addf %66, %70 : vector<32x256xf32>
    %cst_37 = arith.constant 0.797884583 : f32
    %72 = vector.broadcast %cst_37 : f32 to vector<32x256xf32>
    %73 = arith.mulf %72, %71 : vector<32x256xf32>
    %74 = math.tanh %73 : vector<32x256xf32>
    %cst_38 = arith.constant 1.000000e+00 : f32
    %75 = vector.broadcast %cst_38 : f32 to vector<32x256xf32>
    %76 = arith.addf %75, %74 : vector<32x256xf32>
    %cst_39 = arith.constant 5.000000e-01 : f32
    %77 = vector.broadcast %cst_39 : f32 to vector<32x256xf32>
    %78 = arith.mulf %77, %76 : vector<32x256xf32>
    %79 = arith.mulf %66, %78 : vector<32x256xf32>
    %80 = arith.truncf %79 : vector<32x256xf32> to vector<32x256xbf16>
    %c0_40 = arith.constant 0 : index
    %c0_41 = arith.constant 0 : index
    %81 = vector.load %arg14[%c0_40, %c0_41] : memref<256x128xbf16, #tpu.memory_space<vmem>>, vector<256x128xbf16>
    %cst_42 = arith.constant dense<0.000000e+00> : vector<32x128xf32>
    %82 = tpu.matmul %80, %81, %cst_42 {dimension_numbers = #tpu.dot_dimension_numbers<[1], [0], [0], [1], [0, 0, 1, 1], [], []>} : vector<32x256xbf16>, vector<256x128xbf16>, vector<32x128xf32> -> vector<32x128xf32>
    %c0_43 = arith.constant 0 : index
    %c0_44 = arith.constant 0 : index
    %83 = vector.load %arg15[%c0_43, %c0_44] : memref<1x128xf32, #tpu.memory_space<vmem>>, vector<1x128xf32>
    %84 = vector.broadcast %83 : vector<1x128xf32> to vector<32x128xf32>
    %85 = arith.addf %82, %84 : vector<32x128xf32>
    %86 = arith.addf %34, %85 : vector<32x128xf32>
    %87 = arith.truncf %86 : vector<32x128xf32> to vector<32x128xbf16>
    %c0_45 = arith.constant 0 : index
    %c0_46 = arith.constant 0 : index
    %c0_47 = arith.constant 0 : index
    %88 = vector.load %arg16[%c0_45, %c0_46, %c0_47] : memref<1x32x128xbf16, #tpu.memory_space<vmem>>, vector<1x32x128xbf16>
    %89 = vector.shape_cast %88 : vector<1x32x128xbf16> to vector<32x128xbf16>
    %90 = vector.shape_cast %87 : vector<32x128xbf16> to vector<1x32x128xbf16>
    tpu.vector_store %arg16[%c0_45, %c0_46, %c0_47], %90 {strides = array<i32>} : memref<1x32x128xbf16, #tpu.memory_space<vmem>>, vector<1x32x128xbf16>,
    return
  }
  func.func @transform_0(%arg0: i32, %arg1: i32) -> (i32, i32, i32) {
    %c0_i32 = arith.constant 0 : i32
    %c0_i32_0 = arith.constant 0 : i32
    %c0_i32_1 = arith.constant 0 : i32
    return %arg0, %c0_i32, %c0_i32_0 : i32, i32, i32
  }
  func.func @transform_1(%arg0: i32, %arg1: i32) -> (i32, i32, i32) {
    %c0_i32 = arith.constant 0 : i32
    %c0_i32_0 = arith.constant 0 : i32
    %c0_i32_1 = arith.constant 0 : i32
    return %arg0, %c0_i32, %c0_i32_0 : i32, i32, i32
  }
  func.func @transform_2(%arg0: i32, %arg1: i32) -> (i32, i32) {
    %c0_i32 = arith.constant 0 : i32
    %c0_i32_0 = arith.constant 0 : i32
    %c0_i32_1 = arith.constant 0 : i32
    return %c0_i32, %c0_i32_0 : i32, i32
  }
  func.func @transform_3(%arg0: i32, %arg1: i32) -> (i32, i32) {
    %c0_i32 = arith.constant 0 : i32
    %c0_i32_0 = arith.constant 0 : i32
    %c0_i32_1 = arith.constant 0 : i32
    return %c0_i32, %c0_i32_0 : i32, i32
  }
  func.func @transform_4(%arg0: i32, %arg1: i32) -> (i32, i32) {
    %c0_i32 = arith.constant 0 : i32
    %c0_i32_0 = arith.constant 0 : i32
    %c0_i32_1 = arith.constant 0 : i32
    return %c0_i32, %c0_i32_0 : i32, i32
  }
  func.func @transform_5(%arg0: i32, %arg1: i32) -> (i32, i32) {
    %c0_i32 = arith.constant 0 : i32
    %c0_i32_0 = arith.constant 0 : i32
    %c0_i32_1 = arith.constant 0 : i32
    return %c0_i32, %c0_i32_0 : i32, i32
  }
  func.func @transform_6(%arg0: i32, %arg1: i32) -> (i32, i32) {
    %c0_i32 = arith.constant 0 : i32
    %c0_i32_0 = arith.constant 0 : i32
    %c0_i32_1 = arith.constant 0 : i32
    return %c0_i32, %c0_i32_0 : i32, i32
  }
  func.func @transform_7(%arg0: i32, %arg1: i32) -> (i32, i32) {
    %c0_i32 = arith.constant 0 : i32
    %c0_i32_0 = arith.constant 0 : i32
    %c0_i32_1 = arith.constant 0 : i32
    return %c0_i32, %c0_i32_0 : i32, i32
  }
  func.func @transform_8(%arg0: i32, %arg1: i32) -> (i32, i32) {
    %c0_i32 = arith.constant 0 : i32
    %c0_i32_0 = arith.constant 0 : i32
    %c0_i32_1 = arith.constant 0 : i32
    return %c0_i32, %c0_i32_0 : i32, i32
  }
  func.func @transform_9(%arg0: i32, %arg1: i32) -> (i32, i32) {
    %c0_i32 = arith.constant 0 : i32
    %c0_i32_0 = arith.constant 0 : i32
    %c0_i32_1 = arith.constant 0 : i32
    return %c0_i32, %c0_i32_0 : i32, i32
  }
  func.func @transform_10(%arg0: i32, %arg1: i32) -> (i32, i32) {
    %c0_i32 = arith.constant 0 : i32
    %c0_i32_0 = arith.constant 0 : i32
    %c0_i32_1 = arith.constant 0 : i32
    return %c0_i32, %c0_i32_0 : i32, i32
  }
  func.func @transform_11(%arg0: i32, %arg1: i32) -> (i32, i32) {
    %c0_i32 = arith.constant 0 : i32
    %c0_i32_0 = arith.constant 0 : i32
    %c0_i32_1 = arith.constant 0 : i32
    return %c0_i32, %c0_i32_0 : i32, i32
  }
  func.func @transform_12(%arg0: i32, %arg1: i32) -> (i32, i32) {
    %c0_i32 = arith.constant 0 : i32
    %c0_i32_0 = arith.constant 0 : i32
    %c0_i32_1 = arith.constant 0 : i32
    return %c0_i32, %c0_i32_0 : i32, i32
  }
  func.func @transform_13(%arg0: i32, %arg1: i32) -> (i32, i32) {
    %c0_i32 = arith.constant 0 : i32
    %c0_i32_0 = arith.constant 0 : i32
    %c0_i32_1 = arith.constant 0 : i32
    return %c0_i32, %c0_i32_0 : i32, i32
  }
  func.func @transform_14(%arg0: i32, %arg1: i32) -> (i32, i32, i32) {
    %c0_i32 = arith.constant 0 : i32
    %c0_i32_0 = arith.constant 0 : i32
    return %arg0, %arg1, %c0_i32 : i32, i32, i32
  }
}

</mosaic_0001>

<llo_original>
// kernel: tpu_custom_call.1
$region0: #{tpu_custom_call.1}
  #allocation0 [shape = 'u32[]', space=smem, size = 0x4, offset = 0x4, fixed_abs, tag = 'smem constant byte address 0x4 - core index']
  #allocation1 [shape = 'u32[144,128]{1,0:T(1,128)}', space=vmem, size = 0x12000, scoped, tag = 'internal scratch']
  #allocation2 [shape = 'bf16[32,128]{1,0:T(8,128)(2,1)}', space=vmem, size = 0x2000, scoped, tag = 'scratch operand']
  #allocation3 [shape = 'bf16[32,128]{1,0:T(8,128)(2,1)}', space=vmem, size = 0x2000, scoped, tag = 'scratch operand']
  #allocation4 [shape = 'bf16[32,128]{1,0:T(8,128)(2,1)}', space=vmem, size = 0x2000, scoped, tag = 'scratch operand']
  %s0 = inlined_call_operand.hbm [shape: bf16[2,32,128], index: 0, kind: input, shape index: {}]
  %s1 = inlined_call_operand.hbm [shape: f32[2,1,32], index: 1, kind: input, shape index: {}]
  %s2 = inlined_call_operand.vmem [shape: f32[1,128], index: 2, kind: input, shape index: {}]
  %s3 = inlined_call_operand.vmem [shape: f32[1,128], index: 3, kind: input, shape index: {}]
  %s4 = inlined_call_operand.hbm [shape: bf16[128,128], index: 4, kind: input, shape index: {}]
  %s5 = inlined_call_operand.hbm [shape: bf16[128,128], index: 5, kind: input, shape index: {}]
  %s6 = inlined_call_operand.hbm [shape: bf16[128,128], index: 6, kind: input, shape index: {}]
  %s7 = inlined_call_operand.hbm [shape: bf16[128,128], index: 7, kind: input, shape index: {}]
  %s8 = inlined_call_operand.vmem [shape: f32[1,128], index: 8, kind: input, shape index: {}]
  %s9 = inlined_call_operand.vmem [shape: f32[1,128], index: 9, kind: input, shape index: {}]
  %s10 = inlined_call_operand.hbm [shape: bf16[128,256], index: 10, kind: input, shape index: {}]
  %s11 = inlined_call_operand.vmem [shape: f32[1,256], index: 11, kind: input, shape index: {}]
  %s12 = inlined_call_operand.hbm [shape: bf16[256,128], index: 12, kind: input, shape index: {}]
  %s13 = inlined_call_operand.vmem [shape: f32[1,128], index: 13, kind: input, shape index: {}]
  %s14 = inlined_call_operand.hbm [shape: bf16[2,32,128], index: 14, kind: output, shape index: {}]
  %s15 = sld [smem:[#allocation0]]
  $region125: #{tpu_custom_call.1} parent=0
    _
  %s17 = ssub.s32 1, %s15
  %s18 = scalar_select 0, %s17, %s15
  $region1: #{tpu_custom_call.1} parent=0
    #allocation5 [shape = 'u8[16384]{0}', space=vmem, size = 0x4000, scoped, tag = 'input window, operand 0']
    #allocation6 [shape = 's32[2]{0}', space=sflag, size = 0x8, scoped, tag = 'scoped memory for tpu_custom_call.1']
    #allocation7 [shape = 's32[2]{0}', space=sflag, size = 0x8, scoped, tag = 'scoped memory for tpu_custom_call.1']
    #allocation8 [shape = 'u8[1024]{0}', space=vmem, size = 0x400, scoped, tag = 'input window, operand 1']
    #allocation9 [shape = 's32[2]{0}', space=sflag, size = 0x8, scoped, tag = 'scoped memory for tpu_custom_call.1']
    #allocation10 [shape = 'u8[32768]{0}', space=vmem, size = 0x8000, scoped, tag = 'input window, operand 4, single buffered']
    #allocation11 [shape = 'u8[32768]{0}', space=vmem, size = 0x8000, scoped, tag = 'input window, operand 5, single buffered']
    #allocation12 [shape = 's32[1]{0}', space=sflag, size = 0x4, scoped, tag = 'scoped memory for tpu_custom_call.1']
    #allocation13 [shape = 'u8[32768]{0}', space=vmem, size = 0x8000, scoped, tag = 'input window, operand 6, single buffered']
    #allocation14 [shape = 'u8[32768]{0}', space=vmem, size = 0x8000, scoped, tag = 'input window, operand 7, single buffered']
    #allocation15 [shape = 's32[1]{0}', space=sflag, size = 0x4, scoped, tag = 'scoped memory for tpu_custom_call.1']
    #allocation16 [shape = 'u8[65536]{0}', space=vmem, size = 0x10000, scoped, tag = 'input window, operand 10, single buffered']
    #allocation17 [shape = 'u8[65536]{0}', space=vmem, size = 0x10000, scoped, tag = 'input window, operand 12, single buffered']
    #allocation18 [shape = 's32[1]{0}', space=sflag, size = 0x4, scoped, tag = 'scoped memory for tpu_custom_call.1']
    #allocation19 [shape = 'u8[16384]{0}', space=vmem, size = 0x4000, scoped, tag = 'output window, operand 0']
    %19 = vsyncpa [#allocation6], 0
    %s20 = scalar_lea.sflag [#allocation6], 1
    %21 = vsyncpa %s20, 0
    %22 = vsyncpa [#allocation9], 0
    %s23 = scalar_lea.sflag [#allocation9], 1
    %24 = vsyncpa %s23, 0
    %25 = vsyncpa [#allocation12], 0
    %26 = vsyncpa [#allocation15], 0
    %27 = vsyncpa [#allocation18], 0
    %28 = vsyncpa [#allocation7], 0
    %s29 = scalar_lea.sflag [#allocation7], 1
    %30 = vsyncpa %s29, 0
    loop: start=0, step=1, limit=4
    $region2: #{tpu_custom_call.1} parent=1 // loop_pre_header
      _
    $region3: #{tpu_custom_call.1} parent=1 // loop_header
      %s32 = sphi 0, %s36
      %p33 = scmp.ge.s32.totalorder %s32, 4
      %s39 = sphi 0, %s51
      %s40 = sphi 0, %s47
      %s41 = sphi 0, %s39
      %s42 = sphi 0, %s40
      %s43 = sphi 0, %s41
      %s44 = sphi 0, %s42
      %s54 = sphi 0, %s56
      %s57 = sphi 0, %s54
      %s58 = sphi 0, %s57
      %s74 = sphi 0, %s58
      %s80 = sphi 0, %s82
      %s83 = sphi 0, %s80
      %s84 = sphi 0, %s83
      %s100 = sphi 0, %s84
      %s104 = sphi 0, %s104
      %s106 = sphi 0, %s104
      %s107 = sphi 0, %s106
      %s121 = sphi 0, %s107
      %s125 = sphi 0, %s125
      %s127 = sphi 0, %s125
      %s128 = sphi 0, %s127
      %s142 = sphi 0, %s128
      %s146 = sphi 0, %s146
      %s148 = sphi 0, %s146
      %s149 = sphi 0, %s148
      %s163 = sphi 0, %s149
      %s167 = sphi 0, %s167
      %s169 = sphi 0, %s167
      %s170 = sphi 0, %s169
      %s184 = sphi 0, %s170
      %s188 = sphi 0, %s188
      %s190 = sphi 0, %s188
      %s191 = sphi 0, %s190
      %s205 = sphi 0, %s191
      %s209 = sphi 0, %s209
      %s211 = sphi 0, %s209
      %s212 = sphi 0, %s211
      %s226 = sphi 0, %s212
      %s230 = sphi 0, %s230
      %s232 = sphi 0, %s230
      %s233 = sphi 0, %s232
      %s247 = sphi 0, %s233
      %s251 = sphi 0, %s251
      %s253 = sphi 0, %s251
      %s254 = sphi 0, %s253
      %s268 = sphi 0, %s254
      %s272 = sphi 0, %s272
      %s274 = sphi 0, %s272
      %s275 = sphi 0, %s274
      %s289 = sphi 0, %s275
      %s293 = sphi 0, %s293
      %s295 = sphi 0, %s293
      %s296 = sphi 0, %s295
      %s310 = sphi 0, %s296
      %s314 = sphi 0, %s314
      %s316 = sphi 0, %s314
      %s317 = sphi 0, %s316
      %s331 = sphi 0, %s317
      %s335 = sphi 0, %s335
      %s337 = sphi 0, %s335
      %s338 = sphi 0, %s337
      %s352 = sphi 0, %s338
      %s360 = sphi 0, %s362
      %s363 = sphi 0, %s360
      %s364 = sphi 0, %s363
      %s380 = sphi 0, %s364
    $region4: #{tpu_custom_call.1} parent=1 // loop_header_branch
      %35 = sbr.rel (%p33) target = $region8
    $region5: #{tpu_custom_call.1} parent=1 // loop_body
      %s37 = ssub.s32 %s32, 1
      %s38 = ssub.s32 %s32, 2
      %s45 = sadd.s32 1, %s40
      %p46 = scmp.ge.s32.totalorder %s45, 1
      %s47 = scalar_select %p46, 0, %s45
      %s48 = sadd.s32 1, %s39
      %s49 = scalar_select %p46, %s48, %s39
      %p50 = scmp.ge.s32.totalorder %s49, 2
      %s51 = scalar_select %p50, 0, %s49
      %s52 = ssub.s32 %s39, %s51
      %p53 = scmp.eq.s32.totalorder %s52, 0
      %s55 = sadd.s32 %s54, 1
      %s56 = scalar_select %p53, %s54, %s55
      %p59 = pneg %p53
      %p60 = scmp.eq.s32.totalorder %s32, 1
      %p61 = por %p59, %p60
      %p62 = scmp.ne.s32.totalorder %s54, %s57
      %p63 = scmp.eq.s32.totalorder %s32, 0
      %p64 = por %p62, %p63
      %p65 = scmp.ne.s32.totalorder %s54, %s57
      %p66 = scmp.eq.s32.totalorder %s37, 1
      %p67 = por %p65, %p66
      %p68 = scmp.ne.s32.totalorder %s57, %s58
      %p69 = scmp.eq.s32.totalorder %s37, 0
      %p70 = por %p68, %p69
      %p71 = scmp.ne.s32.totalorder %s57, %s58
      %p72 = scmp.eq.s32.totalorder %s38, 1
      %p73 = por %p71, %p72
      %p75 = scmp.ne.s32.totalorder %s58, %s74
      %p76 = scmp.eq.s32.totalorder %s38, 0
      %p77 = por %p75, %p76
      %s78 = ssub.s32 %s39, %s51
      %p79 = scmp.eq.s32.totalorder %s78, 0
      %s81 = sadd.s32 %s80, 1
      %s82 = scalar_select %p79, %s80, %s81
      %p85 = pneg %p79
      %p86 = scmp.eq.s32.totalorder %s32, 1
      %p87 = por %p85, %p86
      %p88 = scmp.ne.s32.totalorder %s80, %s83
      %p89 = scmp.eq.s32.totalorder %s32, 0
      %p90 = por %p88, %p89
      %p91 = scmp.ne.s32.totalorder %s80, %s83
      %p92 = scmp.eq.s32.totalorder %s37, 1
      %p93 = por %p91, %p92
      %p94 = scmp.ne.s32.totalorder %s83, %s84
      %p95 = scmp.eq.s32.totalorder %s37, 0
      %p96 = por %p94, %p95
      %p97 = scmp.ne.s32.totalorder %s83, %s84
      %p98 = scmp.eq.s32.totalorder %s38, 1
      %p99 = por %p97, %p98
      %p101 = scmp.ne.s32.totalorder %s84, %s100
      %p102 = scmp.eq.s32.totalorder %s38, 0
      %p103 = por %p101, %p102
      %s105 = sadd.s32 %s104, 1
      %p108 = scmp.eq.s32.totalorder %s32, 1
      %p109 = scmp.ne.s32.totalorder %s104, %s106
      %p110 = scmp.eq.s32.totalorder %s32, 0
      %p111 = por %p109, %p110
      %p112 = scmp.ne.s32.totalorder %s104, %s106
      %p113 = scmp.eq.s32.totalorder %s37, 1
      %p114 = por %p112, %p113
      %p115 = scmp.ne.s32.totalorder %s106, %s107
      %p116 = scmp.eq.s32.totalorder %s37, 0
      %p117 = por %p115, %p116
      %p118 = scmp.ne.s32.totalorder %s106, %s107
      %p119 = scmp.eq.s32.totalorder %s38, 1
      %p120 = por %p118, %p119
      %p122 = scmp.ne.s32.totalorder %s107, %s121
      %p123 = scmp.eq.s32.totalorder %s38, 0
      %p124 = por %p122, %p123
      %s126 = sadd.s32 %s125, 1
      %p129 = scmp.eq.s32.totalorder %s32, 1
      %p130 = scmp.ne.s32.totalorder %s125, %s127
      %p131 = scmp.eq.s32.totalorder %s32, 0
      %p132 = por %p130, %p131
      %p133 = scmp.ne.s32.totalorder %s125, %s127
      %p134 = scmp.eq.s32.totalorder %s37, 1
      %p135 = por %p133, %p134
      %p136 = scmp.ne.s32.totalorder %s127, %s128
      %p137 = scmp.eq.s32.totalorder %s37, 0
      %p138 = por %p136, %p137
      %p139 = scmp.ne.s32.totalorder %s127, %s128
      %p140 = scmp.eq.s32.totalorder %s38, 1
      %p141 = por %p139, %p140
      %p143 = scmp.ne.s32.totalorder %s128, %s142
      %p144 = scmp.eq.s32.totalorder %s38, 0
      %p145 = por %p143, %p144
      %s147 = sadd.s32 %s146, 1
      %p150 = scmp.eq.s32.totalorder %s32, 1
      %p151 = scmp.ne.s32.totalorder %s146, %s148
      %p152 = scmp.eq.s32.totalorder %s32, 0
      %p153 = por %p151, %p152
      %p154 = scmp.ne.s32.totalorder %s146, %s148
      %p155 = scmp.eq.s32.totalorder %s37, 1
      %p156 = por %p154, %p155
      %p157 = scmp.ne.s32.totalorder %s148, %s149
      %p158 = scmp.eq.s32.totalorder %s37, 0
      %p159 = por %p157, %p158
      %p160 = scmp.ne.s32.totalorder %s148, %s149
      %p161 = scmp.eq.s32.totalorder %s38, 1
      %p162 = por %p160, %p161
      %p164 = scmp.ne.s32.totalorder %s149, %s163
      %p165 = scmp.eq.s32.totalorder %s38, 0
      %p166 = por %p164, %p165
      %s168 = sadd.s32 %s167, 1
      %p171 = scmp.eq.s32.totalorder %s32, 1
      %p172 = scmp.ne.s32.totalorder %s167, %s169
      %p173 = scmp.eq.s32.totalorder %s32, 0
      %p174 = por %p172, %p173
      %p175 = scmp.ne.s32.totalorder %s167, %s169
      %p176 = scmp.eq.s32.totalorder %s37, 1
      %p177 = por %p175, %p176
      %p178 = scmp.ne.s32.totalorder %s169, %s170
      %p179 = scmp.eq.s32.totalorder %s37, 0
      %p180 = por %p178, %p179
      %p181 = scmp.ne.s32.totalorder %s169, %s170
      %p182 = scmp.eq.s32.totalorder %s38, 1
      %p183 = por %p181, %p182
      %p185 = scmp.ne.s32.totalorder %s170, %s184
      %p186 = scmp.eq.s32.totalorder %s38, 0
      %p187 = por %p185, %p186
      %s189 = sadd.s32 %s188, 1
      %p192 = scmp.eq.s32.totalorder %s32, 1
      %p193 = scmp.ne.s32.totalorder %s188, %s190
      %p194 = scmp.eq.s32.totalorder %s32, 0
      %p195 = por %p193, %p194
      %p196 = scmp.ne.s32.totalorder %s188, %s190
      %p197 = scmp.eq.s32.totalorder %s37, 1
      %p198 = por %p196, %p197
      %p199 = scmp.ne.s32.totalorder %s190, %s191
      %p200 = scmp.eq.s32.totalorder %s37, 0
      %p201 = por %p199, %p200
      %p202 = scmp.ne.s32.totalorder %s190, %s191
      %p203 = scmp.eq.s32.totalorder %s38, 1
      %p204 = por %p202, %p203
      %p206 = scmp.ne.s32.totalorder %s191, %s205
      %p207 = scmp.eq.s32.totalorder %s38, 0
      %p208 = por %p206, %p207
      %s210 = sadd.s32 %s209, 1
      %p213 = scmp.eq.s32.totalorder %s32, 1
      %p214 = scmp.ne.s32.totalorder %s209, %s211
      %p215 = scmp.eq.s32.totalorder %s32, 0
      %p216 = por %p214, %p215
      %p217 = scmp.ne.s32.totalorder %s209, %s211
      %p218 = scmp.eq.s32.totalorder %s37, 1
      %p219 = por %p217, %p218
      %p220 = scmp.ne.s32.totalorder %s211, %s212
      %p221 = scmp.eq.s32.totalorder %s37, 0
      %p222 = por %p220, %p221
      %p223 = scmp.ne.s32.totalorder %s211, %s212
      %p224 = scmp.eq.s32.totalorder %s38, 1
      %p225 = por %p223, %p224
      %p227 = scmp.ne.s32.totalorder %s212, %s226
      %p228 = scmp.eq.s32.totalorder %s38, 0
      %p229 = por %p227, %p228
      %s231 = sadd.s32 %s230, 1
      %p234 = scmp.eq.s32.totalorder %s32, 1
      %p235 = scmp.ne.s32.totalorder %s230, %s232
      %p236 = scmp.eq.s32.totalorder %s32, 0
      %p237 = por %p235, %p236
      %p238 = scmp.ne.s32.totalorder %s230, %s232
      %p239 = scmp.eq.s32.totalorder %s37, 1
      %p240 = por %p238, %p239
      %p241 = scmp.ne.s32.totalorder %s232, %s233
      %p242 = scmp.eq.s32.totalorder %s37, 0
      %p243 = por %p241, %p242
      %p244 = scmp.ne.s32.totalorder %s232, %s233
      %p245 = scmp.eq.s32.totalorder %s38, 1
      %p246 = por %p244, %p245
      %p248 = scmp.ne.s32.totalorder %s233, %s247
      %p249 = scmp.eq.s32.totalorder %s38, 0
      %p250 = por %p248, %p249
      %s252 = sadd.s32 %s251, 1
      %p255 = scmp.eq.s32.totalorder %s32, 1
      %p256 = scmp.ne.s32.totalorder %s251, %s253
      %p257 = scmp.eq.s32.totalorder %s32, 0
      %p258 = por %p256, %p257
      %p259 = scmp.ne.s32.totalorder %s251, %s253
      %p260 = scmp.eq.s32.totalorder %s37, 1
      %p261 = por %p259, %p260
      %p262 = scmp.ne.s32.totalorder %s253, %s254
      %p263 = scmp.eq.s32.totalorder %s37, 0
      %p264 = por %p262, %p263
      %p265 = scmp.ne.s32.totalorder %s253, %s254
      %p266 = scmp.eq.s32.totalorder %s38, 1
      %p267 = por %p265, %p266
      %p269 = scmp.ne.s32.totalorder %s254, %s268
      %p270 = scmp.eq.s32.totalorder %s38, 0
      %p271 = por %p269, %p270
      %s273 = sadd.s32 %s272, 1
      %p276 = scmp.eq.s32.totalorder %s32, 1
      %p277 = scmp.ne.s32.totalorder %s272, %s274
      %p278 = scmp.eq.s32.totalorder %s32, 0
      %p279 = por %p277, %p278
      %p280 = scmp.ne.s32.totalorder %s272, %s274
      %p281 = scmp.eq.s32.totalorder %s37, 1
      %p282 = por %p280, %p281
      %p283 = scmp.ne.s32.totalorder %s274, %s275
      %p284 = scmp.eq.s32.totalorder %s37, 0
      %p285 = por %p283, %p284
      %p286 = scmp.ne.s32.totalorder %s274, %s275
      %p287 = scmp.eq.s32.totalorder %s38, 1
      %p288 = por %p286, %p287
      %p290 = scmp.ne.s32.totalorder %s275, %s289
      %p291 = scmp.eq.s32.totalorder %s38, 0
      %p292 = por %p290, %p291
      %s294 = sadd.s32 %s293, 1
      %p297 = scmp.eq.s32.totalorder %s32, 1
      %p298 = scmp.ne.s32.totalorder %s293, %s295
      %p299 = scmp.eq.s32.totalorder %s32, 0
      %p300 = por %p298, %p299
      %p301 = scmp.ne.s32.totalorder %s293, %s295
      %p302 = scmp.eq.s32.totalorder %s37, 1
      %p303 = por %p301, %p302
      %p304 = scmp.ne.s32.totalorder %s295, %s296
      %p305 = scmp.eq.s32.totalorder %s37, 0
      %p306 = por %p304, %p305
      %p307 = scmp.ne.s32.totalorder %s295, %s296
      %p308 = scmp.eq.s32.totalorder %s38, 1
      %p309 = por %p307, %p308
      %p311 = scmp.ne.s32.totalorder %s296, %s310
      %p312 = scmp.eq.s32.totalorder %s38, 0
      %p313 = por %p311, %p312
      %s315 = sadd.s32 %s314, 1
      %p318 = scmp.eq.s32.totalorder %s32, 1
      %p319 = scmp.ne.s32.totalorder %s314, %s316
      %p320 = scmp.eq.s32.totalorder %s32, 0
      %p321 = por %p319, %p320
      %p322 = scmp.ne.s32.totalorder %s314, %s316
      %p323 = scmp.eq.s32.totalorder %s37, 1
      %p324 = por %p322, %p323
      %p325 = scmp.ne.s32.totalorder %s316, %s317
      %p326 = scmp.eq.s32.totalorder %s37, 0
      %p327 = por %p325, %p326
      %p328 = scmp.ne.s32.totalorder %s316, %s317
      %p329 = scmp.eq.s32.totalorder %s38, 1
      %p330 = por %p328, %p329
      %p332 = scmp.ne.s32.totalorder %s317, %s331
      %p333 = scmp.eq.s32.totalorder %s38, 0
      %p334 = por %p332, %p333
      %s336 = sadd.s32 %s335, 1
      %p339 = scmp.eq.s32.totalorder %s32, 1
      %p340 = scmp.ne.s32.totalorder %s335, %s337
      %p341 = scmp.eq.s32.totalorder %s32, 0
      %p342 = por %p340, %p341
      %p343 = scmp.ne.s32.totalorder %s335, %s337
      %p344 = scmp.eq.s32.totalorder %s37, 1
      %p345 = por %p343, %p344
      %p346 = scmp.ne.s32.totalorder %s337, %s338
      %p347 = scmp.eq.s32.totalorder %s37, 0
      %p348 = por %p346, %p347
      %p349 = scmp.ne.s32.totalorder %s337, %s338
      %p350 = scmp.eq.s32.totalorder %s38, 1
      %p351 = por %p349, %p350
      %p353 = scmp.ne.s32.totalorder %s338, %s352
      %p354 = scmp.eq.s32.totalorder %s38, 0
      %p355 = por %p353, %p354
      %s356 = ssub.s32 %s39, %s51
      %s357 = ssub.s32 %s40, %s47
      %s358 = sor.u32 %s356, %s357
      %p359 = scmp.eq.s32.totalorder %s358, 0
      %s361 = sadd.s32 %s360, 1
      %s362 = scalar_select %p359, %s360, %s361
      %p365 = pneg %p359
      %p366 = scmp.eq.s32.totalorder %s32, 1
      %p367 = por %p365, %p366
      %p368 = scmp.ne.s32.totalorder %s360, %s363
      %p369 = scmp.eq.s32.totalorder %s32, 0
      %p370 = por %p368, %p369
      %p371 = scmp.ne.s32.totalorder %s360, %s363
      %p372 = scmp.eq.s32.totalorder %s37, 1
      %p373 = por %p371, %p372
      %p374 = scmp.ne.s32.totalorder %s363, %s364
      %p375 = scmp.eq.s32.totalorder %s37, 0
      %p376 = por %p374, %p375
      %p377 = scmp.ne.s32.totalorder %s363, %s364
      %p378 = scmp.eq.s32.totalorder %s38, 1
      %p379 = por %p377, %p378
      %p381 = scmp.ne.s32.totalorder %s364, %s380
      %p382 = scmp.eq.s32.totalorder %s38, 0
      %p383 = por %p381, %p382
      %p384 = scmp.le.s32.totalorder 1, %s32
      %p385 = scmp.lt.s32.totalorder %s32, 3
      %p386 = pnand %p384, %p385
      %p387 = pneg %p386
      // Predicated region
      $region9: #{tpu_custom_call.1} parent=5 // pred_check
        _
      $region10: #{tpu_custom_call.1} parent=5 // pred_check_branch
        %389 = sbr.rel (%p386) target = $region12
      $region11: #{tpu_custom_call.1} parent=5 // pred_region
        %s390 = ssub.s32 %s32, 1
        // Predicated region
        $region13: #{tpu_custom_call.1} parent=11 // pred_check
          %p391 = pneg %p117
        $region14: #{tpu_custom_call.1} parent=11 // pred_check_branch
          %393 = sbr.rel (%p391) target = $region16
        $region15: #{tpu_custom_call.1} parent=11 // pred_region
          _
        $region16: #{tpu_custom_call.1} parent=11 // pred_fallthru
          _
        // Predicated region
        $region17: #{tpu_custom_call.1} parent=11 // pred_check
          %p394 = pneg %p138
        $region18: #{tpu_custom_call.1} parent=11 // pred_check_branch
          %396 = sbr.rel (%p394) target = $region20
        $region19: #{tpu_custom_call.1} parent=11 // pred_region
          _
        $region20: #{tpu_custom_call.1} parent=11 // pred_fallthru
          _
        // Predicated region
        $region21: #{tpu_custom_call.1} parent=11 // pred_check
          %p397 = pneg %p159
        $region22: #{tpu_custom_call.1} parent=11 // pred_check_branch
          %399 = sbr.rel (%p397) target = $region24
        $region23: #{tpu_custom_call.1} parent=11 // pred_region
          %s401 = ssub.s32 1024, 1024
          %402 = vsyncadd [#allocation9], %s401
          %s403 = sshll.u32 [#allocation10], 4
          %s404 = int_to_ptr.vmem [resolvable:$true] %s403
          %409 = dma.hbm_to_vmem [thread:$0]  %s4, 1024, %s404, [#allocation9], 64, 64, 4
        $region24: #{tpu_custom_call.1} parent=11 // pred_fallthru
          _
        // Predicated region
        $region25: #{tpu_custom_call.1} parent=11 // pred_check
          %p410 = pneg %p180
        $region26: #{tpu_custom_call.1} parent=11 // pred_check_branch
          %412 = sbr.rel (%p410) target = $region28
        $region27: #{tpu_custom_call.1} parent=11 // pred_region
          %s414 = ssub.s32 1024, 1024
          %415 = vsyncadd [#allocation12], %s414
          %s416 = sshll.u32 [#allocation11], 4
          %s417 = int_to_ptr.vmem [resolvable:$true] %s416
          %422 = dma.hbm_to_vmem [thread:$0]  %s5, 1024, %s417, [#allocation12], 64, 64, 4
        $region28: #{tpu_custom_call.1} parent=11 // pred_fallthru
          _
        // Predicated region
        $region29: #{tpu_custom_call.1} parent=11 // pred_check
          %p423 = pneg %p201
        $region30: #{tpu_custom_call.1} parent=11 // pred_check_branch
          %425 = sbr.rel (%p423) target = $region32
        $region31: #{tpu_custom_call.1} parent=11 // pred_region
          %s427 = ssub.s32 1024, 1024
          %428 = vsyncadd [#allocation12], %s427
          %s429 = sshll.u32 [#allocation13], 4
          %s430 = int_to_ptr.vmem [resolvable:$true] %s429
          %435 = dma.hbm_to_vmem [thread:$0]  %s6, 1024, %s430, [#allocation12], 64, 64, 4
        $region32: #{tpu_custom_call.1} parent=11 // pred_fallthru
          _
        // Predicated region
        $region33: #{tpu_custom_call.1} parent=11 // pred_check
          %p436 = pneg %p222
        $region34: #{tpu_custom_call.1} parent=11 // pred_check_branch
          %438 = sbr.rel (%p436) target = $region36
        $region35: #{tpu_custom_call.1} parent=11 // pred_region
          %s440 = ssub.s32 1024, 1024
          %441 = vsyncadd [#allocation15], %s440
          %s442 = sshll.u32 [#allocation14], 4
          %s443 = int_to_ptr.vmem [resolvable:$true] %s442
          %448 = dma.hbm_to_vmem [thread:$0]  %s7, 1024, %s443, [#allocation15], 64, 64, 4
        $region36: #{tpu_custom_call.1} parent=11 // pred_fallthru
          _
        // Predicated region
        $region37: #{tpu_custom_call.1} parent=11 // pred_check
          %p449 = pneg %p243
        $region38: #{tpu_custom_call.1} parent=11 // pred_check_branch
          %451 = sbr.rel (%p449) target = $region40
        $region39: #{tpu_custom_call.1} parent=11 // pred_region
          _
        $region40: #{tpu_custom_call.1} parent=11 // pred_fallthru
          _
        // Predicated region
        $region41: #{tpu_custom_call.1} parent=11 // pred_check
          %p452 = pneg %p264
        $region42: #{tpu_custom_call.1} parent=11 // pred_check_branch
          %454 = sbr.rel (%p452) target = $region44
        $region43: #{tpu_custom_call.1} parent=11 // pred_region
          _
        $region44: #{tpu_custom_call.1} parent=11 // pred_fallthru
          _
        // Predicated region
        $region45: #{tpu_custom_call.1} parent=11 // pred_check
          %p455 = pneg %p285
        $region46: #{tpu_custom_call.1} parent=11 // pred_check_branch
          %457 = sbr.rel (%p455) target = $region48
        $region47: #{tpu_custom_call.1} parent=11 // pred_region
          %s459 = ssub.s32 2048, 2048
          %460 = vsyncadd [#allocation15], %s459
          %s461 = sshll.u32 [#allocation16], 4
          %s462 = int_to_ptr.vmem [resolvable:$true] %s461
          %467 = dma.hbm_to_vmem [thread:$0]  %s10, 2048, %s462, [#allocation15], 128, 128, 8
        $region48: #{tpu_custom_call.1} parent=11 // pred_fallthru
          _
        // Predicated region
        $region49: #{tpu_custom_call.1} parent=11 // pred_check
          %p468 = pneg %p306
        $region50: #{tpu_custom_call.1} parent=11 // pred_check_branch
          %470 = sbr.rel (%p468) target = $region52
        $region51: #{tpu_custom_call.1} parent=11 // pred_region
          _
        $region52: #{tpu_custom_call.1} parent=11 // pred_fallthru
          _
        // Predicated region
        $region53: #{tpu_custom_call.1} parent=11 // pred_check
          %p471 = pneg %p327
        $region54: #{tpu_custom_call.1} parent=11 // pred_check_branch
          %473 = sbr.rel (%p471) target = $region56
        $region55: #{tpu_custom_call.1} parent=11 // pred_region
          %s475 = ssub.s32 2048, 2048
          %476 = vsyncadd [#allocation18], %s475
          %s477 = sshll.u32 [#allocation17], 4
          %s478 = int_to_ptr.vmem [resolvable:$true] %s477
          %483 = dma.hbm_to_vmem [thread:$0]  %s12, 2048, %s478, [#allocation18], 64, 64, 4
        $region56: #{tpu_custom_call.1} parent=11 // pred_fallthru
          _
        // Predicated region
        $region57: #{tpu_custom_call.1} parent=11 // pred_check
          %p484 = pneg %p348
        $region58: #{tpu_custom_call.1} parent=11 // pred_check_branch
          %486 = sbr.rel (%p484) target = $region60
        $region59: #{tpu_custom_call.1} parent=11 // pred_region
          _
        $region60: #{tpu_custom_call.1} parent=11 // pred_fallthru
          _
      $region12: #{tpu_custom_call.1} parent=5 // pred_fallthru
        _
      %p487 = scmp.lt.s32.totalorder %s32, 2
      // Predicated region
      $region61: #{tpu_custom_call.1} parent=5 // pred_check
        %p488 = pneg %p487
      $region62: #{tpu_custom_call.1} parent=5 // pred_check_branch
        %490 = sbr.rel (%p488) target = $region64
      $region63: #{tpu_custom_call.1} parent=5 // pred_region
        // Predicated region
        $region65: #{tpu_custom_call.1} parent=63 // pred_check
          %p491 = pneg %p64
        $region66: #{tpu_custom_call.1} parent=63 // pred_check_branch
          %493 = sbr.rel (%p491) target = $region68
        $region67: #{tpu_custom_call.1} parent=63 // pred_region
          %s494 = sand.u32 %s54, 1
          %s495 = scalar_lea.sflag [#allocation6], %s494
          %s496 = sand.u32 %s54, 1
          %s497 = smul.addr %s496, 16
          %s498 = scalar_lea.vmem [#allocation5], %s497
          %s500 = ssub.s32 256, 256
          %501 = vsyncadd %s495, %s500
          %s502 = smul.addr %s39, 4
          %s503 = smul.addr %s502, 64
          %s504 = scalar_lea.hbm %s0, %s503
          %s505 = sshll.u32 %s498, 4
          %s506 = int_to_ptr.vmem [resolvable:$true] %s505
          %511 = dma.hbm_to_vmem [thread:$0]  %s504, 256, %s506, %s495, 64, 64, 4
        $region68: #{tpu_custom_call.1} parent=63 // pred_fallthru
          _
        // Predicated region
        $region69: #{tpu_custom_call.1} parent=63 // pred_check
          %p512 = pneg %p90
        $region70: #{tpu_custom_call.1} parent=63 // pred_check_branch
          %514 = sbr.rel (%p512) target = $region72
        $region71: #{tpu_custom_call.1} parent=63 // pred_region
          %s515 = sand.u32 %s32, 1
          %s516 = scalar_lea.sflag [#allocation9], %s515
          %s517 = sand.u32 %s80, 1
          %s518 = scalar_lea.vmem [#allocation8], %s517
          %s520 = ssub.s32 16, 16
          %521 = vsyncadd %s516, %s520
          %s522 = smul.addr %s39, 16
          %s523 = scalar_lea.hbm %s1, %s522
          %s525 = sshll.u32 %s518, 4
          %s526 = int_to_ptr.vmem [resolvable:$true] %s525
          %528 = dma.hbm_to_vmem [thread:$0]  %s523, 16, %s526, %s516
        $region72: #{tpu_custom_call.1} parent=63 // pred_fallthru
          _
      $region64: #{tpu_custom_call.1} parent=5 // pred_fallthru
        _
      %p529 = scmp.le.s32.totalorder 1, %s32
      %p530 = scmp.lt.s32.totalorder %s32, 3
      %p531 = pnand %p529, %p530
      %p532 = pneg %p531
      // Predicated region
      $region73: #{tpu_custom_call.1} parent=5 // pred_check
        _
      $region74: #{tpu_custom_call.1} parent=5 // pred_check_branch
        %534 = sbr.rel (%p531) target = $region76
      $region75: #{tpu_custom_call.1} parent=5 // pred_region
        %s535 = ssub.s32 %s32, 1
        %s536 = sand.u32 %s57, 1
        %s537 = scalar_lea.sflag [#allocation6], %s536
        %s538 = sand.u32 %s57, 1
        %s539 = smul.addr %s538, 16
        %s540 = scalar_lea.vmem [#allocation5], %s539
        // Predicated region
        $region77: #{tpu_custom_call.1} parent=75 // pred_check
          %p541 = pneg %p70
        $region78: #{tpu_custom_call.1} parent=75 // pred_check_branch
          %543 = sbr.rel (%p541) target = $region80
        $region79: #{tpu_custom_call.1} parent=75 // pred_region
          %544 = dma.done %s537, 256
        $region80: #{tpu_custom_call.1} parent=75 // pred_fallthru
          _
        %s545 = sand.u32 %s37, 1
        %s546 = scalar_lea.sflag [#allocation9], %s545
        %s547 = sand.u32 %s83, 1
        %s548 = scalar_lea.vmem [#allocation8], %s547
        // Predicated region
        $region81: #{tpu_custom_call.1} parent=75 // pred_check
          %p549 = pneg %p96
        $region82: #{tpu_custom_call.1} parent=75 // pred_check_branch
          %551 = sbr.rel (%p549) target = $region84
        $region83: #{tpu_custom_call.1} parent=75 // pred_region
          %552 = dma.done %s546, 16
        $region84: #{tpu_custom_call.1} parent=75 // pred_fallthru
          _
        // Predicated region
        $region85: #{tpu_custom_call.1} parent=75 // pred_check
          %p553 = pneg %p159
        $region86: #{tpu_custom_call.1} parent=75 // pred_check_branch
          %555 = sbr.rel (%p553) target = $region88
        $region87: #{tpu_custom_call.1} parent=75 // pred_region
          %556 = dma.done [#allocation9], 1024
        $region88: #{tpu_custom_call.1} parent=75 // pred_fallthru
          _
        // Predicated region
        $region89: #{tpu_custom_call.1} parent=75 // pred_check
          %p557 = pneg %p180
        $region90: #{tpu_custom_call.1} parent=75 // pred_check_branch
          %559 = sbr.rel (%p557) target = $region92
        $region91: #{tpu_custom_call.1} parent=75 // pred_region
          %560 = dma.done [#allocation12], 1024
        $region92: #{tpu_custom_call.1} parent=75 // pred_fallthru
          _
        // Predicated region
        $region93: #{tpu_custom_call.1} parent=75 // pred_check
          %p561 = pneg %p201
        $region94: #{tpu_custom_call.1} parent=75 // pred_check_branch
          %563 = sbr.rel (%p561) target = $region96
        $region95: #{tpu_custom_call.1} parent=75 // pred_region
          %564 = dma.done [#allocation12], 1024
        $region96: #{tpu_custom_call.1} parent=75 // pred_fallthru
          _
        // Predicated region
        $region97: #{tpu_custom_call.1} parent=75 // pred_check
          %p565 = pneg %p222
        $region98: #{tpu_custom_call.1} parent=75 // pred_check_branch
          %567 = sbr.rel (%p565) target = $region100
        $region99: #{tpu_custom_call.1} parent=75 // pred_region
          %568 = dma.done [#allocation15], 1024
        $region100: #{tpu_custom_call.1} parent=75 // pred_fallthru
          _
        // Predicated region
        $region101: #{tpu_custom_call.1} parent=75 // pred_check
          %p569 = pneg %p285
        $region102: #{tpu_custom_call.1} parent=75 // pred_check_branch
          %571 = sbr.rel (%p569) target = $region104
        $region103: #{tpu_custom_call.1} parent=75 // pred_region
          %572 = dma.done [#allocation15], 2048
        $region104: #{tpu_custom_call.1} parent=75 // pred_fallthru
          _
        // Predicated region
        $region105: #{tpu_custom_call.1} parent=75 // pred_check
          %p573 = pneg %p327
        $region106: #{tpu_custom_call.1} parent=75 // pred_check_branch
          %575 = sbr.rel (%p573) target = $region108
        $region107: #{tpu_custom_call.1} parent=75 // pred_region
          %576 = dma.done [#allocation18], 2048
        $region108: #{tpu_custom_call.1} parent=75 // pred_fallthru
          _
        %s577 = sand.u32 %s57, 1
        %s578 = scalar_lea.sflag [#allocation6], %s577
        %s579 = sand.u32 %s57, 1
        %s580 = smul.addr %s579, 16
        %s581 = scalar_lea.vmem [#allocation5], %s580
        %p582 = pneg %p70
        %p583 = pneg %p67
        %s584 = sand.u32 %s37, 1
        %s585 = scalar_lea.sflag [#allocation9], %s584
        %s586 = sand.u32 %s83, 1
        %s587 = scalar_lea.vmem [#allocation8], %s586
        %p588 = pneg %p96
        %p589 = pneg %p93
        %p590 = pneg %p117
        %p591 = pneg %p114
        %p592 = pneg %p138
        %p593 = pneg %p135
        %p594 = pneg %p159
        %p595 = pneg %p156
        %p596 = pneg %p180
        %p597 = pneg %p177
        %p598 = pneg %p201
        %p599 = pneg %p198
        %p600 = pneg %p222
        %p601 = pneg %p219
        %p602 = pneg %p243
        %p603 = pneg %p240
        %p604 = pneg %p264
        %p605 = pneg %p261
        %p606 = pneg %p285
        %p607 = pneg %p282
        %p608 = pneg %p306
        %p609 = pneg %p303
        %p610 = pneg %p327
        %p611 = pneg %p324
        %p612 = pneg %p348
        %p613 = pneg %p345
        %p614 = pneg %p376
        %p615 = pneg %p373
        %s616 = sand.u32 %s363, 1
        %s617 = scalar_lea.sflag [#allocation7], %s616
        %s618 = sand.u32 %s363, 1
        %s619 = smul.addr %s618, 16
        %s620 = scalar_lea.vmem [#allocation19], %s619
        %s621 = smul.u32 4, %s42
        %p623 = scmp.eq.s32.totalorder %s42, 0
        // Predicated region
        $region109: #{tpu_custom_call.1} parent=75 // pred_check
          %p624 = pneg %p623
        $region110: #{tpu_custom_call.1} parent=75 // pred_check_branch
          %626 = sbr.rel (%p624) target = $region112
        $region111: #{tpu_custom_call.1} parent=75 // pred_region
          %v627 = vld [vmem:[%s540] sm:$0xf]
          %v628 = vld [vmem:[%s540 + $0x4] sm:$0xf]
          %v629 = vld [vmem:[%s540 + $0x8] sm:$0xf]
          %v630 = vld [vmem:[%s540 + $0xc] sm:$0xf]
          %v631 = vunpack.c.l.bf16 %v627
          %v632 = vunpack.c.l.bf16 %v628
          %v633 = vunpack.c.l.bf16 %v629
          %v634 = vunpack.c.l.bf16 %v630
          %635 = vadd.xlane.f32.xlu0 %v631
          %v636 = vpop.xlane.xlu0 %635
          %637 = vadd.xlane.f32.xlu0 %v632
          %v638 = vpop.xlane.xlu0 %637
          %639 = vadd.xlane.f32.xlu0 %v633
          %v640 = vpop.xlane.xlu0 %639
          %641 = vadd.xlane.f32.xlu0 %v634
          %v642 = vpop.xlane.xlu0 %641
          %v643 = vrcp.pop 128.0
          %v644 = vmul.f32 %v636, %v643
          %v645 = vmul.f32 %v638, %v643
          %v646 = vmul.f32 %v640, %v643
          %v647 = vmul.f32 %v642, %v643
          %v648 = vsub.f32 %v631, %v644
          %v649 = vsub.f32 %v632, %v645
          %v650 = vsub.f32 %v633, %v646
          %v651 = vsub.f32 %v634, %v647
          %v652 = vmul.f32 %v648, %v648
          %v653 = vmul.f32 %v649, %v649
          %v654 = vmul.f32 %v650, %v650
          %v655 = vmul.f32 %v651, %v651
          %656 = vadd.xlane.f32.xlu0 %v652
          %v657 = vpop.xlane.xlu0 %656
          %658 = vadd.xlane.f32.xlu0 %v653
          %v659 = vpop.xlane.xlu0 %658
          %660 = vadd.xlane.f32.xlu0 %v654
          %v661 = vpop.xlane.xlu0 %660
          %662 = vadd.xlane.f32.xlu0 %v655
          %v663 = vpop.xlane.xlu0 %662
          %v664 = vmul.f32 %v657, %v643
          %v665 = vmul.f32 %v659, %v643
          %v666 = vmul.f32 %v661, %v643
          %v667 = vmul.f32 %v663, %v643
          %v668 = vadd.f32 %v664, 1e-05
          %v669 = vadd.f32 %v665, 1e-05
          %v670 = vadd.f32 %v666, 1e-05
          %v671 = vadd.f32 %v667, 1e-05
          %v672 = vrsqrt.pop %v668
          %v673 = vrsqrt.pop %v669
          %v674 = vrsqrt.pop %v670
          %v675 = vrsqrt.pop %v671
          %v676 = vmul.f32 %v648, %v672
          %v677 = vmul.f32 %v649, %v673
          %v678 = vmul.f32 %v650, %v674
          %v679 = vmul.f32 %v651, %v675
          %v680 = vld [vmem:[%s2] sm:$0x1]
          %v682 = vlaneseq
          %v683 = vshrl.u32 %v682, 7
          %v684 = vsub.s32 0, %v683
          %v685 = vrot.slane %v680, %v684
          %v687 = vmul.f32 %v676, %v685
          %v688 = vmul.f32 %v677, %v685
          %v689 = vmul.f32 %v678, %v685
          %v690 = vmul.f32 %v679, %v685
          %v691 = vld [vmem:[%s3] sm:$0x1]
          %v693 = vlaneseq
          %v694 = vshrl.u32 %v693, 7
          %v695 = vsub.s32 0, %v694
          %v696 = vrot.slane %v691, %v695
          %v698 = vadd.f32 %v687, %v696
          %v699 = vadd.f32 %v688, %v696
          %v700 = vadd.f32 %v689, %v696
          %v701 = vadd.f32 %v690, %v696
          %v702 = vpack.c.bf16 %v699, %v698
          %v703 = vpack.c.bf16 %v701, %v700
          %v706 = vunpack.c.l.b16 %v702
          %v707 = vunpack.c.h.b16 %v702
          %v708 = vunpack.c.l.b16 %v703
          %v709 = vunpack.c.h.b16 %v703
          %v710 = vpack.c.b16 %v706, %v706
          %v711 = vpack.c.b16 %v707, %v707
          %v712 = vpack.c.b16 %v708, %v708
          %v713 = vpack.c.b16 %v709, %v709
          %718 = vst [vmem:[#allocation2] sm:$0xf] %v710
          %719 = vst [vmem:[#allocation2 + $0x4] sm:$0xf] %v711
          %720 = vst [vmem:[#allocation2 + $0x8] sm:$0xf] %v712
          %721 = vst [vmem:[#allocation2 + $0xc] sm:$0xf] %v713
          %v722 = vld [vmem:[#allocation11] sm:$0xf]
          %v723 = vld [vmem:[#allocation11 + $0x4] sm:$0xf]
          %v724 = vld [vmem:[#allocation11 + $0x8] sm:$0xf]
          %v725 = vld [vmem:[#allocation11 + $0xc] sm:$0xf]
          %v726 = vld [vmem:[#allocation11 + $0x10] sm:$0xf]
          %v727 = vld [vmem:[#allocation11 + $0x14] sm:$0xf]
          %v728 = vld [vmem:[#allocation11 + $0x18] sm:$0xf]
          %v729 = vld [vmem:[#allocation11 + $0x1c] sm:$0xf]
          %v730 = vld [vmem:[#allocation11 + $0x20] sm:$0xf]
          %v731 = vld [vmem:[#allocation11 + $0x24] sm:$0xf]
          %v732 = vld [vmem:[#allocation11 + $0x28] sm:$0xf]
          %v733 = vld [vmem:[#allocation11 + $0x2c] sm:$0xf]
          %v734 = vld [vmem:[#allocation11 + $0x30] sm:$0xf]
          %v735 = vld [vmem:[#allocation11 + $0x34] sm:$0xf]
          %v736 = vld [vmem:[#allocation11 + $0x38] sm:$0xf]
          %v737 = vld [vmem:[#allocation11 + $0x3c] sm:$0xf]
          %v754 = vunpack.c.l.b16 %v722
          %v755 = vunpack.c.l.b16 %v723
          %v756 = vunpack.c.l.b16 %v724
          %v757 = vunpack.c.l.b16 %v725
          %v758 = vunpack.c.l.b16 %v726
          %v759 = vunpack.c.l.b16 %v727
          %v760 = vunpack.c.l.b16 %v728
          %v761 = vunpack.c.l.b16 %v729
          %v762 = vunpack.c.l.b16 %v730
          %v763 = vunpack.c.l.b16 %v731
          %v764 = vunpack.c.l.b16 %v732
          %v765 = vunpack.c.l.b16 %v733
          %v766 = vunpack.c.l.b16 %v734
          %v767 = vunpack.c.l.b16 %v735
          %v768 = vunpack.c.l.b16 %v736
          %v769 = vunpack.c.l.b16 %v737
          %v770 = vpack.c.b16 %v755, %v754
          %v771 = vpack.c.b16 %v757, %v756
          %v772 = vpack.c.b16 %v759, %v758
          %v773 = vpack.c.b16 %v761, %v760
          %v774 = vpack.c.b16 %v763, %v762
          %v775 = vpack.c.b16 %v765, %v764
          %v776 = vpack.c.b16 %v767, %v766
          %v777 = vpack.c.b16 %v769, %v768
          %786 = vmatprep.subr.bf16.mxu0 0
          %787 = vmatpush1.bf16.msra.mxu0 %v777
          %788 = vmatprep.subr.bf16.mxu0 0
          %789 = vmatpush1.bf16.msra.mxu0 %v776
          %790 = vmatprep.subr.bf16.mxu0 0
          %791 = vmatpush1.bf16.msra.mxu0 %v775
          %792 = vmatprep.subr.bf16.mxu0 0
          %793 = vmatpush1.bf16.msra.mxu0 %v774
          %794 = vmatprep.subr.bf16.mxu0 0
          %795 = vmatpush1.bf16.msra.mxu0 %v773
          %796 = vmatprep.subr.bf16.mxu0 0
          %797 = vmatpush1.bf16.msra.mxu0 %v772
          %798 = vmatprep.subr.bf16.mxu0 0
          %799 = vmatpush1.bf16.msra.mxu0 %v771
          %800 = vmatprep.subr.bf16.mxu0 0
          %801 = vmatpush1.bf16.msra.mxu0 %v770
          %802 = vmatprep.subr.bf16.mxu0 0
          %803 = vmatpush2.bf16.msra.mxu0 0
          %804 = vmatprep.subr.bf16.mxu0 0
          %805 = vmatpush2.bf16.msra.mxu0 0
          %806 = vmatprep.subr.bf16.mxu0 0
          %807 = vmatpush2.bf16.msra.mxu0 0
          %808 = vmatprep.subr.bf16.mxu0 0
          %809 = vmatpush2.bf16.msra.mxu0 0
          %810 = vmatprep.subr.bf16.mxu0 0
          %811 = vmatpush2.bf16.msra.mxu0 0
          %812 = vmatprep.subr.bf16.mxu0 0
          %813 = vmatpush2.bf16.msra.mxu0 0
          %814 = vmatprep.subr.bf16.mxu0 0
          %815 = vmatpush2.bf16.msra.mxu0 0
          %816 = vmatprep.subr.bf16.mxu0 0
          %817 = vmatpush2.bf16.msra.mxu0 0
          %818 = vmatprep.mubr.bf16.mxu0 0
          %819 = vmatmul.mubr.bf16.gmra.mxu0 %v702
          %v820 = vpop.f32.mrf.mxu0
          %v821 = vadd.f32 0.0, %v820
          %v822 = vpop.f32.mrf.mxu0
          %v823 = vpop.f32.mrf.mxu0
          %v824 = vadd.f32 0.0, %v823
          %v825 = vpop.f32.mrf.mxu0
          %826 = vmatprep.mubr.bf16.mxu0 0
          %827 = vmatmul.mubr.bf16.gmra.mxu0 %v703
          %v828 = vpop.f32.mrf.mxu0
          %v829 = vadd.f32 0.0, %v828
          %v830 = vpop.f32.mrf.mxu0
          %v831 = vpop.f32.mrf.mxu0
          %v832 = vadd.f32 0.0, %v831
          %v833 = vpop.f32.mrf.mxu0
          %834 = vdwg.mxu0
          %v835 = vpack.c.bf16 %v824, %v821
          %v836 = vpack.c.bf16 %v832, %v829
          %v839 = vunpack.c.l.b16 %v835
          %v840 = vunpack.c.h.b16 %v835
          %v841 = vunpack.c.l.b16 %v836
          %v842 = vunpack.c.h.b16 %v836
          %v843 = vpack.c.b16 %v839, %v839
          %v844 = vpack.c.b16 %v840, %v840
          %v845 = vpack.c.b16 %v841, %v841
          %v846 = vpack.c.b16 %v842, %v842
          %851 = vst [vmem:[#allocation3] sm:$0xf] %v843
          %852 = vst [vmem:[#allocation3 + $0x4] sm:$0xf] %v844
          %853 = vst [vmem:[#allocation3 + $0x8] sm:$0xf] %v845
          %854 = vst [vmem:[#allocation3 + $0xc] sm:$0xf] %v846
          %v855 = vld [vmem:[#allocation13] sm:$0xf]
          %v856 = vld [vmem:[#allocation13 + $0x4] sm:$0xf]
          %v857 = vld [vmem:[#allocation13 + $0x8] sm:$0xf]
          %v858 = vld [vmem:[#allocation13 + $0xc] sm:$0xf]
          %v859 = vld [vmem:[#allocation13 + $0x10] sm:$0xf]
          %v860 = vld [vmem:[#allocation13 + $0x14] sm:$0xf]
          %v861 = vld [vmem:[#allocation13 + $0x18] sm:$0xf]
          %v862 = vld [vmem:[#allocation13 + $0x1c] sm:$0xf]
          %v863 = vld [vmem:[#allocation13 + $0x20] sm:$0xf]
          %v864 = vld [vmem:[#allocation13 + $0x24] sm:$0xf]
          %v865 = vld [vmem:[#allocation13 + $0x28] sm:$0xf]
          %v866 = vld [vmem:[#allocation13 + $0x2c] sm:$0xf]
          %v867 = vld [vmem:[#allocation13 + $0x30] sm:$0xf]
          %v868 = vld [vmem:[#allocation13 + $0x34] sm:$0xf]
          %v869 = vld [vmem:[#allocation13 + $0x38] sm:$0xf]
          %v870 = vld [vmem:[#allocation13 + $0x3c] sm:$0xf]
          %v887 = vunpack.c.l.b16 %v855
          %v888 = vunpack.c.l.b16 %v856
          %v889 = vunpack.c.l.b16 %v857
          %v890 = vunpack.c.l.b16 %v858
          %v891 = vunpack.c.l.b16 %v859
          %v892 = vunpack.c.l.b16 %v860
          %v893 = vunpack.c.l.b16 %v861
          %v894 = vunpack.c.l.b16 %v862
          %v895 = vunpack.c.l.b16 %v863
          %v896 = vunpack.c.l.b16 %v864
          %v897 = vunpack.c.l.b16 %v865
          %v898 = vunpack.c.l.b16 %v866
          %v899 = vunpack.c.l.b16 %v867
          %v900 = vunpack.c.l.b16 %v868
          %v901 = vunpack.c.l.b16 %v869
          %v902 = vunpack.c.l.b16 %v870
          %v903 = vpack.c.b16 %v888, %v887
          %v904 = vpack.c.b16 %v890, %v889
          %v905 = vpack.c.b16 %v892, %v891
          %v906 = vpack.c.b16 %v894, %v893
          %v907 = vpack.c.b16 %v896, %v895
          %v908 = vpack.c.b16 %v898, %v897
          %v909 = vpack.c.b16 %v900, %v899
          %v910 = vpack.c.b16 %v902, %v901
          %919 = vmatprep.subr.bf16.mxu0 0
          %920 = vmatpush1.bf16.msra.mxu0 %v910
          %921 = vmatprep.subr.bf16.mxu0 0
          %922 = vmatpush1.bf16.msra.mxu0 %v909
          %923 = vmatprep.subr.bf16.mxu0 0
          %924 = vmatpush1.bf16.msra.mxu0 %v908
          %925 = vmatprep.subr.bf16.mxu0 0
          %926 = vmatpush1.bf16.msra.mxu0 %v907
          %927 = vmatprep.subr.bf16.mxu0 0
          %928 = vmatpush1.bf16.msra.mxu0 %v906
          %929 = vmatprep.subr.bf16.mxu0 0
          %930 = vmatpush1.bf16.msra.mxu0 %v905
          %931 = vmatprep.subr.bf16.mxu0 0
          %932 = vmatpush1.bf16.msra.mxu0 %v904
          %933 = vmatprep.subr.bf16.mxu0 0
          %934 = vmatpush1.bf16.msra.mxu0 %v903
          %935 = vmatprep.subr.bf16.mxu0 0
          %936 = vmatpush2.bf16.msra.mxu0 0
          %937 = vmatprep.subr.bf16.mxu0 0
          %938 = vmatpush2.bf16.msra.mxu0 0
          %939 = vmatprep.subr.bf16.mxu0 0
          %940 = vmatpush2.bf16.msra.mxu0 0
          %941 = vmatprep.subr.bf16.mxu0 0
          %942 = vmatpush2.bf16.msra.mxu0 0
          %943 = vmatprep.subr.bf16.mxu0 0
          %944 = vmatpush2.bf16.msra.mxu0 0
          %945 = vmatprep.subr.bf16.mxu0 0
          %946 = vmatpush2.bf16.msra.mxu0 0
          %947 = vmatprep.subr.bf16.mxu0 0
          %948 = vmatpush2.bf16.msra.mxu0 0
          %949 = vmatprep.subr.bf16.mxu0 0
          %950 = vmatpush2.bf16.msra.mxu0 0
          %951 = vmatprep.mubr.bf16.mxu0 0
          %952 = vmatmul.mubr.bf16.gmra.mxu0 %v702
          %v953 = vpop.f32.mrf.mxu0
          %v954 = vadd.f32 0.0, %v953
          %v955 = vpop.f32.mrf.mxu0
          %v956 = vpop.f32.mrf.mxu0
          %v957 = vadd.f32 0.0, %v956
          %v958 = vpop.f32.mrf.mxu0
          %959 = vmatprep.mubr.bf16.mxu0 0
          %960 = vmatmul.mubr.bf16.gmra.mxu0 %v703
          %v961 = vpop.f32.mrf.mxu0
          %v962 = vadd.f32 0.0, %v961
          %v963 = vpop.f32.mrf.mxu0
          %v964 = vpop.f32.mrf.mxu0
          %v965 = vadd.f32 0.0, %v964
          %v966 = vpop.f32.mrf.mxu0
          %967 = vdwg.mxu0
          %v968 = vpack.c.bf16 %v957, %v954
          %v969 = vpack.c.bf16 %v965, %v962
          %v972 = vunpack.c.l.b16 %v968
          %v973 = vunpack.c.h.b16 %v968
          %v974 = vunpack.c.l.b16 %v969
          %v975 = vunpack.c.h.b16 %v969
          %v976 = vpack.c.b16 %v972, %v972
          %v977 = vpack.c.b16 %v973, %v973
          %v978 = vpack.c.b16 %v974, %v974
          %v979 = vpack.c.b16 %v975, %v975
          %984 = vst [vmem:[#allocation4] sm:$0xf] %v976
          %985 = vst [vmem:[#allocation4 + $0x4] sm:$0xf] %v977
          %986 = vst [vmem:[#allocation4 + $0x8] sm:$0xf] %v978
          %987 = vst [vmem:[#allocation4 + $0xc] sm:$0xf] %v979
        $region112: #{tpu_custom_call.1} parent=75 // pred_fallthru
          _
        %v988 = vld [vmem:[%s540] sm:$0xf]
        %v989 = vld [vmem:[%s540 + $0x4] sm:$0xf]
        %v990 = vld [vmem:[%s540 + $0x8] sm:$0xf]
        %v991 = vld [vmem:[%s540 + $0xc] sm:$0xf]
        %v992 = vunpack.c.l.bf16 %v988
        %v993 = vunpack.c.l.bf16 %v989
        %v994 = vunpack.c.l.bf16 %v990
        %v995 = vunpack.c.l.bf16 %v991
        %v996 = vld [vmem:[#allocation2] sm:$0xf]
        %v997 = vld [vmem:[#allocation2 + $0x4] sm:$0xf]
        %v998 = vld [vmem:[#allocation2 + $0x8] sm:$0xf]
        %v999 = vld [vmem:[#allocation2 + $0xc] sm:$0xf]
        %v1000 = vld [vmem:[#allocation10] sm:$0xf]
        %v1001 = vld [vmem:[#allocation10 + $0x4] sm:$0xf]
        %v1002 = vld [vmem:[#allocation10 + $0x8] sm:$0xf]
        %v1003 = vld [vmem:[#allocation10 + $0xc] sm:$0xf]
        %v1004 = vld [vmem:[#allocation10 + $0x10] sm:$0xf]
        %v1005 = vld [vmem:[#allocation10 + $0x14] sm:$0xf]
        %v1006 = vld [vmem:[#allocation10 + $0x18] sm:$0xf]
        %v1007 = vld [vmem:[#allocation10 + $0x1c] sm:$0xf]
        %v1008 = vld [vmem:[#allocation10 + $0x20] sm:$0xf]
        %v1009 = vld [vmem:[#allocation10 + $0x24] sm:$0xf]
        %v1010 = vld [vmem:[#allocation10 + $0x28] sm:$0xf]
        %v1011 = vld [vmem:[#allocation10 + $0x2c] sm:$0xf]
        %v1012 = vld [vmem:[#allocation10 + $0x30] sm:$0xf]
        %v1013 = vld [vmem:[#allocation10 + $0x34] sm:$0xf]
        %v1014 = vld [vmem:[#allocation10 + $0x38] sm:$0xf]
        %v1015 = vld [vmem:[#allocation10 + $0x3c] sm:$0xf]
        %v1020 = vunpack.c.l.b16 %v996
        %v1021 = vunpack.c.l.b16 %v997
        %v1022 = vunpack.c.l.b16 %v998
        %v1023 = vunpack.c.l.b16 %v999
        %v1024 = vpack.c.b16 %v1021, %v1020
        %v1025 = vpack.c.b16 %v1023, %v1022
        %v1044 = vunpack.c.l.b16 %v1000
        %v1045 = vunpack.c.l.b16 %v1001
        %v1046 = vunpack.c.l.b16 %v1002
        %v1047 = vunpack.c.l.b16 %v1003
        %v1048 = vunpack.c.l.b16 %v1004
        %v1049 = vunpack.c.l.b16 %v1005
        %v1050 = vunpack.c.l.b16 %v1006
        %v1051 = vunpack.c.l.b16 %v1007
        %v1052 = vunpack.c.l.b16 %v1008
        %v1053 = vunpack.c.l.b16 %v1009
        %v1054 = vunpack.c.l.b16 %v1010
        %v1055 = vunpack.c.l.b16 %v1011
        %v1056 = vunpack.c.l.b16 %v1012
        %v1057 = vunpack.c.l.b16 %v1013
        %v1058 = vunpack.c.l.b16 %v1014
        %v1059 = vunpack.c.l.b16 %v1015
        %v1060 = vpack.c.b16 %v1045, %v1044
        %v1061 = vpack.c.b16 %v1047, %v1046
        %v1062 = vpack.c.b16 %v1049, %v1048
        %v1063 = vpack.c.b16 %v1051, %v1050
        %v1064 = vpack.c.b16 %v1053, %v1052
        %v1065 = vpack.c.b16 %v1055, %v1054
        %v1066 = vpack.c.b16 %v1057, %v1056
        %v1067 = vpack.c.b16 %v1059, %v1058
        %1076 = vmatprep.subr.bf16.mxu0 0
        %1077 = vmatpush1.bf16.msra.mxu0 %v1067
        %1078 = vmatprep.subr.bf16.mxu0 0
        %1079 = vmatpush1.bf16.msra.mxu0 %v1066
        %1080 = vmatprep.subr.bf16.mxu0 0
        %1081 = vmatpush1.bf16.msra.mxu0 %v1065
        %1082 = vmatprep.subr.bf16.mxu0 0
        %1083 = vmatpush1.bf16.msra.mxu0 %v1064
        %1084 = vmatprep.subr.bf16.mxu0 0
        %1085 = vmatpush1.bf16.msra.mxu0 %v1063
        %1086 = vmatprep.subr.bf16.mxu0 0
        %1087 = vmatpush1.bf16.msra.mxu0 %v1062
        %1088 = vmatprep.subr.bf16.mxu0 0
        %1089 = vmatpush1.bf16.msra.mxu0 %v1061
        %1090 = vmatprep.subr.bf16.mxu0 0
        %1091 = vmatpush1.bf16.msra.mxu0 %v1060
        %1092 = vmatprep.subr.bf16.mxu0 0
        %1093 = vmatpush2.bf16.msra.mxu0 0
        %1094 = vmatprep.subr.bf16.mxu0 0
        %1095 = vmatpush2.bf16.msra.mxu0 0
        %1096 = vmatprep.subr.bf16.mxu0 0
        %1097 = vmatpush2.bf16.msra.mxu0 0
        %1098 = vmatprep.subr.bf16.mxu0 0
        %1099 = vmatpush2.bf16.msra.mxu0 0
        %1100 = vmatprep.subr.bf16.mxu0 0
        %1101 = vmatpush2.bf16.msra.mxu0 0
        %1102 = vmatprep.subr.bf16.mxu0 0
        %1103 = vmatpush2.bf16.msra.mxu0 0
        %1104 = vmatprep.subr.bf16.mxu0 0
        %1105 = vmatpush2.bf16.msra.mxu0 0
        %1106 = vmatprep.subr.bf16.mxu0 0
        %1107 = vmatpush2.bf16.msra.mxu0 0
        %1108 = vmatprep.mubr.bf16.mxu0 0
        %1109 = vmatmul.mubr.bf16.gmra.mxu0 %v1024
        %v1110 = vpop.f32.mrf.mxu0
        %v1111 = vadd.f32 0.0, %v1110
        %v1112 = vpop.f32.mrf.mxu0
        %v1113 = vpop.f32.mrf.mxu0
        %v1114 = vadd.f32 0.0, %v1113
        %v1115 = vpop.f32.mrf.mxu0
        %1116 = vmatprep.mubr.bf16.mxu0 0
        %1117 = vmatmul.mubr.bf16.gmra.mxu0 %v1025
        %v1118 = vpop.f32.mrf.mxu0
        %v1119 = vadd.f32 0.0, %v1118
        %v1120 = vpop.f32.mrf.mxu0
        %v1121 = vpop.f32.mrf.mxu0
        %v1122 = vadd.f32 0.0, %v1121
        %v1123 = vpop.f32.mrf.mxu0
        %1124 = vdwg.mxu0
        %v1125 = vmul.f32 %v1111, 0.088388346
        %v1126 = vmul.f32 %v1114, 0.088388346
        %v1127 = vmul.f32 %v1119, 0.088388346
        %v1128 = vmul.f32 %v1122, 0.088388346
        %v1129 = vpack.c.bf16 %v1126, %v1125
        %v1130 = vpack.c.bf16 %v1128, %v1127
        %v1131 = vld [vmem:[#allocation3] sm:$0xf]
        %v1132 = vld [vmem:[#allocation3 + $0x4] sm:$0xf]
        %v1133 = vld [vmem:[#allocation3 + $0x8] sm:$0xf]
        %v1134 = vld [vmem:[#allocation3 + $0xc] sm:$0xf]
        %v1135 = vld [vmem:[%s548] sm:$0x1]
        %v1137 = vlaneseq
        %v1138 = vshrl.u32 %v1137, 7
        %v1139 = vsub.s32 0, %v1138
        %v1140 = vrot.slane %v1135, %v1139
        %v1146 = vunpack.c.l.b16 %v1131
        %v1147 = vunpack.c.l.b16 %v1132
        %v1148 = vunpack.c.l.b16 %v1133
        %v1149 = vunpack.c.l.b16 %v1134
        %v1150 = vpack.c.b16 %v1147, %v1146
        %v1151 = vpack.c.b16 %v1149, %v1148
        %1154 = vmatprep.subr.bf16.mxu0 0
        %1155 = vmatpush1.bf16.xpose.msra.mxu0 0
        %1156 = vmatprep.subr.bf16.mxu0 0
        %1157 = vmatpush1.bf16.xpose.msra.mxu0 0
        %1158 = vmatprep.subr.bf16.mxu0 0
        %1159 = vmatpush1.bf16.xpose.msra.mxu0 0
        %1160 = vmatprep.subr.bf16.mxu0 0
        %1161 = vmatpush1.bf16.xpose.msra.mxu0 0
        %1162 = vmatprep.subr.bf16.mxu0 0
        %1163 = vmatpush1.bf16.xpose.msra.mxu0 0
        %1164 = vmatprep.subr.bf16.mxu0 0
        %1165 = vmatpush1.bf16.xpose.msra.mxu0 0
        %1166 = vmatprep.subr.bf16.mxu0 0
        %1167 = vmatpush1.bf16.xpose.msra.mxu0 %v1151
        %1168 = vmatprep.subr.bf16.mxu0 0
        %1169 = vmatpush1.bf16.xpose.msra.mxu0 %v1150
        %1170 = vmatprep.subr.bf16.mxu0 0
        %1171 = vmatpush2.bf16.xpose.msra.mxu0 0
        %1172 = vmatprep.subr.bf16.mxu0 0
        %1173 = vmatpush2.bf16.xpose.msra.mxu0 0
        %1174 = vmatprep.subr.bf16.mxu0 0
        %1175 = vmatpush2.bf16.xpose.msra.mxu0 0
        %1176 = vmatprep.subr.bf16.mxu0 0
        %1177 = vmatpush2.bf16.xpose.msra.mxu0 0
        %1178 = vmatprep.subr.bf16.mxu0 0
        %1179 = vmatpush2.bf16.xpose.msra.mxu0 0
        %1180 = vmatprep.subr.bf16.mxu0 0
        %1181 = vmatpush2.bf16.xpose.msra.mxu0 0
        %1182 = vmatprep.subr.bf16.mxu0 0
        %1183 = vmatpush2.bf16.xpose.msra.mxu0 0
        %1184 = vmatprep.subr.bf16.mxu0 0
        %1185 = vmatpush2.bf16.xpose.msra.mxu0 0
        %1186 = vmatprep.mubr.bf16.mxu0 0
        %1187 = vmatmul.mubr.bf16.gmra.mxu0 %v1129
        %v1188 = vpop.f32.mrf.mxu0
        %v1189 = vadd.f32 %v1140, %v1188
        %v1190 = vpop.f32.mrf.mxu0
        %v1191 = vpop.f32.mrf.mxu0
        %v1192 = vadd.f32 %v1140, %v1191
        %v1193 = vpop.f32.mrf.mxu0
        %1194 = vmatprep.mubr.bf16.mxu0 0
        %1195 = vmatmul.mubr.bf16.gmra.mxu0 %v1130
        %v1196 = vpop.f32.mrf.mxu0
        %v1197 = vadd.f32 %v1140, %v1196
        %v1198 = vpop.f32.mrf.mxu0
        %v1199 = vpop.f32.mrf.mxu0
        %v1200 = vadd.f32 %v1140, %v1199
        %v1201 = vpop.f32.mrf.mxu0
        %1202 = vdwg.mxu0
        %vm1203 = vcmask 261120
        %v1204 = vsel %vm1203, %v1189, -inf
        %1205 = vmax.xlane.f32.xlu0 %v1204
        %v1206 = vpop.xlane.xlu0 %1205
        %v1207 = vsel %vm1203, %v1192, -inf
        %1208 = vmax.xlane.f32.xlu0 %v1207
        %v1209 = vpop.xlane.xlu0 %1208
        %v1210 = vsel %vm1203, %v1197, -inf
        %1211 = vmax.xlane.f32.xlu0 %v1210
        %v1212 = vpop.xlane.xlu0 %1211
        %v1213 = vsel %vm1203, %v1200, -inf
        %1214 = vmax.xlane.f32.xlu0 %v1213
        %v1215 = vpop.xlane.xlu0 %1214
        %v1216 = vsub.f32 %v1189, %v1206
        %v1217 = vsub.f32 %v1192, %v1209
        %v1218 = vsub.f32 %v1197, %v1212
        %v1219 = vsub.f32 %v1200, %v1215
        %v1220 = vmul.f32 %v1216, 1.442695
        %v1221 = vpow.pop %v1220
        %v1222 = vmul.f32 %v1217, 1.442695
        %v1223 = vpow.pop %v1222
        %v1224 = vmul.f32 %v1218, 1.442695
        %v1225 = vpow.pop %v1224
        %v1226 = vmul.f32 %v1219, 1.442695
        %v1227 = vpow.pop %v1226
        %v1228 = vsel %vm1203, %v1221, 0.0
        %1229 = vadd.xlane.f32.xlu0 %v1228
        %v1230 = vpop.xlane.xlu0 %1229
        %v1231 = vsel %vm1203, %v1223, 0.0
        %1232 = vadd.xlane.f32.xlu0 %v1231
        %v1233 = vpop.xlane.xlu0 %1232
        %v1234 = vsel %vm1203, %v1225, 0.0
        %1235 = vadd.xlane.f32.xlu0 %v1234
        %v1236 = vpop.xlane.xlu0 %1235
        %v1237 = vsel %vm1203, %v1227, 0.0
        %1238 = vadd.xlane.f32.xlu0 %v1237
        %v1239 = vpop.xlane.xlu0 %1238
        %v1240 = vpack.c.bf16 %v1223, %v1221
        %v1241 = vpack.c.bf16 %v1227, %v1225
        %v1242 = vld [vmem:[#allocation4] sm:$0xf]
        %v1243 = vld [vmem:[#allocation4 + $0x4] sm:$0xf]
        %v1244 = vld [vmem:[#allocation4 + $0x8] sm:$0xf]
        %v1245 = vld [vmem:[#allocation4 + $0xc] sm:$0xf]
        %v1250 = vunpack.c.l.b16 %v1242
        %v1251 = vunpack.c.l.b16 %v1243
        %v1252 = vunpack.c.l.b16 %v1244
        %v1253 = vunpack.c.l.b16 %v1245
        %v1254 = vpack.c.b16 %v1251, %v1250
        %v1255 = vpack.c.b16 %v1253, %v1252
        %v1259 = vsel %vm1203, %v1240, 0
        %v1262 = vsel %vm1203, %v1241, 0
        %1264 = vmatprep.subr.bf16.mxu0 0
        %1265 = vmatpush1.bf16.msra.mxu0 0
        %1266 = vmatprep.subr.bf16.mxu0 0
        %1267 = vmatpush1.bf16.msra.mxu0 0
        %1268 = vmatprep.subr.bf16.mxu0 0
        %1269 = vmatpush1.bf16.msra.mxu0 0
        %1270 = vmatprep.subr.bf16.mxu0 0
        %1271 = vmatpush1.bf16.msra.mxu0 0
        %1272 = vmatprep.subr.bf16.mxu0 0
        %1273 = vmatpush1.bf16.msra.mxu0 0
        %1274 = vmatprep.subr.bf16.mxu0 0
        %1275 = vmatpush1.bf16.msra.mxu0 0
        %1276 = vmatprep.subr.bf16.mxu0 0
        %1277 = vmatpush1.bf16.msra.mxu0 %v1255
        %1278 = vmatprep.subr.bf16.mxu0 0
        %1279 = vmatpush1.bf16.msra.mxu0 %v1254
        %1280 = vmatprep.subr.bf16.mxu0 0
        %1281 = vmatpush2.bf16.msra.mxu0 0
        %1282 = vmatprep.subr.bf16.mxu0 0
        %1283 = vmatpush2.bf16.msra.mxu0 0
        %1284 = vmatprep.subr.bf16.mxu0 0
        %1285 = vmatpush2.bf16.msra.mxu0 0
        %1286 = vmatprep.subr.bf16.mxu0 0
        %1287 = vmatpush2.bf16.msra.mxu0 0
        %1288 = vmatprep.subr.bf16.mxu0 0
        %1289 = vmatpush2.bf16.msra.mxu0 0
        %1290 = vmatprep.subr.bf16.mxu0 0
        %1291 = vmatpush2.bf16.msra.mxu0 0
        %1292 = vmatprep.subr.bf16.mxu0 0
        %1293 = vmatpush2.bf16.msra.mxu0 0
        %1294 = vmatprep.subr.bf16.mxu0 0
        %1295 = vmatpush2.bf16.msra.mxu0 0
        %1296 = vmatprep.mubr.bf16.mxu0 0
        %1297 = vmatmul.mubr.bf16.gmra.mxu0 %v1259
        %v1298 = vpop.f32.mrf.mxu0
        %v1299 = vadd.f32 0.0, %v1298
        %v1300 = vpop.f32.mrf.mxu0
        %v1301 = vpop.f32.mrf.mxu0
        %v1302 = vadd.f32 0.0, %v1301
        %v1303 = vpop.f32.mrf.mxu0
        %1304 = vmatprep.mubr.bf16.mxu0 0
        %1305 = vmatmul.mubr.bf16.gmra.mxu0 %v1262
        %v1306 = vpop.f32.mrf.mxu0
        %v1307 = vadd.f32 0.0, %v1306
        %v1308 = vpop.f32.mrf.mxu0
        %v1309 = vpop.f32.mrf.mxu0
        %v1310 = vadd.f32 0.0, %v1309
        %v1311 = vpop.f32.mrf.mxu0
        %1312 = vdwg.mxu0
        %v1313 = vrcp.pop %v1230
        %v1314 = vrcp.pop %v1233
        %v1315 = vrcp.pop %v1236
        %v1316 = vrcp.pop %v1239
        %v1317 = vmul.f32 %v1299, %v1313
        %v1318 = vmul.f32 %v1302, %v1314
        %v1319 = vmul.f32 %v1307, %v1315
        %v1320 = vmul.f32 %v1310, %v1316
        %v1321 = vpack.c.bf16 %v1318, %v1317
        %v1322 = vpack.c.bf16 %v1320, %v1319
        %v1323 = vld [vmem:[#allocation14] sm:$0xf]
        %v1324 = vld [vmem:[#allocation14 + $0x4] sm:$0xf]
        %v1325 = vld [vmem:[#allocation14 + $0x8] sm:$0xf]
        %v1326 = vld [vmem:[#allocation14 + $0xc] sm:$0xf]
        %v1327 = vld [vmem:[#allocation14 + $0x10] sm:$0xf]
        %v1328 = vld [vmem:[#allocation14 + $0x14] sm:$0xf]
        %v1329 = vld [vmem:[#allocation14 + $0x18] sm:$0xf]
        %v1330 = vld [vmem:[#allocation14 + $0x1c] sm:$0xf]
        %v1331 = vld [vmem:[#allocation14 + $0x20] sm:$0xf]
        %v1332 = vld [vmem:[#allocation14 + $0x24] sm:$0xf]
        %v1333 = vld [vmem:[#allocation14 + $0x28] sm:$0xf]
        %v1334 = vld [vmem:[#allocation14 + $0x2c] sm:$0xf]
        %v1335 = vld [vmem:[#allocation14 + $0x30] sm:$0xf]
        %v1336 = vld [vmem:[#allocation14 + $0x34] sm:$0xf]
        %v1337 = vld [vmem:[#allocation14 + $0x38] sm:$0xf]
        %v1338 = vld [vmem:[#allocation14 + $0x3c] sm:$0xf]
        %v1355 = vunpack.c.l.b16 %v1323
        %v1356 = vunpack.c.l.b16 %v1324
        %v1357 = vunpack.c.l.b16 %v1325
        %v1358 = vunpack.c.l.b16 %v1326
        %v1359 = vunpack.c.l.b16 %v1327
        %v1360 = vunpack.c.l.b16 %v1328
        %v1361 = vunpack.c.l.b16 %v1329
        %v1362 = vunpack.c.l.b16 %v1330
        %v1363 = vunpack.c.l.b16 %v1331
        %v1364 = vunpack.c.l.b16 %v1332
        %v1365 = vunpack.c.l.b16 %v1333
        %v1366 = vunpack.c.l.b16 %v1334
        %v1367 = vunpack.c.l.b16 %v1335
        %v1368 = vunpack.c.l.b16 %v1336
        %v1369 = vunpack.c.l.b16 %v1337
        %v1370 = vunpack.c.l.b16 %v1338
        %v1371 = vpack.c.b16 %v1356, %v1355
        %v1372 = vpack.c.b16 %v1358, %v1357
        %v1373 = vpack.c.b16 %v1360, %v1359
        %v1374 = vpack.c.b16 %v1362, %v1361
        %v1375 = vpack.c.b16 %v1364, %v1363
        %v1376 = vpack.c.b16 %v1366, %v1365
        %v1377 = vpack.c.b16 %v1368, %v1367
        %v1378 = vpack.c.b16 %v1370, %v1369
        %1387 = vmatprep.subr.bf16.mxu0 0
        %1388 = vmatpush1.bf16.msra.mxu0 %v1378
        %1389 = vmatprep.subr.bf16.mxu0 0
        %1390 = vmatpush1.bf16.msra.mxu0 %v1377
        %1391 = vmatprep.subr.bf16.mxu0 0
        %1392 = vmatpush1.bf16.msra.mxu0 %v1376
        %1393 = vmatprep.subr.bf16.mxu0 0
        %1394 = vmatpush1.bf16.msra.mxu0 %v1375
        %1395 = vmatprep.subr.bf16.mxu0 0
        %1396 = vmatpush1.bf16.msra.mxu0 %v1374
        %1397 = vmatprep.subr.bf16.mxu0 0
        %1398 = vmatpush1.bf16.msra.mxu0 %v1373
        %1399 = vmatprep.subr.bf16.mxu0 0
        %1400 = vmatpush1.bf16.msra.mxu0 %v1372
        %1401 = vmatprep.subr.bf16.mxu0 0
        %1402 = vmatpush1.bf16.msra.mxu0 %v1371
        %1403 = vmatprep.subr.bf16.mxu0 0
        %1404 = vmatpush2.bf16.msra.mxu0 0
        %1405 = vmatprep.subr.bf16.mxu0 0
        %1406 = vmatpush2.bf16.msra.mxu0 0
        %1407 = vmatprep.subr.bf16.mxu0 0
        %1408 = vmatpush2.bf16.msra.mxu0 0
        %1409 = vmatprep.subr.bf16.mxu0 0
        %1410 = vmatpush2.bf16.msra.mxu0 0
        %1411 = vmatprep.subr.bf16.mxu0 0
        %1412 = vmatpush2.bf16.msra.mxu0 0
        %1413 = vmatprep.subr.bf16.mxu0 0
        %1414 = vmatpush2.bf16.msra.mxu0 0
        %1415 = vmatprep.subr.bf16.mxu0 0
        %1416 = vmatpush2.bf16.msra.mxu0 0
        %1417 = vmatprep.subr.bf16.mxu0 0
        %1418 = vmatpush2.bf16.msra.mxu0 0
        %1419 = vmatprep.mubr.bf16.mxu0 0
        %1420 = vmatmul.mubr.bf16.gmra.mxu0 %v1321
        %v1421 = vpop.f32.mrf.mxu0
        %v1422 = vadd.f32 0.0, %v1421
        %v1423 = vpop.f32.mrf.mxu0
        %v1424 = vpop.f32.mrf.mxu0
        %v1425 = vadd.f32 0.0, %v1424
        %v1426 = vpop.f32.mrf.mxu0
        %1427 = vmatprep.mubr.bf16.mxu0 0
        %1428 = vmatmul.mubr.bf16.gmra.mxu0 %v1322
        %v1429 = vpop.f32.mrf.mxu0
        %v1430 = vadd.f32 0.0, %v1429
        %v1431 = vpop.f32.mrf.mxu0
        %v1432 = vpop.f32.mrf.mxu0
        %v1433 = vadd.f32 0.0, %v1432
        %v1434 = vpop.f32.mrf.mxu0
        %1435 = vdwg.mxu0
        %v1436 = vadd.f32 %v992, %v1422
        %v1437 = vadd.f32 %v993, %v1425
        %v1438 = vadd.f32 %v994, %v1430
        %v1439 = vadd.f32 %v995, %v1433
        %1440 = vadd.xlane.f32.xlu0 %v1436
        %v1441 = vpop.xlane.xlu0 %1440
        %1442 = vadd.xlane.f32.xlu0 %v1437
        %v1443 = vpop.xlane.xlu0 %1442
        %1444 = vadd.xlane.f32.xlu0 %v1438
        %v1445 = vpop.xlane.xlu0 %1444
        %1446 = vadd.xlane.f32.xlu0 %v1439
        %v1447 = vpop.xlane.xlu0 %1446
        %v1448 = vrcp.pop 128.0
        %v1449 = vmul.f32 %v1441, %v1448
        %v1450 = vmul.f32 %v1443, %v1448
        %v1451 = vmul.f32 %v1445, %v1448
        %v1452 = vmul.f32 %v1447, %v1448
        %v1453 = vsub.f32 %v1436, %v1449
        %v1454 = vsub.f32 %v1437, %v1450
        %v1455 = vsub.f32 %v1438, %v1451
        %v1456 = vsub.f32 %v1439, %v1452
        %v1457 = vmul.f32 %v1453, %v1453
        %v1458 = vmul.f32 %v1454, %v1454
        %v1459 = vmul.f32 %v1455, %v1455
        %v1460 = vmul.f32 %v1456, %v1456
        %1461 = vadd.xlane.f32.xlu0 %v1457
        %v1462 = vpop.xlane.xlu0 %1461
        %1463 = vadd.xlane.f32.xlu0 %v1458
        %v1464 = vpop.xlane.xlu0 %1463
        %1465 = vadd.xlane.f32.xlu0 %v1459
        %v1466 = vpop.xlane.xlu0 %1465
        %1467 = vadd.xlane.f32.xlu0 %v1460
        %v1468 = vpop.xlane.xlu0 %1467
        %v1469 = vmul.f32 %v1462, %v1448
        %v1470 = vmul.f32 %v1464, %v1448
        %v1471 = vmul.f32 %v1466, %v1448
        %v1472 = vmul.f32 %v1468, %v1448
        %v1473 = vadd.f32 %v1469, 1e-05
        %v1474 = vadd.f32 %v1470, 1e-05
        %v1475 = vadd.f32 %v1471, 1e-05
        %v1476 = vadd.f32 %v1472, 1e-05
        %v1477 = vrsqrt.pop %v1473
        %v1478 = vrsqrt.pop %v1474
        %v1479 = vrsqrt.pop %v1475
        %v1480 = vrsqrt.pop %v1476
        %v1481 = vmul.f32 %v1453, %v1477
        %v1482 = vmul.f32 %v1454, %v1478
        %v1483 = vmul.f32 %v1455, %v1479
        %v1484 = vmul.f32 %v1456, %v1480
        %v1485 = vld [vmem:[%s8] sm:$0x1]
        %v1487 = vlaneseq
        %v1488 = vshrl.u32 %v1487, 7
        %v1489 = vsub.s32 0, %v1488
        %v1490 = vrot.slane %v1485, %v1489
        %v1492 = vmul.f32 %v1481, %v1490
        %v1493 = vmul.f32 %v1482, %v1490
        %v1494 = vmul.f32 %v1483, %v1490
        %v1495 = vmul.f32 %v1484, %v1490
        %v1496 = vld [vmem:[%s9] sm:$0x1]
        %v1498 = vlaneseq
        %v1499 = vshrl.u32 %v1498, 7
        %v1500 = vsub.s32 0, %v1499
        %v1501 = vrot.slane %v1496, %v1500
        %v1503 = vadd.f32 %v1492, %v1501
        %v1504 = vadd.f32 %v1493, %v1501
        %v1505 = vadd.f32 %v1494, %v1501
        %v1506 = vadd.f32 %v1495, %v1501
        %v1507 = vpack.c.bf16 %v1504, %v1503
        %v1508 = vpack.c.bf16 %v1506, %v1505
        %v1509 = vld [vmem:[#allocation16] sm:$0xff]
        %v1510 = vld [vmem:[#allocation16 + $0x8] sm:$0xff]
        %v1511 = vld [vmem:[#allocation16 + $0x10] sm:$0xff]
        %v1512 = vld [vmem:[#allocation16 + $0x18] sm:$0xff]
        %v1513 = vld [vmem:[#allocation16 + $0x20] sm:$0xff]
        %v1514 = vld [vmem:[#allocation16 + $0x28] sm:$0xff]
        %v1515 = vld [vmem:[#allocation16 + $0x30] sm:$0xff]
        %v1516 = vld [vmem:[#allocation16 + $0x38] sm:$0xff]
        %v1517 = vld [vmem:[#allocation16 + $0x40] sm:$0xff]
        %v1518 = vld [vmem:[#allocation16 + $0x48] sm:$0xff]
        %v1519 = vld [vmem:[#allocation16 + $0x50] sm:$0xff]
        %v1520 = vld [vmem:[#allocation16 + $0x58] sm:$0xff]
        %v1521 = vld [vmem:[#allocation16 + $0x60] sm:$0xff]
        %v1522 = vld [vmem:[#allocation16 + $0x68] sm:$0xff]
        %v1523 = vld [vmem:[#allocation16 + $0x70] sm:$0xff]
        %v1524 = vld [vmem:[#allocation16 + $0x78] sm:$0xff]
        %v1525 = vld [vmem:[%s11] sm:$0x3]
        %v1527 = vlaneseq
        %v1528 = vshrl.u32 %v1527, 7
        %v1529 = vsub.s32 0, %v1528
        %v1530 = vrot.slane %v1525, %v1529
        %v1531 = vlaneseq
        %v1532 = vshrl.u32 %v1531, 7
        %v1533 = vsub.s32 1, %v1532
        %v1534 = vrot.slane %v1525, %v1533
        %v1553 = vunpack.c.l.b16 %v1509
        %v1554 = vunpack.c.h.b16 %v1509
        %v1555 = vunpack.c.l.b16 %v1510
        %v1556 = vunpack.c.h.b16 %v1510
        %v1557 = vunpack.c.l.b16 %v1511
        %v1558 = vunpack.c.h.b16 %v1511
        %v1559 = vunpack.c.l.b16 %v1512
        %v1560 = vunpack.c.h.b16 %v1512
        %v1561 = vunpack.c.l.b16 %v1513
        %v1562 = vunpack.c.h.b16 %v1513
        %v1563 = vunpack.c.l.b16 %v1514
        %v1564 = vunpack.c.h.b16 %v1514
        %v1565 = vunpack.c.l.b16 %v1515
        %v1566 = vunpack.c.h.b16 %v1515
        %v1567 = vunpack.c.l.b16 %v1516
        %v1568 = vunpack.c.h.b16 %v1516
        %v1569 = vunpack.c.l.b16 %v1517
        %v1570 = vunpack.c.h.b16 %v1517
        %v1571 = vunpack.c.l.b16 %v1518
        %v1572 = vunpack.c.h.b16 %v1518
        %v1573 = vunpack.c.l.b16 %v1519
        %v1574 = vunpack.c.h.b16 %v1519
        %v1575 = vunpack.c.l.b16 %v1520
        %v1576 = vunpack.c.h.b16 %v1520
        %v1577 = vunpack.c.l.b16 %v1521
        %v1578 = vunpack.c.h.b16 %v1521
        %v1579 = vunpack.c.l.b16 %v1522
        %v1580 = vunpack.c.h.b16 %v1522
        %v1581 = vunpack.c.l.b16 %v1523
        %v1582 = vunpack.c.h.b16 %v1523
        %v1583 = vunpack.c.l.b16 %v1524
        %v1584 = vunpack.c.h.b16 %v1524
        %v1585 = vpack.c.b16 %v1555, %v1553
        %v1586 = vpack.c.b16 %v1556, %v1554
        %v1587 = vpack.c.b16 %v1559, %v1557
        %v1588 = vpack.c.b16 %v1560, %v1558
        %v1589 = vpack.c.b16 %v1563, %v1561
        %v1590 = vpack.c.b16 %v1564, %v1562
        %v1591 = vpack.c.b16 %v1567, %v1565
        %v1592 = vpack.c.b16 %v1568, %v1566
        %v1593 = vpack.c.b16 %v1571, %v1569
        %v1594 = vpack.c.b16 %v1572, %v1570
        %v1595 = vpack.c.b16 %v1575, %v1573
        %v1596 = vpack.c.b16 %v1576, %v1574
        %v1597 = vpack.c.b16 %v1579, %v1577
        %v1598 = vpack.c.b16 %v1580, %v1578
        %v1599 = vpack.c.b16 %v1583, %v1581
        %v1600 = vpack.c.b16 %v1584, %v1582
        %1617 = vmatprep.subr.bf16.mxu0 %v1600
        %1618 = vmatpush1.bf16.msra.mxu0 %v1599
        %1619 = vmatprep.subr.bf16.mxu0 %v1598
        %1620 = vmatpush1.bf16.msra.mxu0 %v1597
        %1621 = vmatprep.subr.bf16.mxu0 %v1596
        %1622 = vmatpush1.bf16.msra.mxu0 %v1595
        %1623 = vmatprep.subr.bf16.mxu0 %v1594
        %1624 = vmatpush1.bf16.msra.mxu0 %v1593
        %1625 = vmatprep.subr.bf16.mxu0 %v1592
        %1626 = vmatpush1.bf16.msra.mxu0 %v1591
        %1627 = vmatprep.subr.bf16.mxu0 %v1590
        %1628 = vmatpush1.bf16.msra.mxu0 %v1589
        %1629 = vmatprep.subr.bf16.mxu0 %v1588
        %1630 = vmatpush1.bf16.msra.mxu0 %v1587
        %1631 = vmatprep.subr.bf16.mxu0 %v1586
        %1632 = vmatpush1.bf16.msra.mxu0 %v1585
        %1633 = vmatprep.subr.bf16.mxu0 0
        %1634 = vmatpush2.bf16.msra.mxu0 0
        %1635 = vmatprep.subr.bf16.mxu0 0
        %1636 = vmatpush2.bf16.msra.mxu0 0
        %1637 = vmatprep.subr.bf16.mxu0 0
        %1638 = vmatpush2.bf16.msra.mxu0 0
        %1639 = vmatprep.subr.bf16.mxu0 0
        %1640 = vmatpush2.bf16.msra.mxu0 0
        %1641 = vmatprep.subr.bf16.mxu0 0
        %1642 = vmatpush2.bf16.msra.mxu0 0
        %1643 = vmatprep.subr.bf16.mxu0 0
        %1644 = vmatpush2.bf16.msra.mxu0 0
        %1645 = vmatprep.subr.bf16.mxu0 0
        %1646 = vmatpush2.bf16.msra.mxu0 0
        %1647 = vmatprep.subr.bf16.mxu0 0
        %1648 = vmatpush2.bf16.msra.mxu0 0
        %1649 = vmatprep.mubr.bf16.mxu0 0
        %1650 = vmatmul.mubr.bf16.gmra.mxu0 %v1507
        %v1651 = vpop.f32.mrf.mxu0
        %v1652 = vadd.f32 %v1530, %v1651
        %v1653 = vpop.f32.mrf.mxu0
        %v1654 = vadd.f32 %v1534, %v1653
        %v1655 = vpop.f32.mrf.mxu0
        %v1656 = vadd.f32 %v1530, %v1655
        %v1657 = vpop.f32.mrf.mxu0
        %v1658 = vadd.f32 %v1534, %v1657
        %1659 = vmatprep.mubr.bf16.mxu0 0
        %1660 = vmatmul.mubr.bf16.gmra.mxu0 %v1508
        %v1661 = vpop.f32.mrf.mxu0
        %v1662 = vadd.f32 %v1530, %v1661
        %v1663 = vpop.f32.mrf.mxu0
        %v1664 = vadd.f32 %v1534, %v1663
        %v1665 = vpop.f32.mrf.mxu0
        %v1666 = vadd.f32 %v1530, %v1665
        %v1667 = vpop.f32.mrf.mxu0
        %v1668 = vadd.f32 %v1534, %v1667
        %1669 = vdwg.mxu0
        %v1670 = vmul.f32 %v1652, %v1652
        %v1671 = vmul.f32 %v1654, %v1654
        %v1672 = vmul.f32 %v1656, %v1656
        %v1673 = vmul.f32 %v1658, %v1658
        %v1674 = vmul.f32 %v1662, %v1662
        %v1675 = vmul.f32 %v1664, %v1664
        %v1676 = vmul.f32 %v1666, %v1666
        %v1677 = vmul.f32 %v1668, %v1668
        %v1678 = vmul.f32 %v1652, %v1670
        %v1679 = vmul.f32 %v1654, %v1671
        %v1680 = vmul.f32 %v1656, %v1672
        %v1681 = vmul.f32 %v1658, %v1673
        %v1682 = vmul.f32 %v1662, %v1674
        %v1683 = vmul.f32 %v1664, %v1675
        %v1684 = vmul.f32 %v1666, %v1676
        %v1685 = vmul.f32 %v1668, %v1677
        %v1686 = vmul.f32 %v1678, 0.044715
        %v1687 = vmul.f32 %v1679, 0.044715
        %v1688 = vmul.f32 %v1680, 0.044715
        %v1689 = vmul.f32 %v1681, 0.044715
        %v1690 = vmul.f32 %v1682, 0.044715
        %v1691 = vmul.f32 %v1683, 0.044715
        %v1692 = vmul.f32 %v1684, 0.044715
        %v1693 = vmul.f32 %v1685, 0.044715
        %v1694 = vadd.f32 %v1652, %v1686
        %v1695 = vadd.f32 %v1654, %v1687
        %v1696 = vadd.f32 %v1656, %v1688
        %v1697 = vadd.f32 %v1658, %v1689
        %v1698 = vadd.f32 %v1662, %v1690
        %v1699 = vadd.f32 %v1664, %v1691
        %v1700 = vadd.f32 %v1666, %v1692
        %v1701 = vadd.f32 %v1668, %v1693
        %v1702 = vmul.f32 %v1694, 0.7978846
        %v1703 = vmul.f32 %v1695, 0.7978846
        %v1704 = vmul.f32 %v1696, 0.7978846
        %v1705 = vmul.f32 %v1697, 0.7978846
        %v1706 = vmul.f32 %v1698, 0.7978846
        %v1707 = vmul.f32 %v1699, 0.7978846
        %v1708 = vmul.f32 %v1700, 0.7978846
        %v1709 = vmul.f32 %v1701, 0.7978846
        %v1710 = vtanh.pop %v1702
        %v1711 = vtanh.pop %v1703
        %v1712 = vtanh.pop %v1704
        %v1713 = vtanh.pop %v1705
        %v1714 = vtanh.pop %v1706
        %v1715 = vtanh.pop %v1707
        %v1716 = vtanh.pop %v1708
        %v1717 = vtanh.pop %v1709
        %v1718 = vadd.f32 %v1710, 1.0
        %v1719 = vadd.f32 %v1711, 1.0
        %v1720 = vadd.f32 %v1712, 1.0
        %v1721 = vadd.f32 %v1713, 1.0
        %v1722 = vadd.f32 %v1714, 1.0
        %v1723 = vadd.f32 %v1715, 1.0
        %v1724 = vadd.f32 %v1716, 1.0
        %v1725 = vadd.f32 %v1717, 1.0
        %v1726 = vmul.f32 %v1718, 0.5
        %v1727 = vmul.f32 %v1719, 0.5
        %v1728 = vmul.f32 %v1720, 0.5
        %v1729 = vmul.f32 %v1721, 0.5
        %v1730 = vmul.f32 %v1722, 0.5
        %v1731 = vmul.f32 %v1723, 0.5
        %v1732 = vmul.f32 %v1724, 0.5
        %v1733 = vmul.f32 %v1725, 0.5
        %v1734 = vmul.f32 %v1652, %v1726
        %v1735 = vmul.f32 %v1654, %v1727
        %v1736 = vmul.f32 %v1656, %v1728
        %v1737 = vmul.f32 %v1658, %v1729
        %v1738 = vmul.f32 %v1662, %v1730
        %v1739 = vmul.f32 %v1664, %v1731
        %v1740 = vmul.f32 %v1666, %v1732
        %v1741 = vmul.f32 %v1668, %v1733
        %v1742 = vpack.c.bf16 %v1736, %v1734
        %v1743 = vpack.c.bf16 %v1737, %v1735
        %v1744 = vpack.c.bf16 %v1740, %v1738
        %v1745 = vpack.c.bf16 %v1741, %v1739
        %v1746 = vld [vmem:[#allocation17] sm:$0xf]
        %v1747 = vld [vmem:[#allocation17 + $0x4] sm:$0xf]
        %v1748 = vld [vmem:[#allocation17 + $0x8] sm:$0xf]
        %v1749 = vld [vmem:[#allocation17 + $0xc] sm:$0xf]
        %v1750 = vld [vmem:[#allocation17 + $0x10] sm:$0xf]
        %v1751 = vld [vmem:[#allocation17 + $0x14] sm:$0xf]
        %v1752 = vld [vmem:[#allocation17 + $0x18] sm:$0xf]
        %v1753 = vld [vmem:[#allocation17 + $0x1c] sm:$0xf]
        %v1754 = vld [vmem:[#allocation17 + $0x20] sm:$0xf]
        %v1755 = vld [vmem:[#allocation17 + $0x24] sm:$0xf]
        %v1756 = vld [vmem:[#allocation17 + $0x28] sm:$0xf]
        %v1757 = vld [vmem:[#allocation17 + $0x2c] sm:$0xf]
        %v1758 = vld [vmem:[#allocation17 + $0x30] sm:$0xf]
        %v1759 = vld [vmem:[#allocation17 + $0x34] sm:$0xf]
        %v1760 = vld [vmem:[#allocation17 + $0x38] sm:$0xf]
        %v1761 = vld [vmem:[#allocation17 + $0x3c] sm:$0xf]
        %v1762 = vld [vmem:[#allocation17 + $0x40] sm:$0xf]
        %v1763 = vld [vmem:[#allocation17 + $0x44] sm:$0xf]
        %v1764 = vld [vmem:[#allocation17 + $0x48] sm:$0xf]
        %v1765 = vld [vmem:[#allocation17 + $0x4c] sm:$0xf]
        %v1766 = vld [vmem:[#allocation17 + $0x50] sm:$0xf]
        %v1767 = vld [vmem:[#allocation17 + $0x54] sm:$0xf]
        %v1768 = vld [vmem:[#allocation17 + $0x58] sm:$0xf]
        %v1769 = vld [vmem:[#allocation17 + $0x5c] sm:$0xf]
        %v1770 = vld [vmem:[#allocation17 + $0x60] sm:$0xf]
        %v1771 = vld [vmem:[#allocation17 + $0x64] sm:$0xf]
        %v1772 = vld [vmem:[#allocation17 + $0x68] sm:$0xf]
        %v1773 = vld [vmem:[#allocation17 + $0x6c] sm:$0xf]
        %v1774 = vld [vmem:[#allocation17 + $0x70] sm:$0xf]
        %v1775 = vld [vmem:[#allocation17 + $0x74] sm:$0xf]
        %v1776 = vld [vmem:[#allocation17 + $0x78] sm:$0xf]
        %v1777 = vld [vmem:[#allocation17 + $0x7c] sm:$0xf]
        %v1778 = vld [vmem:[%s13] sm:$0x1]
        %v1780 = vlaneseq
        %v1781 = vshrl.u32 %v1780, 7
        %v1782 = vsub.s32 0, %v1781
        %v1783 = vrot.slane %v1778, %v1782
        %v1817 = vunpack.c.l.b16 %v1746
        %v1818 = vunpack.c.l.b16 %v1747
        %v1819 = vunpack.c.l.b16 %v1748
        %v1820 = vunpack.c.l.b16 %v1749
        %v1821 = vunpack.c.l.b16 %v1750
        %v1822 = vunpack.c.l.b16 %v1751
        %v1823 = vunpack.c.l.b16 %v1752
        %v1824 = vunpack.c.l.b16 %v1753
        %v1825 = vunpack.c.l.b16 %v1754
        %v1826 = vunpack.c.l.b16 %v1755
        %v1827 = vunpack.c.l.b16 %v1756
        %v1828 = vunpack.c.l.b16 %v1757
        %v1829 = vunpack.c.l.b16 %v1758
        %v1830 = vunpack.c.l.b16 %v1759
        %v1831 = vunpack.c.l.b16 %v1760
        %v1832 = vunpack.c.l.b16 %v1761
        %v1833 = vunpack.c.l.b16 %v1762
        %v1834 = vunpack.c.l.b16 %v1763
        %v1835 = vunpack.c.l.b16 %v1764
        %v1836 = vunpack.c.l.b16 %v1765
        %v1837 = vunpack.c.l.b16 %v1766
        %v1838 = vunpack.c.l.b16 %v1767
        %v1839 = vunpack.c.l.b16 %v1768
        %v1840 = vunpack.c.l.b16 %v1769
        %v1841 = vunpack.c.l.b16 %v1770
        %v1842 = vunpack.c.l.b16 %v1771
        %v1843 = vunpack.c.l.b16 %v1772
        %v1844 = vunpack.c.l.b16 %v1773
        %v1845 = vunpack.c.l.b16 %v1774
        %v1846 = vunpack.c.l.b16 %v1775
        %v1847 = vunpack.c.l.b16 %v1776
        %v1848 = vunpack.c.l.b16 %v1777
        %v1849 = vpack.c.b16 %v1818, %v1817
        %v1850 = vpack.c.b16 %v1820, %v1819
        %v1851 = vpack.c.b16 %v1822, %v1821
        %v1852 = vpack.c.b16 %v1824, %v1823
        %v1853 = vpack.c.b16 %v1826, %v1825
        %v1854 = vpack.c.b16 %v1828, %v1827
        %v1855 = vpack.c.b16 %v1830, %v1829
        %v1856 = vpack.c.b16 %v1832, %v1831
        %v1857 = vpack.c.b16 %v1834, %v1833
        %v1858 = vpack.c.b16 %v1836, %v1835
        %v1859 = vpack.c.b16 %v1838, %v1837
        %v1860 = vpack.c.b16 %v1840, %v1839
        %v1861 = vpack.c.b16 %v1842, %v1841
        %v1862 = vpack.c.b16 %v1844, %v1843
        %v1863 = vpack.c.b16 %v1846, %v1845
        %v1864 = vpack.c.b16 %v1848, %v1847
        %1881 = vmatprep.subr.bf16.mxu0 0
        %1882 = vmatpush1.bf16.msra.mxu0 %v1856
        %1883 = vmatprep.subr.bf16.mxu0 0
        %1884 = vmatpush1.bf16.msra.mxu0 %v1855
        %1885 = vmatprep.subr.bf16.mxu0 0
        %1886 = vmatpush1.bf16.msra.mxu0 %v1854
        %1887 = vmatprep.subr.bf16.mxu0 0
        %1888 = vmatpush1.bf16.msra.mxu0 %v1853
        %1889 = vmatprep.subr.bf16.mxu0 0
        %1890 = vmatpush1.bf16.msra.mxu0 %v1852
        %1891 = vmatprep.subr.bf16.mxu0 0
        %1892 = vmatpush1.bf16.msra.mxu0 %v1851
        %1893 = vmatprep.subr.bf16.mxu0 0
        %1894 = vmatpush1.bf16.msra.mxu0 %v1850
        %1895 = vmatprep.subr.bf16.mxu0 0
        %1896 = vmatpush1.bf16.msra.mxu0 %v1849
        %1897 = vmatprep.subr.bf16.mxu0 0
        %1898 = vmatpush2.bf16.msra.mxu0 %v1864
        %1899 = vmatprep.subr.bf16.mxu0 0
        %1900 = vmatpush2.bf16.msra.mxu0 %v1863
        %1901 = vmatprep.subr.bf16.mxu0 0
        %1902 = vmatpush2.bf16.msra.mxu0 %v1862
        %1903 = vmatprep.subr.bf16.mxu0 0
        %1904 = vmatpush2.bf16.msra.mxu0 %v1861
        %1905 = vmatprep.subr.bf16.mxu0 0
        %1906 = vmatpush2.bf16.msra.mxu0 %v1860
        %1907 = vmatprep.subr.bf16.mxu0 0
        %1908 = vmatpush2.bf16.msra.mxu0 %v1859
        %1909 = vmatprep.subr.bf16.mxu0 0
        %1910 = vmatpush2.bf16.msra.mxu0 %v1858
        %1911 = vmatprep.subr.bf16.mxu0 0
        %1912 = vmatpush2.bf16.msra.mxu0 %v1857
        %1913 = vmatprep.mubr.bf16.mxu0 %v1743
        %1914 = vmatmul.mubr.bf16.gmra.mxu0 %v1742
        %v1915 = vpop.f32.mrf.mxu0
        %v1916 = vadd.f32 %v1783, %v1915
        %v1917 = vpop.f32.mrf.mxu0
        %v1918 = vpop.f32.mrf.mxu0
        %v1919 = vadd.f32 %v1783, %v1918
        %v1920 = vpop.f32.mrf.mxu0
        %1921 = vmatprep.mubr.bf16.mxu0 %v1745
        %1922 = vmatmul.mubr.bf16.gmra.mxu0 %v1744
        %v1923 = vpop.f32.mrf.mxu0
        %v1924 = vadd.f32 %v1783, %v1923
        %v1925 = vpop.f32.mrf.mxu0
        %v1926 = vpop.f32.mrf.mxu0
        %v1927 = vadd.f32 %v1783, %v1926
        %v1928 = vpop.f32.mrf.mxu0
        %1929 = vdwg.mxu0
        %v1930 = vadd.f32 %v1436, %v1916
        %v1931 = vadd.f32 %v1437, %v1919
        %v1932 = vadd.f32 %v1438, %v1924
        %v1933 = vadd.f32 %v1439, %v1927
        %v1934 = vpack.c.bf16 %v1931, %v1930
        %v1935 = vpack.c.bf16 %v1933, %v1932
        %v1938 = vunpack.c.l.b16 %v1934
        %v1939 = vunpack.c.h.b16 %v1934
        %v1940 = vunpack.c.l.b16 %v1935
        %v1941 = vunpack.c.h.b16 %v1935
        %v1942 = vpack.c.b16 %v1938, %v1938
        %v1943 = vpack.c.b16 %v1939, %v1939
        %v1944 = vpack.c.b16 %v1940, %v1940
        %v1945 = vpack.c.b16 %v1941, %v1941
        %1950 = vst [vmem:[%s620] sm:$0xf] %v1942
        %1951 = vst [vmem:[%s620 + $0x4] sm:$0xf] %v1943
        %1952 = vst [vmem:[%s620 + $0x8] sm:$0xf] %v1944
        %1953 = vst [vmem:[%s620 + $0xc] sm:$0xf] %v1945
        %s1954 = sand.u32 %s363, 1
        %s1955 = scalar_lea.sflag [#allocation7], %s1954
        %s1956 = sand.u32 %s363, 1
        %s1957 = smul.addr %s1956, 16
        %s1958 = scalar_lea.vmem [#allocation19], %s1957
        // Predicated region
        $region113: #{tpu_custom_call.1} parent=75 // pred_check
          %p1959 = pneg %p373
        $region114: #{tpu_custom_call.1} parent=75 // pred_check_branch
          %1961 = sbr.rel (%p1959) target = $region116
        $region115: #{tpu_custom_call.1} parent=75 // pred_region
          %s1962 = smul.u32 4, %s42
          %s1964 = ssub.s32 256, 256
          %1965 = vsyncadd %s1955, %s1964
          %s1966 = smul.addr %s41, 4
          %s1967 = sadd.s32 %s1962, %s1966
          %s1968 = smul.addr %s1967, 64
          %s1969 = scalar_lea.hbm %s14, %s1968
          %s1970 = sshll.u32 %s1958, 4
          %s1971 = int_to_ptr.vmem [resolvable:$true] %s1970
          %1976 = dma.vmem_to_hbm [thread:$0]  %s1971, 256, %s1969, %s1955, 64, 64, 4
        $region116: #{tpu_custom_call.1} parent=75 // pred_fallthru
          _
      $region76: #{tpu_custom_call.1} parent=5 // pred_fallthru
        _
      %p1977 = scmp.le.s32.totalorder 2, %s32
      // Predicated region
      $region117: #{tpu_custom_call.1} parent=5 // pred_check
        %p1978 = pneg %p1977
      $region118: #{tpu_custom_call.1} parent=5 // pred_check_branch
        %1980 = sbr.rel (%p1978) target = $region120
      $region119: #{tpu_custom_call.1} parent=5 // pred_region
        %s1981 = ssub.s32 %s32, 2
        // Predicated region
        $region121: #{tpu_custom_call.1} parent=119 // pred_check
          %p1982 = pneg %p379
        $region122: #{tpu_custom_call.1} parent=119 // pred_check_branch
          %1984 = sbr.rel (%p1982) target = $region124
        $region123: #{tpu_custom_call.1} parent=119 // pred_region
          %s1985 = sand.u32 %s364, 1
          %s1986 = scalar_lea.sflag [#allocation7], %s1985
          %s1987 = sand.u32 %s364, 1
          %s1988 = smul.addr %s1987, 16
          %s1989 = scalar_lea.vmem [#allocation19], %s1988
          %1990 = dma.done %s1986, 256
        $region124: #{tpu_custom_call.1} parent=119 // pred_fallthru
          _
      $region120: #{tpu_custom_call.1} parent=5 // pred_fallthru
        _
    $region6: #{tpu_custom_call.1} parent=1 // loop_footer
      %s36 = sadd.s32 1, %s32
    $region7: #{tpu_custom_call.1} parent=1 // loop_footer_branch
      %31 = sbr.rel target = $region3
    $region8: #{tpu_custom_call.1} parent=1 // loop_exit
      _
    %1991 = vsyncpa [#allocation6], 1
    %s1992 = scalar_lea.sflag [#allocation6], 1
    %1993 = vsyncpa %s1992, 1
    %1994 = vsyncpa [#allocation9], 1
    %s1995 = scalar_lea.sflag [#allocation9], 1
    %1996 = vsyncpa %s1995, 1
    %1997 = vsyncpa [#allocation12], 1
    %1998 = vsyncpa [#allocation15], 1
    %1999 = vsyncpa [#allocation18], 1
    %2000 = vsyncpa [#allocation7], 1
    %s2001 = scalar_lea.sflag [#allocation7], 1
    %2002 = vsyncpa %s2001, 1

// kernel: tpu_custom_call.1
$region0: #{tpu_custom_call.1}
  #allocation0 [shape = 'u32[]', space=smem, size = 0x4, offset = 0x4, fixed_abs, tag = 'smem constant byte address 0x4 - core index']
  #allocation1 [shape = 'u32[144,128]{1,0:T(1,128)}', space=vmem, size = 0x12000, scoped, tag = 'internal scratch']
  #allocation2 [shape = 'bf16[32,128]{1,0:T(8,128)(2,1)}', space=vmem, size = 0x2000, scoped, tag = 'scratch operand']
  #allocation3 [shape = 'bf16[32,128]{1,0:T(8,128)(2,1)}', space=vmem, size = 0x2000, scoped, tag = 'scratch operand']
  #allocation4 [shape = 'bf16[32,128]{1,0:T(8,128)(2,1)}', space=vmem, size = 0x2000, scoped, tag = 'scratch operand']
  %s0 = inlined_call_operand.hbm [shape: bf16[2,32,128], index: 0, kind: input, shape index: {}]
  %s1 = inlined_call_operand.hbm [shape: f32[2,1,32], index: 1, kind: input, shape index: {}]
  %s2 = inlined_call_operand.vmem [shape: f32[1,128], index: 2, kind: input, shape index: {}]
  %s3 = inlined_call_operand.vmem [shape: f32[1,128], index: 3, kind: input, shape index: {}]
  %s4 = inlined_call_operand.hbm [shape: bf16[128,128], index: 4, kind: input, shape index: {}]
  %s5 = inlined_call_operand.hbm [shape: bf16[128,128], index: 5, kind: input, shape index: {}]
  %s6 = inlined_call_operand.hbm [shape: bf16[128,128], index: 6, kind: input, shape index: {}]
  %s7 = inlined_call_operand.hbm [shape: bf16[128,128], index: 7, kind: input, shape index: {}]
  %s8 = inlined_call_operand.vmem [shape: f32[1,128], index: 8, kind: input, shape index: {}]
  %s9 = inlined_call_operand.vmem [shape: f32[1,128], index: 9, kind: input, shape index: {}]
  %s10 = inlined_call_operand.hbm [shape: bf16[128,256], index: 10, kind: input, shape index: {}]
  %s11 = inlined_call_operand.vmem [shape: f32[1,256], index: 11, kind: input, shape index: {}]
  %s12 = inlined_call_operand.hbm [shape: bf16[256,128], index: 12, kind: input, shape index: {}]
  %s13 = inlined_call_operand.vmem [shape: f32[1,128], index: 13, kind: input, shape index: {}]
  %s14 = inlined_call_operand.hbm [shape: bf16[2,32,128], index: 14, kind: output, shape index: {}]
  %s15 = sld [smem:[#allocation0]]
  $region125: #{tpu_custom_call.1} parent=0
    _
  %s17 = ssub.s32 1, %s15
  %s18 = scalar_select 0, %s17, %s15
  $region1: #{tpu_custom_call.1} parent=0
    #allocation5 [shape = 'u8[16384]{0}', space=vmem, size = 0x4000, scoped, tag = 'input window, operand 0']
    #allocation6 [shape = 's32[2]{0}', space=sflag, size = 0x8, scoped, tag = 'scoped memory for tpu_custom_call.1']
    #allocation7 [shape = 's32[2]{0}', space=sflag, size = 0x8, scoped, tag = 'scoped memory for tpu_custom_call.1']
    #allocation8 [shape = 'u8[1024]{0}', space=vmem, size = 0x400, scoped, tag = 'input window, operand 1']
    #allocation9 [shape = 's32[2]{0}', space=sflag, size = 0x8, scoped, tag = 'scoped memory for tpu_custom_call.1']
    #allocation10 [shape = 'u8[32768]{0}', space=vmem, size = 0x8000, scoped, tag = 'input window, operand 4, single buffered']
    #allocation11 [shape = 'u8[32768]{0}', space=vmem, size = 0x8000, scoped, tag = 'input window, operand 5, single buffered']
    #allocation12 [shape = 's32[1]{0}', space=sflag, size = 0x4, scoped, tag = 'scoped memory for tpu_custom_call.1']
    #allocation13 [shape = 'u8[32768]{0}', space=vmem, size = 0x8000, scoped, tag = 'input window, operand 6, single buffered']
    #allocation14 [shape = 'u8[32768]{0}', space=vmem, size = 0x8000, scoped, tag = 'input window, operand 7, single buffered']
    #allocation15 [shape = 's32[1]{0}', space=sflag, size = 0x4, scoped, tag = 'scoped memory for tpu_custom_call.1']
    #allocation16 [shape = 'u8[65536]{0}', space=vmem, size = 0x10000, scoped, tag = 'input window, operand 10, single buffered']
    #allocation17 [shape = 'u8[65536]{0}', space=vmem, size = 0x10000, scoped, tag = 'input window, operand 12, single buffered']
    #allocation18 [shape = 's32[1]{0}', space=sflag, size = 0x4, scoped, tag = 'scoped memory for tpu_custom_call.1']
    #allocation19 [shape = 'u8[16384]{0}', space=vmem, size = 0x4000, scoped, tag = 'output window, operand 0']
    %19 = vsyncpa [#allocation6], 0
    %s20 = scalar_lea.sflag [#allocation6], 1
    %21 = vsyncpa %s20, 0
    %22 = vsyncpa [#allocation9], 0
    %s23 = scalar_lea.sflag [#allocation9], 1
    %24 = vsyncpa %s23, 0
    %25 = vsyncpa [#allocation12], 0
    %26 = vsyncpa [#allocation15], 0
    %27 = vsyncpa [#allocation18], 0
    %28 = vsyncpa [#allocation7], 0
    %s29 = scalar_lea.sflag [#allocation7], 1
    %30 = vsyncpa %s29, 0
    loop: start=0, step=1, limit=4
    $region2: #{tpu_custom_call.1} parent=1 // loop_pre_header
      _
    $region3: #{tpu_custom_call.1} parent=1 // loop_header
      %s32 = sphi 0, %s36
      %p33 = scmp.ge.s32.totalorder %s32, 4
      %s39 = sphi 0, %s51
      %s40 = sphi 0, %s47
      %s41 = sphi 0, %s39
      %s42 = sphi 0, %s40
      %s43 = sphi 0, %s41
      %s44 = sphi 0, %s42
      %s54 = sphi 0, %s56
      %s57 = sphi 0, %s54
      %s58 = sphi 0, %s57
      %s74 = sphi 0, %s58
      %s80 = sphi 0, %s82
      %s83 = sphi 0, %s80
      %s84 = sphi 0, %s83
      %s100 = sphi 0, %s84
      %s104 = sphi 0, %s104
      %s106 = sphi 0, %s104
      %s107 = sphi 0, %s106
      %s121 = sphi 0, %s107
      %s125 = sphi 0, %s125
      %s127 = sphi 0, %s125
      %s128 = sphi 0, %s127
      %s142 = sphi 0, %s128
      %s146 = sphi 0, %s146
      %s148 = sphi 0, %s146
      %s149 = sphi 0, %s148
      %s163 = sphi 0, %s149
      %s167 = sphi 0, %s167
      %s169 = sphi 0, %s167
      %s170 = sphi 0, %s169
      %s184 = sphi 0, %s170
      %s188 = sphi 0, %s188
      %s190 = sphi 0, %s188
      %s191 = sphi 0, %s190
      %s205 = sphi 0, %s191
      %s209 = sphi 0, %s209
      %s211 = sphi 0, %s209
      %s212 = sphi 0, %s211
      %s226 = sphi 0, %s212
      %s230 = sphi 0, %s230
      %s232 = sphi 0, %s230
      %s233 = sphi 0, %s232
      %s247 = sphi 0, %s233
      %s251 = sphi 0, %s251
      %s253 = sphi 0, %s251
      %s254 = sphi 0, %s253
      %s268 = sphi 0, %s254
      %s272 = sphi 0, %s272
      %s274 = sphi 0, %s272
      %s275 = sphi 0, %s274
      %s289 = sphi 0, %s275
      %s293 = sphi 0, %s293
      %s295 = sphi 0, %s293
      %s296 = sphi 0, %s295
      %s310 = sphi 0, %s296
      %s314 = sphi 0, %s314
      %s316 = sphi 0, %s314
      %s317 = sphi 0, %s316
      %s331 = sphi 0, %s317
      %s335 = sphi 0, %s335
      %s337 = sphi 0, %s335
      %s338 = sphi 0, %s337
      %s352 = sphi 0, %s338
      %s360 = sphi 0, %s362
      %s363 = sphi 0, %s360
      %s364 = sphi 0, %s363
      %s380 = sphi 0, %s364
    $region4: #{tpu_custom_call.1} parent=1 // loop_header_branch
      %35 = sbr.rel (%p33) target = $region8
    $region5: #{tpu_custom_call.1} parent=1 // loop_body
      %s37 = ssub.s32 %s32, 1
      %s38 = ssub.s32 %s32, 2
      %s45 = sadd.s32 1, %s40
      %p46 = scmp.ge.s32.totalorder %s45, 1
      %s47 = scalar_select %p46, 0, %s45
      %s48 = sadd.s32 1, %s39
      %s49 = scalar_select %p46, %s48, %s39
      %p50 = scmp.ge.s32.totalorder %s49, 2
      %s51 = scalar_select %p50, 0, %s49
      %s52 = ssub.s32 %s39, %s51
      %p53 = scmp.eq.s32.totalorder %s52, 0
      %s55 = sadd.s32 %s54, 1
      %s56 = scalar_select %p53, %s54, %s55
      %p59 = pneg %p53
      %p60 = scmp.eq.s32.totalorder %s32, 1
      %p61 = por %p59, %p60
      %p62 = scmp.ne.s32.totalorder %s54, %s57
      %p63 = scmp.eq.s32.totalorder %s32, 0
      %p64 = por %p62, %p63
      %p65 = scmp.ne.s32.totalorder %s54, %s57
      %p66 = scmp.eq.s32.totalorder %s37, 1
      %p67 = por %p65, %p66
      %p68 = scmp.ne.s32.totalorder %s57, %s58
      %p69 = scmp.eq.s32.totalorder %s37, 0
      %p70 = por %p68, %p69
      %p71 = scmp.ne.s32.totalorder %s57, %s58
      %p72 = scmp.eq.s32.totalorder %s38, 1
      %p73 = por %p71, %p72
      %p75 = scmp.ne.s32.totalorder %s58, %s74
      %p76 = scmp.eq.s32.totalorder %s38, 0
      %p77 = por %p75, %p76
      %s78 = ssub.s32 %s39, %s51
      %p79 = scmp.eq.s32.totalorder %s78, 0
      %s81 = sadd.s32 %s80, 1
      %s82 = scalar_select %p79, %s80, %s81
      %p85 = pneg %p79
      %p86 = scmp.eq.s32.totalorder %s32, 1
      %p87 = por %p85, %p86
      %p88 = scmp.ne.s32.totalorder %s80, %s83
      %p89 = scmp.eq.s32.totalorder %s32, 0
      %p90 = por %p88, %p89
      %p91 = scmp.ne.s32.totalorder %s80, %s83
      %p92 = scmp.eq.s32.totalorder %s37, 1
      %p93 = por %p91, %p92
      %p94 = scmp.ne.s32.totalorder %s83, %s84
      %p95 = scmp.eq.s32.totalorder %s37, 0
      %p96 = por %p94, %p95
      %p97 = scmp.ne.s32.totalorder %s83, %s84
      %p98 = scmp.eq.s32.totalorder %s38, 1
      %p99 = por %p97, %p98
      %p101 = scmp.ne.s32.totalorder %s84, %s100
      %p102 = scmp.eq.s32.totalorder %s38, 0
      %p103 = por %p101, %p102
      %s105 = sadd.s32 %s104, 1
      %p108 = scmp.eq.s32.totalorder %s32, 1
      %p109 = scmp.ne.s32.totalorder %s104, %s106
      %p110 = scmp.eq.s32.totalorder %s32, 0
      %p111 = por %p109, %p110
      %p112 = scmp.ne.s32.totalorder %s104, %s106
      %p113 = scmp.eq.s32.totalorder %s37, 1
      %p114 = por %p112, %p113
      %p115 = scmp.ne.s32.totalorder %s106, %s107
      %p116 = scmp.eq.s32.totalorder %s37, 0
      %p117 = por %p115, %p116
      %p118 = scmp.ne.s32.totalorder %s106, %s107
      %p119 = scmp.eq.s32.totalorder %s38, 1
      %p120 = por %p118, %p119
      %p122 = scmp.ne.s32.totalorder %s107, %s121
      %p123 = scmp.eq.s32.totalorder %s38, 0
      %p124 = por %p122, %p123
      %s126 = sadd.s32 %s125, 1
      %p129 = scmp.eq.s32.totalorder %s32, 1
      %p130 = scmp.ne.s32.totalorder %s125, %s127
      %p131 = scmp.eq.s32.totalorder %s32, 0
      %p132 = por %p130, %p131
      %p133 = scmp.ne.s32.totalorder %s125, %s127
      %p134 = scmp.eq.s32.totalorder %s37, 1
      %p135 = por %p133, %p134
      %p136 = scmp.ne.s32.totalorder %s127, %s128
      %p137 = scmp.eq.s32.totalorder %s37, 0
      %p138 = por %p136, %p137
      %p139 = scmp.ne.s32.totalorder %s127, %s128
      %p140 = scmp.eq.s32.totalorder %s38, 1
      %p141 = por %p139, %p140
      %p143 = scmp.ne.s32.totalorder %s128, %s142
      %p144 = scmp.eq.s32.totalorder %s38, 0
      %p145 = por %p143, %p144
      %s147 = sadd.s32 %s146, 1
      %p150 = scmp.eq.s32.totalorder %s32, 1
      %p151 = scmp.ne.s32.totalorder %s146, %s148
      %p152 = scmp.eq.s32.totalorder %s32, 0
      %p153 = por %p151, %p152
      %p154 = scmp.ne.s32.totalorder %s146, %s148
      %p155 = scmp.eq.s32.totalorder %s37, 1
      %p156 = por %p154, %p155
      %p157 = scmp.ne.s32.totalorder %s148, %s149
      %p158 = scmp.eq.s32.totalorder %s37, 0
      %p159 = por %p157, %p158
      %p160 = scmp.ne.s32.totalorder %s148, %s149
      %p161 = scmp.eq.s32.totalorder %s38, 1
      %p162 = por %p160, %p161
      %p164 = scmp.ne.s32.totalorder %s149, %s163
      %p165 = scmp.eq.s32.totalorder %s38, 0
      %p166 = por %p164, %p165
      %s168 = sadd.s32 %s167, 1
      %p171 = scmp.eq.s32.totalorder %s32, 1
      %p172 = scmp.ne.s32.totalorder %s167, %s169
      %p173 = scmp.eq.s32.totalorder %s32, 0
      %p174 = por %p172, %p173
      %p175 = scmp.ne.s32.totalorder %s167, %s169
      %p176 = scmp.eq.s32.totalorder %s37, 1
      %p177 = por %p175, %p176
      %p178 = scmp.ne.s32.totalorder %s169, %s170
      %p179 = scmp.eq.s32.totalorder %s37, 0
      %p180 = por %p178, %p179
      %p181 = scmp.ne.s32.totalorder %s169, %s170
      %p182 = scmp.eq.s32.totalorder %s38, 1
      %p183 = por %p181, %p182
      %p185 = scmp.ne.s32.totalorder %s170, %s184
      %p186 = scmp.eq.s32.totalorder %s38, 0
      %p187 = por %p185, %p186
      %s189 = sadd.s32 %s188, 1
      %p192 = scmp.eq.s32.totalorder %s32, 1
      %p193 = scmp.ne.s32.totalorder %s188, %s190
      %p194 = scmp.eq.s32.totalorder %s32, 0
      %p195 = por %p193, %p194
      %p196 = scmp.ne.s32.totalorder %s188, %s190
      %p197 = scmp.eq.s32.totalorder %s37, 1
      %p198 = por %p196, %p197
      %p199 = scmp.ne.s32.totalorder %s190, %s191
      %p200 = scmp.eq.s32.totalorder %s37, 0
      %p201 = por %p199, %p200
      %p202 = scmp.ne.s32.totalorder %s190, %s191
      %p203 = scmp.eq.s32.totalorder %s38, 1
      %p204 = por %p202, %p203
      %p206 = scmp.ne.s32.totalorder %s191, %s205
      %p207 = scmp.eq.s32.totalorder %s38, 0
      %p208 = por %p206, %p207
      %s210 = sadd.s32 %s209, 1
      %p213 = scmp.eq.s32.totalorder %s32, 1
      %p214 = scmp.ne.s32.totalorder %s209, %s211
      %p215 = scmp.eq.s32.totalorder %s32, 0
      %p216 = por %p214, %p215
      %p217 = scmp.ne.s32.totalorder %s209, %s211
      %p218 = scmp.eq.s32.totalorder %s37, 1
      %p219 = por %p217, %p218
      %p220 = scmp.ne.s32.totalorder %s211, %s212
      %p221 = scmp.eq.s32.totalorder %s37, 0
      %p222 = por %p220, %p221
      %p223 = scmp.ne.s32.totalorder %s211, %s212
      %p224 = scmp.eq.s32.totalorder %s38, 1
      %p225 = por %p223, %p224
      %p227 = scmp.ne.s32.totalorder %s212, %s226
      %p228 = scmp.eq.s32.totalorder %s38, 0
      %p229 = por %p227, %p228
      %s231 = sadd.s32 %s230, 1
      %p234 = scmp.eq.s32.totalorder %s32, 1
      %p235 = scmp.ne.s32.totalorder %s230, %s232
      %p236 = scmp.eq.s32.totalorder %s32, 0
      %p237 = por %p235, %p236
      %p238 = scmp.ne.s32.totalorder %s230, %s232
      %p239 = scmp.eq.s32.totalorder %s37, 1
      %p240 = por %p238, %p239
      %p241 = scmp.ne.s32.totalorder %s232, %s233
      %p242 = scmp.eq.s32.totalorder %s37, 0
      %p243 = por %p241, %p242
      %p244 = scmp.ne.s32.totalorder %s232, %s233
      %p245 = scmp.eq.s32.totalorder %s38, 1
      %p246 = por %p244, %p245
      %p248 = scmp.ne.s32.totalorder %s233, %s247
      %p249 = scmp.eq.s32.totalorder %s38, 0
      %p250 = por %p248, %p249
      %s252 = sadd.s32 %s251, 1
      %p255 = scmp.eq.s32.totalorder %s32, 1
      %p256 = scmp.ne.s32.totalorder %s251, %s253
      %p257 = scmp.eq.s32.totalorder %s32, 0
      %p258 = por %p256, %p257
      %p259 = scmp.ne.s32.totalorder %s251, %s253
      %p260 = scmp.eq.s32.totalorder %s37, 1
      %p261 = por %p259, %p260
      %p262 = scmp.ne.s32.totalorder %s253, %s254
      %p263 = scmp.eq.s32.totalorder %s37, 0
      %p264 = por %p262, %p263
      %p265 = scmp.ne.s32.totalorder %s253, %s254
      %p266 = scmp.eq.s32.totalorder %s38, 1
      %p267 = por %p265, %p266
      %p269 = scmp.ne.s32.totalorder %s254, %s268
      %p270 = scmp.eq.s32.totalorder %s38, 0
      %p271 = por %p269, %p270
      %s273 = sadd.s32 %s272, 1
      %p276 = scmp.eq.s32.totalorder %s32, 1
      %p277 = scmp.ne.s32.totalorder %s272, %s274
      %p278 = scmp.eq.s32.totalorder %s32, 0
      %p279 = por %p277, %p278
      %p280 = scmp.ne.s32.totalorder %s272, %s274
      %p281 = scmp.eq.s32.totalorder %s37, 1
      %p282 = por %p280, %p281
      %p283 = scmp.ne.s32.totalorder %s274, %s275
      %p284 = scmp.eq.s32.totalorder %s37, 0
      %p285 = por %p283, %p284
      %p286 = scmp.ne.s32.totalorder %s274, %s275
      %p287 = scmp.eq.s32.totalorder %s38, 1
      %p288 = por %p286, %p287
      %p290 = scmp.ne.s32.totalorder %s275, %s289
      %p291 = scmp.eq.s32.totalorder %s38, 0
      %p292 = por %p290, %p291
      %s294 = sadd.s32 %s293, 1
      %p297 = scmp.eq.s32.totalorder %s32, 1
      %p298 = scmp.ne.s32.totalorder %s293, %s295
      %p299 = scmp.eq.s32.totalorder %s32, 0
      %p300 = por %p298, %p299
      %p301 = scmp.ne.s32.totalorder %s293, %s295
      %p302 = scmp.eq.s32.totalorder %s37, 1
      %p303 = por %p301, %p302
      %p304 = scmp.ne.s32.totalorder %s295, %s296
      %p305 = scmp.eq.s32.totalorder %s37, 0
      %p306 = por %p304, %p305
      %p307 = scmp.ne.s32.totalorder %s295, %s296
      %p308 = scmp.eq.s32.totalorder %s38, 1
      %p309 = por %p307, %p308
      %p311 = scmp.ne.s32.totalorder %s296, %s310
      %p312 = scmp.eq.s32.totalorder %s38, 0
      %p313 = por %p311, %p312
      %s315 = sadd.s32 %s314, 1
      %p318 = scmp.eq.s32.totalorder %s32, 1
      %p319 = scmp.ne.s32.totalorder %s314, %s316
      %p320 = scmp.eq.s32.totalorder %s32, 0
      %p321 = por %p319, %p320
      %p322 = scmp.ne.s32.totalorder %s314, %s316
      %p323 = scmp.eq.s32.totalorder %s37, 1
      %p324 = por %p322, %p323
      %p325 = scmp.ne.s32.totalorder %s316, %s317
      %p326 = scmp.eq.s32.totalorder %s37, 0
      %p327 = por %p325, %p326
      %p328 = scmp.ne.s32.totalorder %s316, %s317
      %p329 = scmp.eq.s32.totalorder %s38, 1
      %p330 = por %p328, %p329
      %p332 = scmp.ne.s32.totalorder %s317, %s331
      %p333 = scmp.eq.s32.totalorder %s38, 0
      %p334 = por %p332, %p333
      %s336 = sadd.s32 %s335, 1
      %p339 = scmp.eq.s32.totalorder %s32, 1
      %p340 = scmp.ne.s32.totalorder %s335, %s337
      %p341 = scmp.eq.s32.totalorder %s32, 0
      %p342 = por %p340, %p341
      %p343 = scmp.ne.s32.totalorder %s335, %s337
      %p344 = scmp.eq.s32.totalorder %s37, 1
      %p345 = por %p343, %p344
      %p346 = scmp.ne.s32.totalorder %s337, %s338
      %p347 = scmp.eq.s32.totalorder %s37, 0
      %p348 = por %p346, %p347
      %p349 = scmp.ne.s32.totalorder %s337, %s338
      %p350 = scmp.eq.s32.totalorder %s38, 1
      %p351 = por %p349, %p350
      %p353 = scmp.ne.s32.totalorder %s338, %s352
      %p354 = scmp.eq.s32.totalorder %s38, 0
      %p355 = por %p353, %p354
      %s356 = ssub.s32 %s39, %s51
      %s357 = ssub.s32 %s40, %s47
      %s358 = sor.u32 %s356, %s357
      %p359 = scmp.eq.s32.totalorder %s358, 0
      %s361 = sadd.s32 %s360, 1
      %s362 = scalar_select %p359, %s360, %s361
      %p365 = pneg %p359
      %p366 = scmp.eq.s32.totalorder %s32, 1
      %p367 = por %p365, %p366
      %p368 = scmp.ne.s32.totalorder %s360, %s363
      %p369 = scmp.eq.s32.totalorder %s32, 0
      %p370 = por %p368, %p369
      %p371 = scmp.ne.s32.totalorder %s360, %s363
      %p372 = scmp.eq.s32.totalorder %s37, 1
      %p373 = por %p371, %p372
      %p374 = scmp.ne.s32.totalorder %s363, %s364
      %p375 = scmp.eq.s32.totalorder %s37, 0
      %p376 = por %p374, %p375
      %p377 = scmp.ne.s32.totalorder %s363, %s364
      %p378 = scmp.eq.s32.totalorder %s38, 1
      %p379 = por %p377, %p378
      %p381 = scmp.ne.s32.totalorder %s364, %s380
      %p382 = scmp.eq.s32.totalorder %s38, 0
      %p383 = por %p381, %p382
      %p384 = scmp.le.s32.totalorder 1, %s32
      %p385 = scmp.lt.s32.totalorder %s32, 3
      %p386 = pnand %p384, %p385
      %p387 = pneg %p386
      // Predicated region
      $region9: #{tpu_custom_call.1} parent=5 // pred_check
        _
      $region10: #{tpu_custom_call.1} parent=5 // pred_check_branch
        %389 = sbr.rel (%p386) target = $region12
      $region11: #{tpu_custom_call.1} parent=5 // pred_region
        %s390 = ssub.s32 %s32, 1
        // Predicated region
        $region13: #{tpu_custom_call.1} parent=11 // pred_check
          %p391 = pneg %p117
        $region14: #{tpu_custom_call.1} parent=11 // pred_check_branch
          %393 = sbr.rel (%p391) target = $region16
        $region15: #{tpu_custom_call.1} parent=11 // pred_region
          _
        $region16: #{tpu_custom_call.1} parent=11 // pred_fallthru
          _
        // Predicated region
        $region17: #{tpu_custom_call.1} parent=11 // pred_check
          %p394 = pneg %p138
        $region18: #{tpu_custom_call.1} parent=11 // pred_check_branch
          %396 = sbr.rel (%p394) target = $region20
        $region19: #{tpu_custom_call.1} parent=11 // pred_region
          _
        $region20: #{tpu_custom_call.1} parent=11 // pred_fallthru
          _
        // Predicated region
        $region21: #{tpu_custom_call.1} parent=11 // pred_check
          %p397 = pneg %p159
        $region22: #{tpu_custom_call.1} parent=11 // pred_check_branch
          %399 = sbr.rel (%p397) target = $region24
        $region23: #{tpu_custom_call.1} parent=11 // pred_region
          %s401 = ssub.s32 1024, 1024
          %402 = vsyncadd [#allocation9], %s401
          %s403 = sshll.u32 [#allocation10], 4
          %s404 = int_to_ptr.vmem [resolvable:$true] %s403
          %409 = dma.hbm_to_vmem [thread:$0]  %s4, 1024, %s404, [#allocation9], 64, 64, 4
        $region24: #{tpu_custom_call.1} parent=11 // pred_fallthru
          _
        // Predicated region
        $region25: #{tpu_custom_call.1} parent=11 // pred_check
          %p410 = pneg %p180
        $region26: #{tpu_custom_call.1} parent=11 // pred_check_branch
          %412 = sbr.rel (%p410) target = $region28
        $region27: #{tpu_custom_call.1} parent=11 // pred_region
          %s414 = ssub.s32 1024, 1024
          %415 = vsyncadd [#allocation12], %s414
          %s416 = sshll.u32 [#allocation11], 4
          %s417 = int_to_ptr.vmem [resolvable:$true] %s416
          %422 = dma.hbm_to_vmem [thread:$0]  %s5, 1024, %s417, [#allocation12], 64, 64, 4
        $region28: #{tpu_custom_call.1} parent=11 // pred_fallthru
          _
        // Predicated region
        $region29: #{tpu_custom_call.1} parent=11 // pred_check
          %p423 = pneg %p201
        $region30: #{tpu_custom_call.1} parent=11 // pred_check_branch
          %425 = sbr.rel (%p423) target = $region32
        $region31: #{tpu_custom_call.1} parent=11 // pred_region
          %s427 = ssub.s32 1024, 1024
          %428 = vsyncadd [#allocation12], %s427
          %s429 = sshll.u32 [#allocation13], 4
          %s430 = int_to_ptr.vmem [resolvable:$true] %s429
          %435 = dma.hbm_to_vmem [thread:$0]  %s6, 1024, %s430, [#allocation12], 64, 64, 4
        $region32: #{tpu_custom_call.1} parent=11 // pred_fallthru
          _
        // Predicated region
        $region33: #{tpu_custom_call.1} parent=11 // pred_check
          %p436 = pneg %p222
        $region34: #{tpu_custom_call.1} parent=11 // pred_check_branch
          %438 = sbr.rel (%p436) target = $region36
        $region35: #{tpu_custom_call.1} parent=11 // pred_region
          %s440 = ssub.s32 1024, 1024
          %441 = vsyncadd [#allocation15], %s440
          %s442 = sshll.u32 [#allocation14], 4
          %s443 = int_to_ptr.vmem [resolvable:$true] %s442
          %448 = dma.hbm_to_vmem [thread:$0]  %s7, 1024, %s443, [#allocation15], 64, 64, 4
        $region36: #{tpu_custom_call.1} parent=11 // pred_fallthru
          _
        // Predicated region
        $region37: #{tpu_custom_call.1} parent=11 // pred_check
          %p449 = pneg %p243
        $region38: #{tpu_custom_call.1} parent=11 // pred_check_branch
          %451 = sbr.rel (%p449) target = $region40
        $region39: #{tpu_custom_call.1} parent=11 // pred_region
          _
        $region40: #{tpu_custom_call.1} parent=11 // pred_fallthru
          _
        // Predicated region
        $region41: #{tpu_custom_call.1} parent=11 // pred_check
          %p452 = pneg %p264
        $region42: #{tpu_custom_call.1} parent=11 // pred_check_branch
          %454 = sbr.rel (%p452) target = $region44
        $region43: #{tpu_custom_call.1} parent=11 // pred_region
          _
        $region44: #{tpu_custom_call.1} parent=11 // pred_fallthru
          _
        // Predicated region
        $region45: #{tpu_custom_call.1} parent=11 // pred_check
          %p455 = pneg %p285
        $region46: #{tpu_custom_call.1} parent=11 // pred_check_branch
          %457 = sbr.rel (%p455) target = $region48
        $region47: #{tpu_custom_call.1} parent=11 // pred_region
          %s459 = ssub.s32 2048, 2048
          %460 = vsyncadd [#allocation15], %s459
          %s461 = sshll.u32 [#allocation16], 4
          %s462 = int_to_ptr.vmem [resolvable:$true] %s461
          %467 = dma.hbm_to_vmem [thread:$0]  %s10, 2048, %s462, [#allocation15], 128, 128, 8
        $region48: #{tpu_custom_call.1} parent=11 // pred_fallthru
          _
        // Predicated region
        $region49: #{tpu_custom_call.1} parent=11 // pred_check
          %p468 = pneg %p306
        $region50: #{tpu_custom_call.1} parent=11 // pred_check_branch
          %470 = sbr.rel (%p468) target = $region52
        $region51: #{tpu_custom_call.1} parent=11 // pred_region
          _
        $region52: #{tpu_custom_call.1} parent=11 // pred_fallthru
          _
        // Predicated region
        $region53: #{tpu_custom_call.1} parent=11 // pred_check
          %p471 = pneg %p327
        $region54: #{tpu_custom_call.1} parent=11 // pred_check_branch
          %473 = sbr.rel (%p471) target = $region56
        $region55: #{tpu_custom_call.1} parent=11 // pred_region
          %s475 = ssub.s32 2048, 2048
          %476 = vsyncadd [#allocation18], %s475
          %s477 = sshll.u32 [#allocation17], 4
          %s478 = int_to_ptr.vmem [resolvable:$true] %s477
          %483 = dma.hbm_to_vmem [thread:$0]  %s12, 2048, %s478, [#allocation18], 64, 64, 4
        $region56: #{tpu_custom_call.1} parent=11 // pred_fallthru
          _
        // Predicated region
        $region57: #{tpu_custom_call.1} parent=11 // pred_check
          %p484 = pneg %p348
        $region58: #{tpu_custom_call.1} parent=11 // pred_check_branch
          %486 = sbr.rel (%p484) target = $region60
        $region59: #{tpu_custom_call.1} parent=11 // pred_region
          _
        $region60: #{tpu_custom_call.1} parent=11 // pred_fallthru
          _
      $region12: #{tpu_custom_call.1} parent=5 // pred_fallthru
        _
      %p487 = scmp.lt.s32.totalorder %s32, 2
      // Predicated region
      $region61: #{tpu_custom_call.1} parent=5 // pred_check
        %p488 = pneg %p487
      $region62: #{tpu_custom_call.1} parent=5 // pred_check_branch
        %490 = sbr.rel (%p488) target = $region64
      $region63: #{tpu_custom_call.1} parent=5 // pred_region
        // Predicated region
        $region65: #{tpu_custom_call.1} parent=63 // pred_check
          %p491 = pneg %p64
        $region66: #{tpu_custom_call.1} parent=63 // pred_check_branch
          %493 = sbr.rel (%p491) target = $region68
        $region67: #{tpu_custom_call.1} parent=63 // pred_region
          %s494 = sand.u32 %s54, 1
          %s495 = scalar_lea.sflag [#allocation6], %s494
          %s496 = sand.u32 %s54, 1
          %s497 = smul.addr %s496, 16
          %s498 = scalar_lea.vmem [#allocation5], %s497
          %s500 = ssub.s32 256, 256
          %501 = vsyncadd %s495, %s500
          %s502 = smul.addr %s39, 4
          %s503 = smul.addr %s502, 64
          %s504 = scalar_lea.hbm %s0, %s503
          %s505 = sshll.u32 %s498, 4
          %s506 = int_to_ptr.vmem [resolvable:$true] %s505
          %511 = dma.hbm_to_vmem [thread:$0]  %s504, 256, %s506, %s495, 64, 64, 4
        $region68: #{tpu_custom_call.1} parent=63 // pred_fallthru
          _
        // Predicated region
        $region69: #{tpu_custom_call.1} parent=63 // pred_check
          %p512 = pneg %p90
        $region70: #{tpu_custom_call.1} parent=63 // pred_check_branch
          %514 = sbr.rel (%p512) target = $region72
        $region71: #{tpu_custom_call.1} parent=63 // pred_region
          %s515 = sand.u32 %s32, 1
          %s516 = scalar_lea.sflag [#allocation9], %s515
          %s517 = sand.u32 %s80, 1
          %s518 = scalar_lea.vmem [#allocation8], %s517
          %s520 = ssub.s32 16, 16
          %521 = vsyncadd %s516, %s520
          %s522 = smul.addr %s39, 16
          %s523 = scalar_lea.hbm %s1, %s522
          %s525 = sshll.u32 %s518, 4
          %s526 = int_to_ptr.vmem [resolvable:$true] %s525
          %528 = dma.hbm_to_vmem [thread:$0]  %s523, 16, %s526, %s516
        $region72: #{tpu_custom_call.1} parent=63 // pred_fallthru
          _
      $region64: #{tpu_custom_call.1} parent=5 // pred_fallthru
        _
      %p529 = scmp.le.s32.totalorder 1, %s32
      %p530 = scmp.lt.s32.totalorder %s32, 3
      %p531 = pnand %p529, %p530
      %p532 = pneg %p531
      // Predicated region
      $region73: #{tpu_custom_call.1} parent=5 // pred_check
        _
      $region74: #{tpu_custom_call.1} parent=5 // pred_check_branch
        %534 = sbr.rel (%p531) target = $region76
      $region75: #{tpu_custom_call.1} parent=5 // pred_region
        %s535 = ssub.s32 %s32, 1
        %s536 = sand.u32 %s57, 1
        %s537 = scalar_lea.sflag [#allocation6], %s536
        %s538 = sand.u32 %s57, 1
        %s539 = smul.addr %s538, 16
        %s540 = scalar_lea.vmem [#allocation5], %s539
        // Predicated region
        $region77: #{tpu_custom_call.1} parent=75 // pred_check
          %p541 = pneg %p70
        $region78: #{tpu_custom_call.1} parent=75 // pred_check_branch
          %543 = sbr.rel (%p541) target = $region80
        $region79: #{tpu_custom_call.1} parent=75 // pred_region
          %544 = dma.done %s537, 256
        $region80: #{tpu_custom_call.1} parent=75 // pred_fallthru
          _
        %s545 = sand.u32 %s37, 1
        %s546 = scalar_lea.sflag [#allocation9], %s545
        %s547 = sand.u32 %s83, 1
        %s548 = scalar_lea.vmem [#allocation8], %s547
        // Predicated region
        $region81: #{tpu_custom_call.1} parent=75 // pred_check
          %p549 = pneg %p96
        $region82: #{tpu_custom_call.1} parent=75 // pred_check_branch
          %551 = sbr.rel (%p549) target = $region84
        $region83: #{tpu_custom_call.1} parent=75 // pred_region
          %552 = dma.done %s546, 16
        $region84: #{tpu_custom_call.1} parent=75 // pred_fallthru
          _
        // Predicated region
        $region85: #{tpu_custom_call.1} parent=75 // pred_check
          %p553 = pneg %p159
        $region86: #{tpu_custom_call.1} parent=75 // pred_check_branch
          %555 = sbr.rel (%p553) target = $region88
        $region87: #{tpu_custom_call.1} parent=75 // pred_region
          %556 = dma.done [#allocation9], 1024
        $region88: #{tpu_custom_call.1} parent=75 // pred_fallthru
          _
        // Predicated region
        $region89: #{tpu_custom_call.1} parent=75 // pred_check
          %p557 = pneg %p180
        $region90: #{tpu_custom_call.1} parent=75 // pred_check_branch
          %559 = sbr.rel (%p557) target = $region92
        $region91: #{tpu_custom_call.1} parent=75 // pred_region
          %560 = dma.done [#allocation12], 1024
        $region92: #{tpu_custom_call.1} parent=75 // pred_fallthru
          _
        // Predicated region
        $region93: #{tpu_custom_call.1} parent=75 // pred_check
          %p561 = pneg %p201
        $region94: #{tpu_custom_call.1} parent=75 // pred_check_branch
          %563 = sbr.rel (%p561) target = $region96
        $region95: #{tpu_custom_call.1} parent=75 // pred_region
          %564 = dma.done [#allocation12], 1024
        $region96: #{tpu_custom_call.1} parent=75 // pred_fallthru
          _
        // Predicated region
        $region97: #{tpu_custom_call.1} parent=75 // pred_check
          %p565 = pneg %p222
        $region98: #{tpu_custom_call.1} parent=75 // pred_check_branch
          %567 = sbr.rel (%p565) target = $region100
        $region99: #{tpu_custom_call.1} parent=75 // pred_region
          %568 = dma.done [#allocation15], 1024
        $region100: #{tpu_custom_call.1} parent=75 // pred_fallthru
          _
        // Predicated region
        $region101: #{tpu_custom_call.1} parent=75 // pred_check
          %p569 = pneg %p285
        $region102: #{tpu_custom_call.1} parent=75 // pred_check_branch
          %571 = sbr.rel (%p569) target = $region104
        $region103: #{tpu_custom_call.1} parent=75 // pred_region
          %572 = dma.done [#allocation15], 2048
        $region104: #{tpu_custom_call.1} parent=75 // pred_fallthru
          _
        // Predicated region
        $region105: #{tpu_custom_call.1} parent=75 // pred_check
          %p573 = pneg %p327
        $region106: #{tpu_custom_call.1} parent=75 // pred_check_branch
          %575 = sbr.rel (%p573) target = $region108
        $region107: #{tpu_custom_call.1} parent=75 // pred_region
          %576 = dma.done [#allocation18], 2048
        $region108: #{tpu_custom_call.1} parent=75 // pred_fallthru
          _
        %s577 = sand.u32 %s57, 1
        %s578 = scalar_lea.sflag [#allocation6], %s577
        %s579 = sand.u32 %s57, 1
        %s580 = smul.addr %s579, 16
        %s581 = scalar_lea.vmem [#allocation5], %s580
        %p582 = pneg %p70
        %p583 = pneg %p67
        %s584 = sand.u32 %s37, 1
        %s585 = scalar_lea.sflag [#allocation9], %s584
        %s586 = sand.u32 %s83, 1
        %s587 = scalar_lea.vmem [#allocation8], %s586
        %p588 = pneg %p96
        %p589 = pneg %p93
        %p590 = pneg %p117
        %p591 = pneg %p114
        %p592 = pneg %p138
        %p593 = pneg %p135
        %p594 = pneg %p159
        %p595 = pneg %p156
        %p596 = pneg %p180
        %p597 = pneg %p177
        %p598 = pneg %p201
        %p599 = pneg %p198
        %p600 = pneg %p222
        %p601 = pneg %p219
        %p602 = pneg %p243
        %p603 = pneg %p240
        %p604 = pneg %p264
        %p605 = pneg %p261
        %p606 = pneg %p285
        %p607 = pneg %p282
        %p608 = pneg %p306
        %p609 = pneg %p303
        %p610 = pneg %p327
        %p611 = pneg %p324
        %p612 = pneg %p348
        %p613 = pneg %p345
        %p614 = pneg %p376
        %p615 = pneg %p373
        %s616 = sand.u32 %s363, 1
        %s617 = scalar_lea.sflag [#allocation7], %s616
        %s618 = sand.u32 %s363, 1
        %s619 = smul.addr %s618, 16
        %s620 = scalar_lea.vmem [#allocation19], %s619
        %s621 = smul.u32 4, %s42
        %p623 = scmp.eq.s32.totalorder %s42, 0
        // Predicated region
        $region109: #{tpu_custom_call.1} parent=75 // pred_check
          %p624 = pneg %p623
        $region110: #{tpu_custom_call.1} parent=75 // pred_check_branch
          %626 = sbr.rel (%p624) target = $region112
        $region111: #{tpu_custom_call.1} parent=75 // pred_region
          %v627 = vld [vmem:[%s540] sm:$0xf]
          %v628 = vld [vmem:[%s540 + $0x4] sm:$0xf]
          %v629 = vld [vmem:[%s540 + $0x8] sm:$0xf]
          %v630 = vld [vmem:[%s540 + $0xc] sm:$0xf]
          %v631 = vunpack.c.l.bf16 %v627
          %v632 = vunpack.c.l.bf16 %v628
          %v633 = vunpack.c.l.bf16 %v629
          %v634 = vunpack.c.l.bf16 %v630
          %635 = vadd.xlane.f32.xlu0 %v631
          %v636 = vpop.xlane.xlu0 %635
          %637 = vadd.xlane.f32.xlu0 %v632
          %v638 = vpop.xlane.xlu0 %637
          %639 = vadd.xlane.f32.xlu0 %v633
          %v640 = vpop.xlane.xlu0 %639
          %641 = vadd.xlane.f32.xlu0 %v634
          %v642 = vpop.xlane.xlu0 %641
          %v643 = vrcp.pop 128.0
          %v644 = vmul.f32 %v636, %v643
          %v645 = vmul.f32 %v638, %v643
          %v646 = vmul.f32 %v640, %v643
          %v647 = vmul.f32 %v642, %v643
          %v648 = vsub.f32 %v631, %v644
          %v649 = vsub.f32 %v632, %v645
          %v650 = vsub.f32 %v633, %v646
          %v651 = vsub.f32 %v634, %v647
          %v652 = vmul.f32 %v648, %v648
          %v653 = vmul.f32 %v649, %v649
          %v654 = vmul.f32 %v650, %v650
          %v655 = vmul.f32 %v651, %v651
          %656 = vadd.xlane.f32.xlu0 %v652
          %v657 = vpop.xlane.xlu0 %656
          %658 = vadd.xlane.f32.xlu0 %v653
          %v659 = vpop.xlane.xlu0 %658
          %660 = vadd.xlane.f32.xlu0 %v654
          %v661 = vpop.xlane.xlu0 %660
          %662 = vadd.xlane.f32.xlu0 %v655
          %v663 = vpop.xlane.xlu0 %662
          %v664 = vmul.f32 %v657, %v643
          %v665 = vmul.f32 %v659, %v643
          %v666 = vmul.f32 %v661, %v643
          %v667 = vmul.f32 %v663, %v643
          %v668 = vadd.f32 %v664, 1e-05
          %v669 = vadd.f32 %v665, 1e-05
          %v670 = vadd.f32 %v666, 1e-05
          %v671 = vadd.f32 %v667, 1e-05
          %v672 = vrsqrt.pop %v668
          %v673 = vrsqrt.pop %v669
          %v674 = vrsqrt.pop %v670
          %v675 = vrsqrt.pop %v671
          %v676 = vmul.f32 %v648, %v672
          %v677 = vmul.f32 %v649, %v673
          %v678 = vmul.f32 %v650, %v674
          %v679 = vmul.f32 %v651, %v675
          %v680 = vld [vmem:[%s2] sm:$0x1]
          %v682 = vlaneseq
          %v683 = vshrl.u32 %v682, 7
          %v684 = vsub.s32 0, %v683
          %v685 = vrot.slane %v680, %v684
          %v687 = vmul.f32 %v676, %v685
          %v688 = vmul.f32 %v677, %v685
          %v689 = vmul.f32 %v678, %v685
          %v690 = vmul.f32 %v679, %v685
          %v691 = vld [vmem:[%s3] sm:$0x1]
          %v693 = vlaneseq
          %v694 = vshrl.u32 %v693, 7
          %v695 = vsub.s32 0, %v694
          %v696 = vrot.slane %v691, %v695
          %v698 = vadd.f32 %v687, %v696
          %v699 = vadd.f32 %v688, %v696
          %v700 = vadd.f32 %v689, %v696
          %v701 = vadd.f32 %v690, %v696
          %v702 = vpack.c.bf16 %v699, %v698
          %v703 = vpack.c.bf16 %v701, %v700
          %v706 = vunpack.c.l.b16 %v702
          %v707 = vunpack.c.h.b16 %v702
          %v708 = vunpack.c.l.b16 %v703
          %v709 = vunpack.c.h.b16 %v703
          %v710 = vpack.c.b16 %v706, %v706
          %v711 = vpack.c.b16 %v707, %v707
          %v712 = vpack.c.b16 %v708, %v708
          %v713 = vpack.c.b16 %v709, %v709
          %718 = vst [vmem:[#allocation2] sm:$0xf] %v710
          %719 = vst [vmem:[#allocation2 + $0x4] sm:$0xf] %v711
          %720 = vst [vmem:[#allocation2 + $0x8] sm:$0xf] %v712
          %721 = vst [vmem:[#allocation2 + $0xc] sm:$0xf] %v713
          %v722 = vld [vmem:[#allocation11] sm:$0xf]
          %v723 = vld [vmem:[#allocation11 + $0x4] sm:$0xf]
          %v724 = vld [vmem:[#allocation11 + $0x8] sm:$0xf]
          %v725 = vld [vmem:[#allocation11 + $0xc] sm:$0xf]
          %v726 = vld [vmem:[#allocation11 + $0x10] sm:$0xf]
          %v727 = vld [vmem:[#allocation11 + $0x14] sm:$0xf]
          %v728 = vld [vmem:[#allocation11 + $0x18] sm:$0xf]
          %v729 = vld [vmem:[#allocation11 + $0x1c] sm:$0xf]
          %v730 = vld [vmem:[#allocation11 + $0x20] sm:$0xf]
          %v731 = vld [vmem:[#allocation11 + $0x24] sm:$0xf]
          %v732 = vld [vmem:[#allocation11 + $0x28] sm:$0xf]
          %v733 = vld [vmem:[#allocation11 + $0x2c] sm:$0xf]
          %v734 = vld [vmem:[#allocation11 + $0x30] sm:$0xf]
          %v735 = vld [vmem:[#allocation11 + $0x34] sm:$0xf]
          %v736 = vld [vmem:[#allocation11 + $0x38] sm:$0xf]
          %v737 = vld [vmem:[#allocation11 + $0x3c] sm:$0xf]
          %v754 = vunpack.c.l.b16 %v722
          %v755 = vunpack.c.l.b16 %v723
          %v756 = vunpack.c.l.b16 %v724
          %v757 = vunpack.c.l.b16 %v725
          %v758 = vunpack.c.l.b16 %v726
          %v759 = vunpack.c.l.b16 %v727
          %v760 = vunpack.c.l.b16 %v728
          %v761 = vunpack.c.l.b16 %v729
          %v762 = vunpack.c.l.b16 %v730
          %v763 = vunpack.c.l.b16 %v731
          %v764 = vunpack.c.l.b16 %v732
          %v765 = vunpack.c.l.b16 %v733
          %v766 = vunpack.c.l.b16 %v734
          %v767 = vunpack.c.l.b16 %v735
          %v768 = vunpack.c.l.b16 %v736
          %v769 = vunpack.c.l.b16 %v737
          %v770 = vpack.c.b16 %v755, %v754
          %v771 = vpack.c.b16 %v757, %v756
          %v772 = vpack.c.b16 %v759, %v758
          %v773 = vpack.c.b16 %v761, %v760
          %v774 = vpack.c.b16 %v763, %v762
          %v775 = vpack.c.b16 %v765, %v764
          %v776 = vpack.c.b16 %v767, %v766
          %v777 = vpack.c.b16 %v769, %v768
          %786 = vmatprep.subr.bf16.mxu0 0
          %787 = vmatpush1.bf16.msra.mxu0 %v777
          %788 = vmatprep.subr.bf16.mxu0 0
          %789 = vmatpush1.bf16.msra.mxu0 %v776
          %790 = vmatprep.subr.bf16.mxu0 0
          %791 = vmatpush1.bf16.msra.mxu0 %v775
          %792 = vmatprep.subr.bf16.mxu0 0
          %793 = vmatpush1.bf16.msra.mxu0 %v774
          %794 = vmatprep.subr.bf16.mxu0 0
          %795 = vmatpush1.bf16.msra.mxu0 %v773
          %796 = vmatprep.subr.bf16.mxu0 0
          %797 = vmatpush1.bf16.msra.mxu0 %v772
          %798 = vmatprep.subr.bf16.mxu0 0
          %799 = vmatpush1.bf16.msra.mxu0 %v771
          %800 = vmatprep.subr.bf16.mxu0 0
          %801 = vmatpush1.bf16.msra.mxu0 %v770
          %802 = vmatprep.subr.bf16.mxu0 0
          %803 = vmatpush2.bf16.msra.mxu0 0
          %804 = vmatprep.subr.bf16.mxu0 0
          %805 = vmatpush2.bf16.msra.mxu0 0
          %806 = vmatprep.subr.bf16.mxu0 0
          %807 = vmatpush2.bf16.msra.mxu0 0
          %808 = vmatprep.subr.bf16.mxu0 0
          %809 = vmatpush2.bf16.msra.mxu0 0
          %810 = vmatprep.subr.bf16.mxu0 0
          %811 = vmatpush2.bf16.msra.mxu0 0
          %812 = vmatprep.subr.bf16.mxu0 0
          %813 = vmatpush2.bf16.msra.mxu0 0
          %814 = vmatprep.subr.bf16.mxu0 0
          %815 = vmatpush2.bf16.msra.mxu0 0
          %816 = vmatprep.subr.bf16.mxu0 0
          %817 = vmatpush2.bf16.msra.mxu0 0
          %818 = vmatprep.mubr.bf16.mxu0 0
          %819 = vmatmul.mubr.bf16.gmra.mxu0 %v702
          %v820 = vpop.f32.mrf.mxu0
          %v821 = vadd.f32 0.0, %v820
          %v822 = vpop.f32.mrf.mxu0
          %v823 = vpop.f32.mrf.mxu0
          %v824 = vadd.f32 0.0, %v823
          %v825 = vpop.f32.mrf.mxu0
          %826 = vmatprep.mubr.bf16.mxu0 0
          %827 = vmatmul.mubr.bf16.gmra.mxu0 %v703
          %v828 = vpop.f32.mrf.mxu0
          %v829 = vadd.f32 0.0, %v828
          %v830 = vpop.f32.mrf.mxu0
          %v831 = vpop.f32.mrf.mxu0
          %v832 = vadd.f32 0.0, %v831
          %v833 = vpop.f32.mrf.mxu0
          %834 = vdwg.mxu0
          %v835 = vpack.c.bf16 %v824, %v821
          %v836 = vpack.c.bf16 %v832, %v829
          %v839 = vunpack.c.l.b16 %v835
          %v840 = vunpack.c.h.b16 %v835
          %v841 = vunpack.c.l.b16 %v836
          %v842 = vunpack.c.h.b16 %v836
          %v843 = vpack.c.b16 %v839, %v839
          %v844 = vpack.c.b16 %v840, %v840
          %v845 = vpack.c.b16 %v841, %v841
          %v846 = vpack.c.b16 %v842, %v842
          %851 = vst [vmem:[#allocation3] sm:$0xf] %v843
          %852 = vst [vmem:[#allocation3 + $0x4] sm:$0xf] %v844
          %853 = vst [vmem:[#allocation3 + $0x8] sm:$0xf] %v845
          %854 = vst [vmem:[#allocation3 + $0xc] sm:$0xf] %v846
          %v855 = vld [vmem:[#allocation13] sm:$0xf]
          %v856 = vld [vmem:[#allocation13 + $0x4] sm:$0xf]
          %v857 = vld [vmem:[#allocation13 + $0x8] sm:$0xf]
          %v858 = vld [vmem:[#allocation13 + $0xc] sm:$0xf]
          %v859 = vld [vmem:[#allocation13 + $0x10] sm:$0xf]
          %v860 = vld [vmem:[#allocation13 + $0x14] sm:$0xf]
          %v861 = vld [vmem:[#allocation13 + $0x18] sm:$0xf]
          %v862 = vld [vmem:[#allocation13 + $0x1c] sm:$0xf]
          %v863 = vld [vmem:[#allocation13 + $0x20] sm:$0xf]
          %v864 = vld [vmem:[#allocation13 + $0x24] sm:$0xf]
          %v865 = vld [vmem:[#allocation13 + $0x28] sm:$0xf]
          %v866 = vld [vmem:[#allocation13 + $0x2c] sm:$0xf]
          %v867 = vld [vmem:[#allocation13 + $0x30] sm:$0xf]
          %v868 = vld [vmem:[#allocation13 + $0x34] sm:$0xf]
          %v869 = vld [vmem:[#allocation13 + $0x38] sm:$0xf]
          %v870 = vld [vmem:[#allocation13 + $0x3c] sm:$0xf]
          %v887 = vunpack.c.l.b16 %v855
          %v888 = vunpack.c.l.b16 %v856
          %v889 = vunpack.c.l.b16 %v857
          %v890 = vunpack.c.l.b16 %v858
          %v891 = vunpack.c.l.b16 %v859
          %v892 = vunpack.c.l.b16 %v860
          %v893 = vunpack.c.l.b16 %v861
          %v894 = vunpack.c.l.b16 %v862
          %v895 = vunpack.c.l.b16 %v863
          %v896 = vunpack.c.l.b16 %v864
          %v897 = vunpack.c.l.b16 %v865
          %v898 = vunpack.c.l.b16 %v866
          %v899 = vunpack.c.l.b16 %v867
          %v900 = vunpack.c.l.b16 %v868
          %v901 = vunpack.c.l.b16 %v869
          %v902 = vunpack.c.l.b16 %v870
          %v903 = vpack.c.b16 %v888, %v887
          %v904 = vpack.c.b16 %v890, %v889
          %v905 = vpack.c.b16 %v892, %v891
          %v906 = vpack.c.b16 %v894, %v893
          %v907 = vpack.c.b16 %v896, %v895
          %v908 = vpack.c.b16 %v898, %v897
          %v909 = vpack.c.b16 %v900, %v899
          %v910 = vpack.c.b16 %v902, %v901
          %919 = vmatprep.subr.bf16.mxu0 0
          %920 = vmatpush1.bf16.msra.mxu0 %v910
          %921 = vmatprep.subr.bf16.mxu0 0
          %922 = vmatpush1.bf16.msra.mxu0 %v909
          %923 = vmatprep.subr.bf16.mxu0 0
          %924 = vmatpush1.bf16.msra.mxu0 %v908
          %925 = vmatprep.subr.bf16.mxu0 0
          %926 = vmatpush1.bf16.msra.mxu0 %v907
          %927 = vmatprep.subr.bf16.mxu0 0
          %928 = vmatpush1.bf16.msra.mxu0 %v906
          %929 = vmatprep.subr.bf16.mxu0 0
          %930 = vmatpush1.bf16.msra.mxu0 %v905
          %931 = vmatprep.subr.bf16.mxu0 0
          %932 = vmatpush1.bf16.msra.mxu0 %v904
          %933 = vmatprep.subr.bf16.mxu0 0
          %934 = vmatpush1.bf16.msra.mxu0 %v903
          %935 = vmatprep.subr.bf16.mxu0 0
          %936 = vmatpush2.bf16.msra.mxu0 0
          %937 = vmatprep.subr.bf16.mxu0 0
          %938 = vmatpush2.bf16.msra.mxu0 0
          %939 = vmatprep.subr.bf16.mxu0 0
          %940 = vmatpush2.bf16.msra.mxu0 0
          %941 = vmatprep.subr.bf16.mxu0 0
          %942 = vmatpush2.bf16.msra.mxu0 0
          %943 = vmatprep.subr.bf16.mxu0 0
          %944 = vmatpush2.bf16.msra.mxu0 0
          %945 = vmatprep.subr.bf16.mxu0 0
          %946 = vmatpush2.bf16.msra.mxu0 0
          %947 = vmatprep.subr.bf16.mxu0 0
          %948 = vmatpush2.bf16.msra.mxu0 0
          %949 = vmatprep.subr.bf16.mxu0 0
          %950 = vmatpush2.bf16.msra.mxu0 0
          %951 = vmatprep.mubr.bf16.mxu0 0
          %952 = vmatmul.mubr.bf16.gmra.mxu0 %v702
          %v953 = vpop.f32.mrf.mxu0
          %v954 = vadd.f32 0.0, %v953
          %v955 = vpop.f32.mrf.mxu0
          %v956 = vpop.f32.mrf.mxu0
          %v957 = vadd.f32 0.0, %v956
          %v958 = vpop.f32.mrf.mxu0
          %959 = vmatprep.mubr.bf16.mxu0 0
          %960 = vmatmul.mubr.bf16.gmra.mxu0 %v703
          %v961 = vpop.f32.mrf.mxu0
          %v962 = vadd.f32 0.0, %v961
          %v963 = vpop.f32.mrf.mxu0
          %v964 = vpop.f32.mrf.mxu0
          %v965 = vadd.f32 0.0, %v964
          %v966 = vpop.f32.mrf.mxu0
          %967 = vdwg.mxu0
          %v968 = vpack.c.bf16 %v957, %v954
          %v969 = vpack.c.bf16 %v965, %v962
          %v972 = vunpack.c.l.b16 %v968
          %v973 = vunpack.c.h.b16 %v968
          %v974 = vunpack.c.l.b16 %v969
          %v975 = vunpack.c.h.b16 %v969
          %v976 = vpack.c.b16 %v972, %v972
          %v977 = vpack.c.b16 %v973, %v973
          %v978 = vpack.c.b16 %v974, %v974
          %v979 = vpack.c.b16 %v975, %v975
          %984 = vst [vmem:[#allocation4] sm:$0xf] %v976
          %985 = vst [vmem:[#allocation4 + $0x4] sm:$0xf] %v977
          %986 = vst [vmem:[#allocation4 + $0x8] sm:$0xf] %v978
          %987 = vst [vmem:[#allocation4 + $0xc] sm:$0xf] %v979
        $region112: #{tpu_custom_call.1} parent=75 // pred_fallthru
          _
        %v988 = vld [vmem:[%s540] sm:$0xf]
        %v989 = vld [vmem:[%s540 + $0x4] sm:$0xf]
        %v990 = vld [vmem:[%s540 + $0x8] sm:$0xf]
        %v991 = vld [vmem:[%s540 + $0xc] sm:$0xf]
        %v992 = vunpack.c.l.bf16 %v988
        %v993 = vunpack.c.l.bf16 %v989
        %v994 = vunpack.c.l.bf16 %v990
        %v995 = vunpack.c.l.bf16 %v991
        %v996 = vld [vmem:[#allocation2] sm:$0xf]
        %v997 = vld [vmem:[#allocation2 + $0x4] sm:$0xf]
        %v998 = vld [vmem:[#allocation2 + $0x8] sm:$0xf]
        %v999 = vld [vmem:[#allocation2 + $0xc] sm:$0xf]
        %v1000 = vld [vmem:[#allocation10] sm:$0xf]
        %v1001 = vld [vmem:[#allocation10 + $0x4] sm:$0xf]
        %v1002 = vld [vmem:[#allocation10 + $0x8] sm:$0xf]
        %v1003 = vld [vmem:[#allocation10 + $0xc] sm:$0xf]
        %v1004 = vld [vmem:[#allocation10 + $0x10] sm:$0xf]
        %v1005 = vld [vmem:[#allocation10 + $0x14] sm:$0xf]
        %v1006 = vld [vmem:[#allocation10 + $0x18] sm:$0xf]
        %v1007 = vld [vmem:[#allocation10 + $0x1c] sm:$0xf]
        %v1008 = vld [vmem:[#allocation10 + $0x20] sm:$0xf]
        %v1009 = vld [vmem:[#allocation10 + $0x24] sm:$0xf]
        %v1010 = vld [vmem:[#allocation10 + $0x28] sm:$0xf]
        %v1011 = vld [vmem:[#allocation10 + $0x2c] sm:$0xf]
        %v1012 = vld [vmem:[#allocation10 + $0x30] sm:$0xf]
        %v1013 = vld [vmem:[#allocation10 + $0x34] sm:$0xf]
        %v1014 = vld [vmem:[#allocation10 + $0x38] sm:$0xf]
        %v1015 = vld [vmem:[#allocation10 + $0x3c] sm:$0xf]
        %v1020 = vunpack.c.l.b16 %v996
        %v1021 = vunpack.c.l.b16 %v997
        %v1022 = vunpack.c.l.b16 %v998
        %v1023 = vunpack.c.l.b16 %v999
        %v1024 = vpack.c.b16 %v1021, %v1020
        %v1025 = vpack.c.b16 %v1023, %v1022
        %v1044 = vunpack.c.l.b16 %v1000
        %v1045 = vunpack.c.l.b16 %v1001
        %v1046 = vunpack.c.l.b16 %v1002
        %v1047 = vunpack.c.l.b16 %v1003
        %v1048 = vunpack.c.l.b16 %v1004
        %v1049 = vunpack.c.l.b16 %v1005
        %v1050 = vunpack.c.l.b16 %v1006
        %v1051 = vunpack.c.l.b16 %v1007
        %v1052 = vunpack.c.l.b16 %v1008
        %v1053 = vunpack.c.l.b16 %v1009
        %v1054 = vunpack.c.l.b16 %v1010
        %v1055 = vunpack.c.l.b16 %v1011
        %v1056 = vunpack.c.l.b16 %v1012
        %v1057 = vunpack.c.l.b16 %v1013
        %v1058 = vunpack.c.l.b16 %v1014
        %v1059 = vunpack.c.l.b16 %v1015
        %v1060 = vpack.c.b16 %v1045, %v1044
        %v1061 = vpack.c.b16 %v1047, %v1046
        %v1062 = vpack.c.b16 %v1049, %v1048
        %v1063 = vpack.c.b16 %v1051, %v1050
        %v1064 = vpack.c.b16 %v1053, %v1052
        %v1065 = vpack.c.b16 %v1055, %v1054
        %v1066 = vpack.c.b16 %v1057, %v1056
        %v1067 = vpack.c.b16 %v1059, %v1058
        %1076 = vmatprep.subr.bf16.mxu0 0
        %1077 = vmatpush1.bf16.msra.mxu0 %v1067
        %1078 = vmatprep.subr.bf16.mxu0 0
        %1079 = vmatpush1.bf16.msra.mxu0 %v1066
        %1080 = vmatprep.subr.bf16.mxu0 0
        %1081 = vmatpush1.bf16.msra.mxu0 %v1065
        %1082 = vmatprep.subr.bf16.mxu0 0
        %1083 = vmatpush1.bf16.msra.mxu0 %v1064
        %1084 = vmatprep.subr.bf16.mxu0 0
        %1085 = vmatpush1.bf16.msra.mxu0 %v1063
        %1086 = vmatprep.subr.bf16.mxu0 0
        %1087 = vmatpush1.bf16.msra.mxu0 %v1062
        %1088 = vmatprep.subr.bf16.mxu0 0
        %1089 = vmatpush1.bf16.msra.mxu0 %v1061
        %1090 = vmatprep.subr.bf16.mxu0 0
        %1091 = vmatpush1.bf16.msra.mxu0 %v1060
        %1092 = vmatprep.subr.bf16.mxu0 0
        %1093 = vmatpush2.bf16.msra.mxu0 0
        %1094 = vmatprep.subr.bf16.mxu0 0
        %1095 = vmatpush2.bf16.msra.mxu0 0
        %1096 = vmatprep.subr.bf16.mxu0 0
        %1097 = vmatpush2.bf16.msra.mxu0 0
        %1098 = vmatprep.subr.bf16.mxu0 0
        %1099 = vmatpush2.bf16.msra.mxu0 0
        %1100 = vmatprep.subr.bf16.mxu0 0
        %1101 = vmatpush2.bf16.msra.mxu0 0
        %1102 = vmatprep.subr.bf16.mxu0 0
        %1103 = vmatpush2.bf16.msra.mxu0 0
        %1104 = vmatprep.subr.bf16.mxu0 0
        %1105 = vmatpush2.bf16.msra.mxu0 0
        %1106 = vmatprep.subr.bf16.mxu0 0
        %1107 = vmatpush2.bf16.msra.mxu0 0
        %1108 = vmatprep.mubr.bf16.mxu0 0
        %1109 = vmatmul.mubr.bf16.gmra.mxu0 %v1024
        %v1110 = vpop.f32.mrf.mxu0
        %v1111 = vadd.f32 0.0, %v1110
        %v1112 = vpop.f32.mrf.mxu0
        %v1113 = vpop.f32.mrf.mxu0
        %v1114 = vadd.f32 0.0, %v1113
        %v1115 = vpop.f32.mrf.mxu0
        %1116 = vmatprep.mubr.bf16.mxu0 0
        %1117 = vmatmul.mubr.bf16.gmra.mxu0 %v1025
        %v1118 = vpop.f32.mrf.mxu0
        %v1119 = vadd.f32 0.0, %v1118
        %v1120 = vpop.f32.mrf.mxu0
        %v1121 = vpop.f32.mrf.mxu0
        %v1122 = vadd.f32 0.0, %v1121
        %v1123 = vpop.f32.mrf.mxu0
        %1124 = vdwg.mxu0
        %v1125 = vmul.f32 %v1111, 0.088388346
        %v1126 = vmul.f32 %v1114, 0.088388346
        %v1127 = vmul.f32 %v1119, 0.088388346
        %v1128 = vmul.f32 %v1122, 0.088388346
        %v1129 = vpack.c.bf16 %v1126, %v1125
        %v1130 = vpack.c.bf16 %v1128, %v1127
        %v1131 = vld [vmem:[#allocation3] sm:$0xf]
        %v1132 = vld [vmem:[#allocation3 + $0x4] sm:$0xf]
        %v1133 = vld [vmem:[#allocation3 + $0x8] sm:$0xf]
        %v1134 = vld [vmem:[#allocation3 + $0xc] sm:$0xf]
        %v1135 = vld [vmem:[%s548] sm:$0x1]
        %v1137 = vlaneseq
        %v1138 = vshrl.u32 %v1137, 7
        %v1139 = vsub.s32 0, %v1138
        %v1140 = vrot.slane %v1135, %v1139
        %v1146 = vunpack.c.l.b16 %v1131
        %v1147 = vunpack.c.l.b16 %v1132
        %v1148 = vunpack.c.l.b16 %v1133
        %v1149 = vunpack.c.l.b16 %v1134
        %v1150 = vpack.c.b16 %v1147, %v1146
        %v1151 = vpack.c.b16 %v1149, %v1148
        %1154 = vmatprep.subr.bf16.mxu0 0
        %1155 = vmatpush1.bf16.xpose.msra.mxu0 0
        %1156 = vmatprep.subr.bf16.mxu0 0
        %1157 = vmatpush1.bf16.xpose.msra.mxu0 0
        %1158 = vmatprep.subr.bf16.mxu0 0
        %1159 = vmatpush1.bf16.xpose.msra.mxu0 0
        %1160 = vmatprep.subr.bf16.mxu0 0
        %1161 = vmatpush1.bf16.xpose.msra.mxu0 0
        %1162 = vmatprep.subr.bf16.mxu0 0
        %1163 = vmatpush1.bf16.xpose.msra.mxu0 0
        %1164 = vmatprep.subr.bf16.mxu0 0
        %1165 = vmatpush1.bf16.xpose.msra.mxu0 0
        %1166 = vmatprep.subr.bf16.mxu0 0
        %1167 = vmatpush1.bf16.xpose.msra.mxu0 %v1151
        %1168 = vmatprep.subr.bf16.mxu0 0
        %1169 = vmatpush1.bf16.xpose.msra.mxu0 %v1150
        %1170 = vmatprep.subr.bf16.mxu0 0
        %1171 = vmatpush2.bf16.xpose.msra.mxu0 0
        %1172 = vmatprep.subr.bf16.mxu0 0
        %1173 = vmatpush2.bf16.xpose.msra.mxu0 0
        %1174 = vmatprep.subr.bf16.mxu0 0
        %1175 = vmatpush2.bf16.xpose.msra.mxu0 0
        %1176 = vmatprep.subr.bf16.mxu0 0
        %1177 = vmatpush2.bf16.xpose.msra.mxu0 0
        %1178 = vmatprep.subr.bf16.mxu0 0
        %1179 = vmatpush2.bf16.xpose.msra.mxu0 0
        %1180 = vmatprep.subr.bf16.mxu0 0
        %1181 = vmatpush2.bf16.xpose.msra.mxu0 0
        %1182 = vmatprep.subr.bf16.mxu0 0
        %1183 = vmatpush2.bf16.xpose.msra.mxu0 0
        %1184 = vmatprep.subr.bf16.mxu0 0
        %1185 = vmatpush2.bf16.xpose.msra.mxu0 0
        %1186 = vmatprep.mubr.bf16.mxu0 0
        %1187 = vmatmul.mubr.bf16.gmra.mxu0 %v1129
        %v1188 = vpop.f32.mrf.mxu0
        %v1189 = vadd.f32 %v1140, %v1188
        %v1190 = vpop.f32.mrf.mxu0
        %v1191 = vpop.f32.mrf.mxu0
        %v1192 = vadd.f32 %v1140, %v1191
        %v1193 = vpop.f32.mrf.mxu0
        %1194 = vmatprep.mubr.bf16.mxu0 0
        %1195 = vmatmul.mubr.bf16.gmra.mxu0 %v1130
        %v1196 = vpop.f32.mrf.mxu0
        %v1197 = vadd.f32 %v1140, %v1196
        %v1198 = vpop.f32.mrf.mxu0
        %v1199 = vpop.f32.mrf.mxu0
        %v1200 = vadd.f32 %v1140, %v1199
        %v1201 = vpop.f32.mrf.mxu0
        %1202 = vdwg.mxu0
        %vm1203 = vcmask 261120
        %v1204 = vsel %vm1203, %v1189, -inf
        %1205 = vmax.xlane.f32.xlu0 %v1204
        %v1206 = vpop.xlane.xlu0 %1205
        %v1207 = vsel %vm1203, %v1192, -inf
        %1208 = vmax.xlane.f32.xlu0 %v1207
        %v1209 = vpop.xlane.xlu0 %1208
        %v1210 = vsel %vm1203, %v1197, -inf
        %1211 = vmax.xlane.f32.xlu0 %v1210
        %v1212 = vpop.xlane.xlu0 %1211
        %v1213 = vsel %vm1203, %v1200, -inf
        %1214 = vmax.xlane.f32.xlu0 %v1213
        %v1215 = vpop.xlane.xlu0 %1214
        %v1216 = vsub.f32 %v1189, %v1206
        %v1217 = vsub.f32 %v1192, %v1209
        %v1218 = vsub.f32 %v1197, %v1212
        %v1219 = vsub.f32 %v1200, %v1215
        %v1220 = vmul.f32 %v1216, 1.442695
        %v1221 = vpow.pop %v1220
        %v1222 = vmul.f32 %v1217, 1.442695
        %v1223 = vpow.pop %v1222
        %v1224 = vmul.f32 %v1218, 1.442695
        %v1225 = vpow.pop %v1224
        %v1226 = vmul.f32 %v1219, 1.442695
        %v1227 = vpow.pop %v1226
        %v1228 = vsel %vm1203, %v1221, 0.0
        %1229 = vadd.xlane.f32.xlu0 %v1228
        %v1230 = vpop.xlane.xlu0 %1229
        %v1231 = vsel %vm1203, %v1223, 0.0
        %1232 = vadd.xlane.f32.xlu0 %v1231
        %v1233 = vpop.xlane.xlu0 %1232
        %v1234 = vsel %vm1203, %v1225, 0.0
        %1235 = vadd.xlane.f32.xlu0 %v1234
        %v1236 = vpop.xlane.xlu0 %1235
        %v1237 = vsel %vm1203, %v1227, 0.0
        %1238 = vadd.xlane.f32.xlu0 %v1237
        %v1239 = vpop.xlane.xlu0 %1238
        %v1240 = vpack.c.bf16 %v1223, %v1221
        %v1241 = vpack.c.bf16 %v1227, %v1225
        %v1242 = vld [vmem:[#allocation4] sm:$0xf]
        %v1243 = vld [vmem:[#allocation4 + $0x4] sm:$0xf]
        %v1244 = vld [vmem:[#allocation4 + $0x8] sm:$0xf]
        %v1245 = vld [vmem:[#allocation4 + $0xc] sm:$0xf]
        %v1250 = vunpack.c.l.b16 %v1242
        %v1251 = vunpack.c.l.b16 %v1243
        %v1252 = vunpack.c.l.b16 %v1244
        %v1253 = vunpack.c.l.b16 %v1245
        %v1254 = vpack.c.b16 %v1251, %v1250
        %v1255 = vpack.c.b16 %v1253, %v1252
        %v1259 = vsel %vm1203, %v1240, 0
        %v1262 = vsel %vm1203, %v1241, 0
        %1264 = vmatprep.subr.bf16.mxu0 0
        %1265 = vmatpush1.bf16.msra.mxu0 0
        %1266 = vmatprep.subr.bf16.mxu0 0
        %1267 = vmatpush1.bf16.msra.mxu0 0
        %1268 = vmatprep.subr.bf16.mxu0 0
        %1269 = vmatpush1.bf16.msra.mxu0 0
        %1270 = vmatprep.subr.bf16.mxu0 0
        %1271 = vmatpush1.bf16.msra.mxu0 0
        %1272 = vmatprep.subr.bf16.mxu0 0
        %1273 = vmatpush1.bf16.msra.mxu0 0
        %1274 = vmatprep.subr.bf16.mxu0 0
        %1275 = vmatpush1.bf16.msra.mxu0 0
        %1276 = vmatprep.subr.bf16.mxu0 0
        %1277 = vmatpush1.bf16.msra.mxu0 %v1255
        %1278 = vmatprep.subr.bf16.mxu0 0
        %1279 = vmatpush1.bf16.msra.mxu0 %v1254
        %1280 = vmatprep.subr.bf16.mxu0 0
        %1281 = vmatpush2.bf16.msra.mxu0 0
        %1282 = vmatprep.subr.bf16.mxu0 0
        %1283 = vmatpush2.bf16.msra.mxu0 0
        %1284 = vmatprep.subr.bf16.mxu0 0
        %1285 = vmatpush2.bf16.msra.mxu0 0
        %1286 = vmatprep.subr.bf16.mxu0 0
        %1287 = vmatpush2.bf16.msra.mxu0 0
        %1288 = vmatprep.subr.bf16.mxu0 0
        %1289 = vmatpush2.bf16.msra.mxu0 0
        %1290 = vmatprep.subr.bf16.mxu0 0
        %1291 = vmatpush2.bf16.msra.mxu0 0
        %1292 = vmatprep.subr.bf16.mxu0 0
        %1293 = vmatpush2.bf16.msra.mxu0 0
        %1294 = vmatprep.subr.bf16.mxu0 0
        %1295 = vmatpush2.bf16.msra.mxu0 0
        %1296 = vmatprep.mubr.bf16.mxu0 0
        %1297 = vmatmul.mubr.bf16.gmra.mxu0 %v1259
        %v1298 = vpop.f32.mrf.mxu0
        %v1299 = vadd.f32 0.0, %v1298
        %v1300 = vpop.f32.mrf.mxu0
        %v1301 = vpop.f32.mrf.mxu0
        %v1302 = vadd.f32 0.0, %v1301
        %v1303 = vpop.f32.mrf.mxu0
        %1304 = vmatprep.mubr.bf16.mxu0 0
        %1305 = vmatmul.mubr.bf16.gmra.mxu0 %v1262
        %v1306 = vpop.f32.mrf.mxu0
        %v1307 = vadd.f32 0.0, %v1306
        %v1308 = vpop.f32.mrf.mxu0
        %v1309 = vpop.f32.mrf.mxu0
        %v1310 = vadd.f32 0.0, %v1309
        %v1311 = vpop.f32.mrf.mxu0
        %1312 = vdwg.mxu0
        %v1313 = vrcp.pop %v1230
        %v1314 = vrcp.pop %v1233
        %v1315 = vrcp.pop %v1236
        %v1316 = vrcp.pop %v1239
        %v1317 = vmul.f32 %v1299, %v1313
        %v1318 = vmul.f32 %v1302, %v1314
        %v1319 = vmul.f32 %v1307, %v1315
        %v1320 = vmul.f32 %v1310, %v1316
        %v1321 = vpack.c.bf16 %v1318, %v1317
        %v1322 = vpack.c.bf16 %v1320, %v1319
        %v1323 = vld [vmem:[#allocation14] sm:$0xf]
        %v1324 = vld [vmem:[#allocation14 + $0x4] sm:$0xf]
        %v1325 = vld [vmem:[#allocation14 + $0x8] sm:$0xf]
        %v1326 = vld [vmem:[#allocation14 + $0xc] sm:$0xf]
        %v1327 = vld [vmem:[#allocation14 + $0x10] sm:$0xf]
        %v1328 = vld [vmem:[#allocation14 + $0x14] sm:$0xf]
        %v1329 = vld [vmem:[#allocation14 + $0x18] sm:$0xf]
        %v1330 = vld [vmem:[#allocation14 + $0x1c] sm:$0xf]
        %v1331 = vld [vmem:[#allocation14 + $0x20] sm:$0xf]
        %v1332 = vld [vmem:[#allocation14 + $0x24] sm:$0xf]
        %v1333 = vld [vmem:[#allocation14 + $0x28] sm:$0xf]
        %v1334 = vld [vmem:[#allocation14 + $0x2c] sm:$0xf]
        %v1335 = vld [vmem:[#allocation14 + $0x30] sm:$0xf]
        %v1336 = vld [vmem:[#allocation14 + $0x34] sm:$0xf]
        %v1337 = vld [vmem:[#allocation14 + $0x38] sm:$0xf]
        %v1338 = vld [vmem:[#allocation14 + $0x3c] sm:$0xf]
        %v1355 = vunpack.c.l.b16 %v1323
        %v1356 = vunpack.c.l.b16 %v1324
        %v1357 = vunpack.c.l.b16 %v1325
        %v1358 = vunpack.c.l.b16 %v1326
        %v1359 = vunpack.c.l.b16 %v1327
        %v1360 = vunpack.c.l.b16 %v1328
        %v1361 = vunpack.c.l.b16 %v1329
        %v1362 = vunpack.c.l.b16 %v1330
        %v1363 = vunpack.c.l.b16 %v1331
        %v1364 = vunpack.c.l.b16 %v1332
        %v1365 = vunpack.c.l.b16 %v1333
        %v1366 = vunpack.c.l.b16 %v1334
        %v1367 = vunpack.c.l.b16 %v1335
        %v1368 = vunpack.c.l.b16 %v1336
        %v1369 = vunpack.c.l.b16 %v1337
        %v1370 = vunpack.c.l.b16 %v1338
        %v1371 = vpack.c.b16 %v1356, %v1355
        %v1372 = vpack.c.b16 %v1358, %v1357
        %v1373 = vpack.c.b16 %v1360, %v1359
        %v1374 = vpack.c.b16 %v1362, %v1361
        %v1375 = vpack.c.b16 %v1364, %v1363
        %v1376 = vpack.c.b16 %v1366, %v1365
        %v1377 = vpack.c.b16 %v1368, %v1367
        %v1378 = vpack.c.b16 %v1370, %v1369
        %1387 = vmatprep.subr.bf16.mxu0 0
        %1388 = vmatpush1.bf16.msra.mxu0 %v1378
        %1389 = vmatprep.subr.bf16.mxu0 0
        %1390 = vmatpush1.bf16.msra.mxu0 %v1377
        %1391 = vmatprep.subr.bf16.mxu0 0
        %1392 = vmatpush1.bf16.msra.mxu0 %v1376
        %1393 = vmatprep.subr.bf16.mxu0 0
        %1394 = vmatpush1.bf16.msra.mxu0 %v1375
        %1395 = vmatprep.subr.bf16.mxu0 0
        %1396 = vmatpush1.bf16.msra.mxu0 %v1374
        %1397 = vmatprep.subr.bf16.mxu0 0
        %1398 = vmatpush1.bf16.msra.mxu0 %v1373
        %1399 = vmatprep.subr.bf16.mxu0 0
        %1400 = vmatpush1.bf16.msra.mxu0 %v1372
        %1401 = vmatprep.subr.bf16.mxu0 0
        %1402 = vmatpush1.bf16.msra.mxu0 %v1371
        %1403 = vmatprep.subr.bf16.mxu0 0
        %1404 = vmatpush2.bf16.msra.mxu0 0
        %1405 = vmatprep.subr.bf16.mxu0 0
        %1406 = vmatpush2.bf16.msra.mxu0 0
        %1407 = vmatprep.subr.bf16.mxu0 0
        %1408 = vmatpush2.bf16.msra.mxu0 0
        %1409 = vmatprep.subr.bf16.mxu0 0
        %1410 = vmatpush2.bf16.msra.mxu0 0
        %1411 = vmatprep.subr.bf16.mxu0 0
        %1412 = vmatpush2.bf16.msra.mxu0 0
        %1413 = vmatprep.subr.bf16.mxu0 0
        %1414 = vmatpush2.bf16.msra.mxu0 0
        %1415 = vmatprep.subr.bf16.mxu0 0
        %1416 = vmatpush2.bf16.msra.mxu0 0
        %1417 = vmatprep.subr.bf16.mxu0 0
        %1418 = vmatpush2.bf16.msra.mxu0 0
        %1419 = vmatprep.mubr.bf16.mxu0 0
        %1420 = vmatmul.mubr.bf16.gmra.mxu0 %v1321
        %v1421 = vpop.f32.mrf.mxu0
        %v1422 = vadd.f32 0.0, %v1421
        %v1423 = vpop.f32.mrf.mxu0
        %v1424 = vpop.f32.mrf.mxu0
        %v1425 = vadd.f32 0.0, %v1424
        %v1426 = vpop.f32.mrf.mxu0
        %1427 = vmatprep.mubr.bf16.mxu0 0
        %1428 = vmatmul.mubr.bf16.gmra.mxu0 %v1322
        %v1429 = vpop.f32.mrf.mxu0
        %v1430 = vadd.f32 0.0, %v1429
        %v1431 = vpop.f32.mrf.mxu0
        %v1432 = vpop.f32.mrf.mxu0
        %v1433 = vadd.f32 0.0, %v1432
        %v1434 = vpop.f32.mrf.mxu0
        %1435 = vdwg.mxu0
        %v1436 = vadd.f32 %v992, %v1422
        %v1437 = vadd.f32 %v993, %v1425
        %v1438 = vadd.f32 %v994, %v1430
        %v1439 = vadd.f32 %v995, %v1433
        %1440 = vadd.xlane.f32.xlu0 %v1436
        %v1441 = vpop.xlane.xlu0 %1440
        %1442 = vadd.xlane.f32.xlu0 %v1437
        %v1443 = vpop.xlane.xlu0 %1442
        %1444 = vadd.xlane.f32.xlu0 %v1438
        %v1445 = vpop.xlane.xlu0 %1444
        %1446 = vadd.xlane.f32.xlu0 %v1439
        %v1447 = vpop.xlane.xlu0 %1446
        %v1448 = vrcp.pop 128.0
        %v1449 = vmul.f32 %v1441, %v1448
        %v1450 = vmul.f32 %v1443, %v1448
        %v1451 = vmul.f32 %v1445, %v1448
        %v1452 = vmul.f32 %v1447, %v1448
        %v1453 = vsub.f32 %v1436, %v1449
        %v1454 = vsub.f32 %v1437, %v1450
        %v1455 = vsub.f32 %v1438, %v1451
        %v1456 = vsub.f32 %v1439, %v1452
        %v1457 = vmul.f32 %v1453, %v1453
        %v1458 = vmul.f32 %v1454, %v1454
        %v1459 = vmul.f32 %v1455, %v1455
        %v1460 = vmul.f32 %v1456, %v1456
        %1461 = vadd.xlane.f32.xlu0 %v1457
        %v1462 = vpop.xlane.xlu0 %1461
        %1463 = vadd.xlane.f32.xlu0 %v1458
        %v1464 = vpop.xlane.xlu0 %1463
        %1465 = vadd.xlane.f32.xlu0 %v1459
        %v1466 = vpop.xlane.xlu0 %1465
        %1467 = vadd.xlane.f32.xlu0 %v1460
        %v1468 = vpop.xlane.xlu0 %1467
        %v1469 = vmul.f32 %v1462, %v1448
        %v1470 = vmul.f32 %v1464, %v1448
        %v1471 = vmul.f32 %v1466, %v1448
        %v1472 = vmul.f32 %v1468, %v1448
        %v1473 = vadd.f32 %v1469, 1e-05
        %v1474 = vadd.f32 %v1470, 1e-05
        %v1475 = vadd.f32 %v1471, 1e-05
        %v1476 = vadd.f32 %v1472, 1e-05
        %v1477 = vrsqrt.pop %v1473
        %v1478 = vrsqrt.pop %v1474
        %v1479 = vrsqrt.pop %v1475
        %v1480 = vrsqrt.pop %v1476
        %v1481 = vmul.f32 %v1453, %v1477
        %v1482 = vmul.f32 %v1454, %v1478
        %v1483 = vmul.f32 %v1455, %v1479
        %v1484 = vmul.f32 %v1456, %v1480
        %v1485 = vld [vmem:[%s8] sm:$0x1]
        %v1487 = vlaneseq
        %v1488 = vshrl.u32 %v1487, 7
        %v1489 = vsub.s32 0, %v1488
        %v1490 = vrot.slane %v1485, %v1489
        %v1492 = vmul.f32 %v1481, %v1490
        %v1493 = vmul.f32 %v1482, %v1490
        %v1494 = vmul.f32 %v1483, %v1490
        %v1495 = vmul.f32 %v1484, %v1490
        %v1496 = vld [vmem:[%s9] sm:$0x1]
        %v1498 = vlaneseq
        %v1499 = vshrl.u32 %v1498, 7
        %v1500 = vsub.s32 0, %v1499
        %v1501 = vrot.slane %v1496, %v1500
        %v1503 = vadd.f32 %v1492, %v1501
        %v1504 = vadd.f32 %v1493, %v1501
        %v1505 = vadd.f32 %v1494, %v1501
        %v1506 = vadd.f32 %v1495, %v1501
        %v1507 = vpack.c.bf16 %v1504, %v1503
        %v1508 = vpack.c.bf16 %v1506, %v1505
        %v1509 = vld [vmem:[#allocation16] sm:$0xff]
        %v1510 = vld [vmem:[#allocation16 + $0x8] sm:$0xff]
        %v1511 = vld [vmem:[#allocation16 + $0x10] sm:$0xff]
        %v1512 = vld [vmem:[#allocation16 + $0x18] sm:$0xff]
        %v1513 = vld [vmem:[#allocation16 + $0x20] sm:$0xff]
        %v1514 = vld [vmem:[#allocation16 + $0x28] sm:$0xff]
        %v1515 = vld [vmem:[#allocation16 + $0x30] sm:$0xff]
        %v1516 = vld [vmem:[#allocation16 + $0x38] sm:$0xff]
        %v1517 = vld [vmem:[#allocation16 + $0x40] sm:$0xff]
        %v1518 = vld [vmem:[#allocation16 + $0x48] sm:$0xff]
        %v1519 = vld [vmem:[#allocation16 + $0x50] sm:$0xff]
        %v1520 = vld [vmem:[#allocation16 + $0x58] sm:$0xff]
        %v1521 = vld [vmem:[#allocation16 + $0x60] sm:$0xff]
        %v1522 = vld [vmem:[#allocation16 + $0x68] sm:$0xff]
        %v1523 = vld [vmem:[#allocation16 + $0x70] sm:$0xff]
        %v1524 = vld [vmem:[#allocation16 + $0x78] sm:$0xff]
        %v1525 = vld [vmem:[%s11] sm:$0x3]
        %v1527 = vlaneseq
        %v1528 = vshrl.u32 %v1527, 7
        %v1529 = vsub.s32 0, %v1528
        %v1530 = vrot.slane %v1525, %v1529
        %v1531 = vlaneseq
        %v1532 = vshrl.u32 %v1531, 7
        %v1533 = vsub.s32 1, %v1532
        %v1534 = vrot.slane %v1525, %v1533
        %v1553 = vunpack.c.l.b16 %v1509
        %v1554 = vunpack.c.h.b16 %v1509
        %v1555 = vunpack.c.l.b16 %v1510
        %v1556 = vunpack.c.h.b16 %v1510
        %v1557 = vunpack.c.l.b16 %v1511
        %v1558 = vunpack.c.h.b16 %v1511
        %v1559 = vunpack.c.l.b16 %v1512
        %v1560 = vunpack.c.h.b16 %v1512
        %v1561 = vunpack.c.l.b16 %v1513
        %v1562 = vunpack.c.h.b16 %v1513
        %v1563 = vunpack.c.l.b16 %v1514
        %v1564 = vunpack.c.h.b16 %v1514
        %v1565 = vunpack.c.l.b16 %v1515
        %v1566 = vunpack.c.h.b16 %v1515
        %v1567 = vunpack.c.l.b16 %v1516
        %v1568 = vunpack.c.h.b16 %v1516
        %v1569 = vunpack.c.l.b16 %v1517
        %v1570 = vunpack.c.h.b16 %v1517
        %v1571 = vunpack.c.l.b16 %v1518
        %v1572 = vunpack.c.h.b16 %v1518
        %v1573 = vunpack.c.l.b16 %v1519
        %v1574 = vunpack.c.h.b16 %v1519
        %v1575 = vunpack.c.l.b16 %v1520
        %v1576 = vunpack.c.h.b16 %v1520
        %v1577 = vunpack.c.l.b16 %v1521
        %v1578 = vunpack.c.h.b16 %v1521
        %v1579 = vunpack.c.l.b16 %v1522
        %v1580 = vunpack.c.h.b16 %v1522
        %v1581 = vunpack.c.l.b16 %v1523
        %v1582 = vunpack.c.h.b16 %v1523
        %v1583 = vunpack.c.l.b16 %v1524
        %v1584 = vunpack.c.h.b16 %v1524
        %v1585 = vpack.c.b16 %v1555, %v1553
        %v1586 = vpack.c.b16 %v1556, %v1554
        %v1587 = vpack.c.b16 %v1559, %v1557
        %v1588 = vpack.c.b16 %v1560, %v1558
        %v1589 = vpack.c.b16 %v1563, %v1561
        %v1590 = vpack.c.b16 %v1564, %v1562
        %v1591 = vpack.c.b16 %v1567, %v1565
        %v1592 = vpack.c.b16 %v1568, %v1566
        %v1593 = vpack.c.b16 %v1571, %v1569
        %v1594 = vpack.c.b16 %v1572, %v1570
        %v1595 = vpack.c.b16 %v1575, %v1573
        %v1596 = vpack.c.b16 %v1576, %v1574
        %v1597 = vpack.c.b16 %v1579, %v1577
        %v1598 = vpack.c.b16 %v1580, %v1578
        %v1599 = vpack.c.b16 %v1583, %v1581
        %v1600 = vpack.c.b16 %v1584, %v1582
        %1617 = vmatprep.subr.bf16.mxu0 %v1600
        %1618 = vmatpush1.bf16.msra.mxu0 %v1599
        %1619 = vmatprep.subr.bf16.mxu0 %v1598
        %1620 = vmatpush1.bf16.msra.mxu0 %v1597
        %1621 = vmatprep.subr.bf16.mxu0 %v1596
        %1622 = vmatpush1.bf16.msra.mxu0 %v1595
        %1623 = vmatprep.subr.bf16.mxu0 %v1594
        %1624 = vmatpush1.bf16.msra.mxu0 %v1593
        %1625 = vmatprep.subr.bf16.mxu0 %v1592
        %1626 = vmatpush1.bf16.msra.mxu0 %v1591
        %1627 = vmatprep.subr.bf16.mxu0 %v1590
        %1628 = vmatpush1.bf16.msra.mxu0 %v1589
        %1629 = vmatprep.subr.bf16.mxu0 %v1588
        %1630 = vmatpush1.bf16.msra.mxu0 %v1587
        %1631 = vmatprep.subr.bf16.mxu0 %v1586
        %1632 = vmatpush1.bf16.msra.mxu0 %v1585
        %1633 = vmatprep.subr.bf16.mxu0 0
        %1634 = vmatpush2.bf16.msra.mxu0 0
        %1635 = vmatprep.subr.bf16.mxu0 0
        %1636 = vmatpush2.bf16.msra.mxu0 0
        %1637 = vmatprep.subr.bf16.mxu0 0
        %1638 = vmatpush2.bf16.msra.mxu0 0
        %1639 = vmatprep.subr.bf16.mxu0 0
        %1640 = vmatpush2.bf16.msra.mxu0 0
        %1641 = vmatprep.subr.bf16.mxu0 0
        %1642 = vmatpush2.bf16.msra.mxu0 0
        %1643 = vmatprep.subr.bf16.mxu0 0
        %1644 = vmatpush2.bf16.msra.mxu0 0
        %1645 = vmatprep.subr.bf16.mxu0 0
        %1646 = vmatpush2.bf16.msra.mxu0 0
        %1647 = vmatprep.subr.bf16.mxu0 0
        %1648 = vmatpush2.bf16.msra.mxu0 0
        %1649 = vmatprep.mubr.bf16.mxu0 0
        %1650 = vmatmul.mubr.bf16.gmra.mxu0 %v1507
        %v1651 = vpop.f32.mrf.mxu0
        %v1652 = vadd.f32 %v1530, %v1651
        %v1653 = vpop.f32.mrf.mxu0
        %v1654 = vadd.f32 %v1534, %v1653
        %v1655 = vpop.f32.mrf.mxu0
        %v1656 = vadd.f32 %v1530, %v1655
        %v1657 = vpop.f32.mrf.mxu0
        %v1658 = vadd.f32 %v1534, %v1657
        %1659 = vmatprep.mubr.bf16.mxu0 0
        %1660 = vmatmul.mubr.bf16.gmra.mxu0 %v1508
        %v1661 = vpop.f32.mrf.mxu0
        %v1662 = vadd.f32 %v1530, %v1661
        %v1663 = vpop.f32.mrf.mxu0
        %v1664 = vadd.f32 %v1534, %v1663
        %v1665 = vpop.f32.mrf.mxu0
        %v1666 = vadd.f32 %v1530, %v1665
        %v1667 = vpop.f32.mrf.mxu0
        %v1668 = vadd.f32 %v1534, %v1667
        %1669 = vdwg.mxu0
        %v1670 = vmul.f32 %v1652, %v1652
        %v1671 = vmul.f32 %v1654, %v1654
        %v1672 = vmul.f32 %v1656, %v1656
        %v1673 = vmul.f32 %v1658, %v1658
        %v1674 = vmul.f32 %v1662, %v1662
        %v1675 = vmul.f32 %v1664, %v1664
        %v1676 = vmul.f32 %v1666, %v1666
        %v1677 = vmul.f32 %v1668, %v1668
        %v1678 = vmul.f32 %v1652, %v1670
        %v1679 = vmul.f32 %v1654, %v1671
        %v1680 = vmul.f32 %v1656, %v1672
        %v1681 = vmul.f32 %v1658, %v1673
        %v1682 = vmul.f32 %v1662, %v1674
        %v1683 = vmul.f32 %v1664, %v1675
        %v1684 = vmul.f32 %v1666, %v1676
        %v1685 = vmul.f32 %v1668, %v1677
        %v1686 = vmul.f32 %v1678, 0.044715
        %v1687 = vmul.f32 %v1679, 0.044715
        %v1688 = vmul.f32 %v1680, 0.044715
        %v1689 = vmul.f32 %v1681, 0.044715
        %v1690 = vmul.f32 %v1682, 0.044715
        %v1691 = vmul.f32 %v1683, 0.044715
        %v1692 = vmul.f32 %v1684, 0.044715
        %v1693 = vmul.f32 %v1685, 0.044715
        %v1694 = vadd.f32 %v1652, %v1686
        %v1695 = vadd.f32 %v1654, %v1687
        %v1696 = vadd.f32 %v1656, %v1688
        %v1697 = vadd.f32 %v1658, %v1689
        %v1698 = vadd.f32 %v1662, %v1690
        %v1699 = vadd.f32 %v1664, %v1691
        %v1700 = vadd.f32 %v1666, %v1692
        %v1701 = vadd.f32 %v1668, %v1693
        %v1702 = vmul.f32 %v1694, 0.7978846
        %v1703 = vmul.f32 %v1695, 0.7978846
        %v1704 = vmul.f32 %v1696, 0.7978846
        %v1705 = vmul.f32 %v1697, 0.7978846
        %v1706 = vmul.f32 %v1698, 0.7978846
        %v1707 = vmul.f32 %v1699, 0.7978846
        %v1708 = vmul.f32 %v1700, 0.7978846
        %v1709 = vmul.f32 %v1701, 0.7978846
        %v1710 = vtanh.pop %v1702
        %v1711 = vtanh.pop %v1703
        %v1712 = vtanh.pop %v1704
        %v1713 = vtanh.pop %v1705
        %v1714 = vtanh.pop %v1706
        %v1715 = vtanh.pop %v1707
        %v1716 = vtanh.pop %v1708
        %v1717 = vtanh.pop %v1709
        %v1718 = vadd.f32 %v1710, 1.0
        %v1719 = vadd.f32 %v1711, 1.0
        %v1720 = vadd.f32 %v1712, 1.0
        %v1721 = vadd.f32 %v1713, 1.0
        %v1722 = vadd.f32 %v1714, 1.0
        %v1723 = vadd.f32 %v1715, 1.0
        %v1724 = vadd.f32 %v1716, 1.0
        %v1725 = vadd.f32 %v1717, 1.0
        %v1726 = vmul.f32 %v1718, 0.5
        %v1727 = vmul.f32 %v1719, 0.5
        %v1728 = vmul.f32 %v1720, 0.5
        %v1729 = vmul.f32 %v1721, 0.5
        %v1730 = vmul.f32 %v1722, 0.5
        %v1731 = vmul.f32 %v1723, 0.5
        %v1732 = vmul.f32 %v1724, 0.5
        %v1733 = vmul.f32 %v1725, 0.5
        %v1734 = vmul.f32 %v1652, %v1726
        %v1735 = vmul.f32 %v1654, %v1727
        %v1736 = vmul.f32 %v1656, %v1728
        %v1737 = vmul.f32 %v1658, %v1729
        %v1738 = vmul.f32 %v1662, %v1730
        %v1739 = vmul.f32 %v1664, %v1731
        %v1740 = vmul.f32 %v1666, %v1732
        %v1741 = vmul.f32 %v1668, %v1733
        %v1742 = vpack.c.bf16 %v1736, %v1734
        %v1743 = vpack.c.bf16 %v1737, %v1735
        %v1744 = vpack.c.bf16 %v1740, %v1738
        %v1745 = vpack.c.bf16 %v1741, %v1739
        %v1746 = vld [vmem:[#allocation17] sm:$0xf]
        %v1747 = vld [vmem:[#allocation17 + $0x4] sm:$0xf]
        %v1748 = vld [vmem:[#allocation17 + $0x8] sm:$0xf]
        %v1749 = vld [vmem:[#allocation17 + $0xc] sm:$0xf]
        %v1750 = vld [vmem:[#allocation17 + $0x10] sm:$0xf]
        %v1751 = vld [vmem:[#allocation17 + $0x14] sm:$0xf]
        %v1752 = vld [vmem:[#allocation17 + $0x18] sm:$0xf]
        %v1753 = vld [vmem:[#allocation17 + $0x1c] sm:$0xf]
        %v1754 = vld [vmem:[#allocation17 + $0x20] sm:$0xf]
        %v1755 = vld [vmem:[#allocation17 + $0x24] sm:$0xf]
        %v1756 = vld [vmem:[#allocation17 + $0x28] sm:$0xf]
        %v1757 = vld [vmem:[#allocation17 + $0x2c] sm:$0xf]
        %v1758 = vld [vmem:[#allocation17 + $0x30] sm:$0xf]
        %v1759 = vld [vmem:[#allocation17 + $0x34] sm:$0xf]
        %v1760 = vld [vmem:[#allocation17 + $0x38] sm:$0xf]
        %v1761 = vld [vmem:[#allocation17 + $0x3c] sm:$0xf]
        %v1762 = vld [vmem:[#allocation17 + $0x40] sm:$0xf]
        %v1763 = vld [vmem:[#allocation17 + $0x44] sm:$0xf]
        %v1764 = vld [vmem:[#allocation17 + $0x48] sm:$0xf]
        %v1765 = vld [vmem:[#allocation17 + $0x4c] sm:$0xf]
        %v1766 = vld [vmem:[#allocation17 + $0x50] sm:$0xf]
        %v1767 = vld [vmem:[#allocation17 + $0x54] sm:$0xf]
        %v1768 = vld [vmem:[#allocation17 + $0x58] sm:$0xf]
        %v1769 = vld [vmem:[#allocation17 + $0x5c] sm:$0xf]
        %v1770 = vld [vmem:[#allocation17 + $0x60] sm:$0xf]
        %v1771 = vld [vmem:[#allocation17 + $0x64] sm:$0xf]
        %v1772 = vld [vmem:[#allocation17 + $0x68] sm:$0xf]
        %v1773 = vld [vmem:[#allocation17 + $0x6c] sm:$0xf]
        %v1774 = vld [vmem:[#allocation17 + $0x70] sm:$0xf]
        %v1775 = vld [vmem:[#allocation17 + $0x74] sm:$0xf]
        %v1776 = vld [vmem:[#allocation17 + $0x78] sm:$0xf]
        %v1777 = vld [vmem:[#allocation17 + $0x7c] sm:$0xf]
        %v1778 = vld [vmem:[%s13] sm:$0x1]
        %v1780 = vlaneseq
        %v1781 = vshrl.u32 %v1780, 7
        %v1782 = vsub.s32 0, %v1781
        %v1783 = vrot.slane %v1778, %v1782
        %v1817 = vunpack.c.l.b16 %v1746
        %v1818 = vunpack.c.l.b16 %v1747
        %v1819 = vunpack.c.l.b16 %v1748
        %v1820 = vunpack.c.l.b16 %v1749
        %v1821 = vunpack.c.l.b16 %v1750
        %v1822 = vunpack.c.l.b16 %v1751
        %v1823 = vunpack.c.l.b16 %v1752
        %v1824 = vunpack.c.l.b16 %v1753
        %v1825 = vunpack.c.l.b16 %v1754
        %v1826 = vunpack.c.l.b16 %v1755
        %v1827 = vunpack.c.l.b16 %v1756
        %v1828 = vunpack.c.l.b16 %v1757
        %v1829 = vunpack.c.l.b16 %v1758
        %v1830 = vunpack.c.l.b16 %v1759
        %v1831 = vunpack.c.l.b16 %v1760
        %v1832 = vunpack.c.l.b16 %v1761
        %v1833 = vunpack.c.l.b16 %v1762
        %v1834 = vunpack.c.l.b16 %v1763
        %v1835 = vunpack.c.l.b16 %v1764
        %v1836 = vunpack.c.l.b16 %v1765
        %v1837 = vunpack.c.l.b16 %v1766
        %v1838 = vunpack.c.l.b16 %v1767
        %v1839 = vunpack.c.l.b16 %v1768
        %v1840 = vunpack.c.l.b16 %v1769
        %v1841 = vunpack.c.l.b16 %v1770
        %v1842 = vunpack.c.l.b16 %v1771
        %v1843 = vunpack.c.l.b16 %v1772
        %v1844 = vunpack.c.l.b16 %v1773
        %v1845 = vunpack.c.l.b16 %v1774
        %v1846 = vunpack.c.l.b16 %v1775
        %v1847 = vunpack.c.l.b16 %v1776
        %v1848 = vunpack.c.l.b16 %v1777
        %v1849 = vpack.c.b16 %v1818, %v1817
        %v1850 = vpack.c.b16 %v1820, %v1819
        %v1851 = vpack.c.b16 %v1822, %v1821
        %v1852 = vpack.c.b16 %v1824, %v1823
        %v1853 = vpack.c.b16 %v1826, %v1825
        %v1854 = vpack.c.b16 %v1828, %v1827
        %v1855 = vpack.c.b16 %v1830, %v1829
        %v1856 = vpack.c.b16 %v1832, %v1831
        %v1857 = vpack.c.b16 %v1834, %v1833
        %v1858 = vpack.c.b16 %v1836, %v1835
        %v1859 = vpack.c.b16 %v1838, %v1837
        %v1860 = vpack.c.b16 %v1840, %v1839
        %v1861 = vpack.c.b16 %v1842, %v1841
        %v1862 = vpack.c.b16 %v1844, %v1843
        %v1863 = vpack.c.b16 %v1846, %v1845
        %v1864 = vpack.c.b16 %v1848, %v1847
        %1881 = vmatprep.subr.bf16.mxu0 0
        %1882 = vmatpush1.bf16.msra.mxu0 %v1856
        %1883 = vmatprep.subr.bf16.mxu0 0
        %1884 = vmatpush1.bf16.msra.mxu0 %v1855
        %1885 = vmatprep.subr.bf16.mxu0 0
        %1886 = vmatpush1.bf16.msra.mxu0 %v1854
        %1887 = vmatprep.subr.bf16.mxu0 0
        %1888 = vmatpush1.bf16.msra.mxu0 %v1853
        %1889 = vmatprep.subr.bf16.mxu0 0
        %1890 = vmatpush1.bf16.msra.mxu0 %v1852
        %1891 = vmatprep.subr.bf16.mxu0 0
        %1892 = vmatpush1.bf16.msra.mxu0 %v1851
        %1893 = vmatprep.subr.bf16.mxu0 0
        %1894 = vmatpush1.bf16.msra.mxu0 %v1850
        %1895 = vmatprep.subr.bf16.mxu0 0
        %1896 = vmatpush1.bf16.msra.mxu0 %v1849
        %1897 = vmatprep.subr.bf16.mxu0 0
        %1898 = vmatpush2.bf16.msra.mxu0 %v1864
        %1899 = vmatprep.subr.bf16.mxu0 0
        %1900 = vmatpush2.bf16.msra.mxu0 %v1863
        %1901 = vmatprep.subr.bf16.mxu0 0
        %1902 = vmatpush2.bf16.msra.mxu0 %v1862
        %1903 = vmatprep.subr.bf16.mxu0 0
        %1904 = vmatpush2.bf16.msra.mxu0 %v1861
        %1905 = vmatprep.subr.bf16.mxu0 0
        %1906 = vmatpush2.bf16.msra.mxu0 %v1860
        %1907 = vmatprep.subr.bf16.mxu0 0
        %1908 = vmatpush2.bf16.msra.mxu0 %v1859
        %1909 = vmatprep.subr.bf16.mxu0 0
        %1910 = vmatpush2.bf16.msra.mxu0 %v1858
        %1911 = vmatprep.subr.bf16.mxu0 0
        %1912 = vmatpush2.bf16.msra.mxu0 %v1857
        %1913 = vmatprep.mubr.bf16.mxu0 %v1743
        %1914 = vmatmul.mubr.bf16.gmra.mxu0 %v1742
        %v1915 = vpop.f32.mrf.mxu0
        %v1916 = vadd.f32 %v1783, %v1915
        %v1917 = vpop.f32.mrf.mxu0
        %v1918 = vpop.f32.mrf.mxu0
        %v1919 = vadd.f32 %v1783, %v1918
        %v1920 = vpop.f32.mrf.mxu0
        %1921 = vmatprep.mubr.bf16.mxu0 %v1745
        %1922 = vmatmul.mubr.bf16.gmra.mxu0 %v1744
        %v1923 = vpop.f32.mrf.mxu0
        %v1924 = vadd.f32 %v1783, %v1923
        %v1925 = vpop.f32.mrf.mxu0
        %v1926 = vpop.f32.mrf.mxu0
        %v1927 = vadd.f32 %v1783, %v1926
        %v1928 = vpop.f32.mrf.mxu0
        %1929 = vdwg.mxu0
        %v1930 = vadd.f32 %v1436, %v1916
        %v1931 = vadd.f32 %v1437, %v1919
        %v1932 = vadd.f32 %v1438, %v1924
        %v1933 = vadd.f32 %v1439, %v1927
        %v1934 = vpack.c.bf16 %v1931, %v1930
        %v1935 = vpack.c.bf16 %v1933, %v1932
        %v1938 = vunpack.c.l.b16 %v1934
        %v1939 = vunpack.c.h.b16 %v1934
        %v1940 = vunpack.c.l.b16 %v1935
        %v1941 = vunpack.c.h.b16 %v1935
        %v1942 = vpack.c.b16 %v1938, %v1938
        %v1943 = vpack.c.b16 %v1939, %v1939
        %v1944 = vpack.c.b16 %v1940, %v1940
        %v1945 = vpack.c.b16 %v1941, %v1941
        %1950 = vst [vmem:[%s620] sm:$0xf] %v1942
        %1951 = vst [vmem:[%s620 + $0x4] sm:$0xf] %v1943
        %1952 = vst [vmem:[%s620 + $0x8] sm:$0xf] %v1944
        %1953 = vst [vmem:[%s620 + $0xc] sm:$0xf] %v1945
        %s1954 = sand.u32 %s363, 1
        %s1955 = scalar_lea.sflag [#allocation7], %s1954
        %s1956 = sand.u32 %s363, 1
        %s1957 = smul.addr %s1956, 16
        %s1958 = scalar_lea.vmem [#allocation19], %s1957
        // Predicated region
        $region113: #{tpu_custom_call.1} parent=75 // pred_check
          %p1959 = pneg %p373
        $region114: #{tpu_custom_call.1} parent=75 // pred_check_branch
          %1961 = sbr.rel (%p1959) target = $region116
        $region115: #{tpu_custom_call.1} parent=75 // pred_region
          %s1962 = smul.u32 4, %s42
          %s1964 = ssub.s32 256, 256
          %1965 = vsyncadd %s1955, %s1964
          %s1966 = smul.addr %s41, 4
          %s1967 = sadd.s32 %s1962, %s1966
          %s1968 = smul.addr %s1967, 64
          %s1969 = scalar_lea.hbm %s14, %s1968
          %s1970 = sshll.u32 %s1958, 4
          %s1971 = int_to_ptr.vmem [resolvable:$true] %s1970
          %1976 = dma.vmem_to_hbm [thread:$0]  %s1971, 256, %s1969, %s1955, 64, 64, 4
        $region116: #{tpu_custom_call.1} parent=75 // pred_fallthru
          _
      $region76: #{tpu_custom_call.1} parent=5 // pred_fallthru
        _
      %p1977 = scmp.le.s32.totalorder 2, %s32
      // Predicated region
      $region117: #{tpu_custom_call.1} parent=5 // pred_check
        %p1978 = pneg %p1977
      $region118: #{tpu_custom_call.1} parent=5 // pred_check_branch
        %1980 = sbr.rel (%p1978) target = $region120
      $region119: #{tpu_custom_call.1} parent=5 // pred_region
        %s1981 = ssub.s32 %s32, 2
        // Predicated region
        $region121: #{tpu_custom_call.1} parent=119 // pred_check
          %p1982 = pneg %p379
        $region122: #{tpu_custom_call.1} parent=119 // pred_check_branch
          %1984 = sbr.rel (%p1982) target = $region124
        $region123: #{tpu_custom_call.1} parent=119 // pred_region
          %s1985 = sand.u32 %s364, 1
          %s1986 = scalar_lea.sflag [#allocation7], %s1985
          %s1987 = sand.u32 %s364, 1
          %s1988 = smul.addr %s1987, 16
          %s1989 = scalar_lea.vmem [#allocation19], %s1988
          %1990 = dma.done %s1986, 256
        $region124: #{tpu_custom_call.1} parent=119 // pred_fallthru
          _
      $region120: #{tpu_custom_call.1} parent=5 // pred_fallthru
        _
    $region6: #{tpu_custom_call.1} parent=1 // loop_footer
      %s36 = sadd.s32 1, %s32
    $region7: #{tpu_custom_call.1} parent=1 // loop_footer_branch
      %31 = sbr.rel target = $region3
    $region8: #{tpu_custom_call.1} parent=1 // loop_exit
      _
    %1991 = vsyncpa [#allocation6], 1
    %s1992 = scalar_lea.sflag [#allocation6], 1
    %1993 = vsyncpa %s1992, 1
    %1994 = vsyncpa [#allocation9], 1
    %s1995 = scalar_lea.sflag [#allocation9], 1
    %1996 = vsyncpa %s1995, 1
    %1997 = vsyncpa [#allocation12], 1
    %1998 = vsyncpa [#allocation15], 1
    %1999 = vsyncpa [#allocation18], 1
    %2000 = vsyncpa [#allocation7], 1
    %s2001 = scalar_lea.sflag [#allocation7], 1
    %2002 = vsyncpa %s2001, 1

</llo_original>
